<compile_context>
chip_gen: v7x
topology: tpu7x:2x2x1
jax: 0.10.0
libtpu: 0.0.40
codegen_flags: <defaults>
</compile_context>

<pallas_src>
import jax
import jax.numpy as jnp
from jax.experimental import pallas as pl
from jax.experimental.pallas import tpu as pltpu

K_TAPS = 5        # Conv1d kernel_size=5, padding=2
PAD = 2
HEAD_LANES = 128  # class_head(2) + k_head(1), zero-padded to one full lane tile


def _round_up(v, m):
    return ((v + m - 1) // m) * m


def fused_kernel(x_ref, w1_ref, b1_ref, w2_ref, b2_ref, wfc_ref, bfc_ref,
                 wh_ref, bh_ref, out_ref, h1pad_ref):
    """One batch tile per grid step; activations are time-major (time, batch_tile, channels).

    x_ref    : (T+4, B_TILE, Cin) bf16   time already zero-padded by 2 in the wrapper
    w1_ref   : (5, Cin, 32) bf16         b1_ref : (1, 32) f32
    w2_ref   : (5, 32, 64) bf16          b2_ref : (1, 64) f32
    wfc_ref  : (T2, 64, 128) bf16        bfc_ref: (1, 128) f32
    wh_ref   : (128, 128) bf16 fused heads (cols 0-1 class, col 2 k, rest zero)
    bh_ref   : (1, 128) f32
    out_ref  : (B_TILE, 128) f32 lane-dense fused head output
    h1pad_ref: (T1+4, B_TILE, 32) bf16 scratch for the layer-2 'same' padding
    """
    t_pad, bt, cin = x_ref.shape
    t_in = t_pad - 2 * PAD
    t1, t2 = t_in // 2, t_in // 4
    c1 = w1_ref.shape[2]                 # 32
    c2 = w2_ref.shape[2]                 # 64
    hidden = wfc_ref.shape[2]            # 128

    # ---- layer 1: Conv1d(k=5, p=2) as 5 accumulated GEMMs (M = T*B_TILE, K = Cin, N = 32) ----
    a1 = jnp.zeros((t_in * bt, c1), jnp.float32)
    for k in range(K_TAPS):
        xk = x_ref[k:k + t_in].reshape(t_in * bt, cin)   # leading-dim slab slice, bf16
        a1 = a1 + jnp.dot(xk, w1_ref[k], preferred_element_type=jnp.float32)
    a1 = jnp.maximum(a1 + b1_ref[...], 0.0)

    # ---- MaxPool1d(2): split the untiled time-major axis (no sublane relayout) ----
    a1 = a1.reshape(t1, 2, bt, c1)
    p1 = jnp.maximum(a1[:, 0], a1[:, 1])                 # (T1, B_TILE, 32)

    # ---- in-kernel zero padding for layer 2: only the 4 boundary rows need zeroing ----
    h1pad_ref[0:PAD] = jnp.zeros((PAD, bt, c1), h1pad_ref.dtype)
    h1pad_ref[PAD + t1:PAD + t1 + PAD] = jnp.zeros((PAD, bt, c1), h1pad_ref.dtype)
    h1pad_ref[PAD:PAD + t1] = p1.astype(h1pad_ref.dtype)

    # ---- layer 2: 5 accumulated GEMMs (M = T1*B_TILE, K = 32, N = 64) ----
    a2 = jnp.zeros((t1 * bt, c2), jnp.float32)
    for k in range(K_TAPS):
        hk = h1pad_ref[k:k + t1].reshape(t1 * bt, c1)
        a2 = a2 + jnp.dot(hk, w2_ref[k], preferred_element_type=jnp.float32)
    a2 = jnp.maximum(a2 + b2_ref[...], 0.0)
    a2 = a2.reshape(t2, 2, bt, c2)
    p2 = jnp.maximum(a2[:, 0], a2[:, 1])                 # (T2, B_TILE, 64)

    # ---- shared FC: T2 accumulated (B_TILE,64)@(64,128) GEMMs (no flatten relayout) ----
    fc = jnp.zeros((bt, hidden), jnp.float32)
    for t in range(t2):
        fc = fc + jnp.dot(p2[t].astype(jnp.bfloat16), wfc_ref[t],
                          preferred_element_type=jnp.float32)
    fc = jnp.maximum(fc + bfc_ref[...], 0.0)

    # ---- fused heads: one lane-dense matmul + full 128-lane store ----
    out_ref[...] = jnp.dot(fc.astype(jnp.bfloat16), wh_ref[...],
                           preferred_element_type=jnp.float32) + bh_ref[...]


def trajectory_cnn_forward(x, torch_params, b_tile=None):
    """x: (B, Cin, T) float32 in PyTorch NCL layout. Returns (class_logits (B,2), k (B,1))."""
    w1, b1, w2, b2, wfc, bfc, wc, bc, wk, bk = torch_params
    batch, cin, t_steps = x.shape
    assert t_steps % 4 == 0
    t1, t2 = t_steps // 2, t_steps // 4
    c1, c2 = w1.shape[0], w2.shape[0]          # 32, 64
    hidden = wfc.shape[0]                      # 128

    # batch tile: multiple of 8 (sublane), capped at 128 by default (safe on all generations).
    if b_tile is None:
        b_tile = min(128, _round_up(batch, 8))
    b_tile = max(8, _round_up(b_tile, 8))
    b_pad = _round_up(batch, b_tile)
    grid_b = b_pad // b_tile

    # ---- wrapper glue: NCL -> time-major (T+4, B_pad, Cin), zero pad, bf16 stream ----
    x_tbc = jnp.transpose(x, (2, 0, 1))                                      # (T, B, Cin)
    x_tbc = jnp.pad(x_tbc, ((PAD, PAD), (0, b_pad - batch), (0, 0))).astype(jnp.bfloat16)

    # ---- weights: tap-major / channels-last bf16 MXU operands ----
    w1t = jnp.transpose(w1, (2, 1, 0)).astype(jnp.bfloat16)                  # (5, Cin, 32)
    w2t = jnp.transpose(w2, (2, 1, 0)).astype(jnp.bfloat16)                  # (5, 32, 64)
    # PyTorch flattens (B, 64, T2) channel-major; keep wfc as (T2, 64, 128) for accumulation.
    wfc3 = jnp.transpose(wfc.reshape(hidden, c2, t2), (2, 1, 0)).astype(jnp.bfloat16)
    # fused heads, zero-padded to a lane-dense 128-wide output
    wh = jnp.pad(jnp.concatenate([wc, wk], axis=0).T,
                 ((0, 0), (0, HEAD_LANES - 3))).astype(jnp.bfloat16)         # (128, 128)
    bh = jnp.pad(jnp.concatenate([bc, bk]), (0, HEAD_LANES - 3)).reshape(1, HEAD_LANES)

    out = pl.pallas_call(
        fused_kernel,
        out_shape=jax.ShapeDtypeStruct((b_pad, HEAD_LANES), jnp.float32),
        grid=(grid_b,),
        in_specs=[
            pl.BlockSpec((t_steps + 2 * PAD, b_tile, cin), lambda b: (0, b, 0)),
            pl.BlockSpec((K_TAPS, cin, c1), lambda b: (0, 0, 0)),
            pl.BlockSpec((1, c1), lambda b: (0, 0)),
            pl.BlockSpec((K_TAPS, c1, c2), lambda b: (0, 0, 0)),
            pl.BlockSpec((1, c2), lambda b: (0, 0)),
            pl.BlockSpec((t2, c2, hidden), lambda b: (0, 0, 0)),
            pl.BlockSpec((1, hidden), lambda b: (0, 0)),
            pl.BlockSpec((hidden, HEAD_LANES), lambda b: (0, 0)),
            pl.BlockSpec((1, HEAD_LANES), lambda b: (0, 0)),
        ],
        out_specs=pl.BlockSpec((b_tile, HEAD_LANES), lambda b: (b, 0)),
        scratch_shapes=[pltpu.VMEM((t1 + 2 * PAD, b_tile, c1), jnp.bfloat16)],
        compiler_params=pltpu.CompilerParams(
            dimension_semantics=("parallel",),
            vmem_limit_bytes=32 * 1024 * 1024),
    )(x_tbc, w1t, b1.reshape(1, c1), w2t, b2.reshape(1, c2),
      wfc3, bfc.reshape(1, hidden), wh, bh)

    return out[:batch, :2], out[:batch, 2:3]


def init_params(key, in_channels, time_steps):
    """Deterministic synthetic params in PyTorch layouts (same shapes as the nn.Module)."""
    t2 = time_steps // 4
    flat = 64 * t2
    keys = jax.random.split(key, 10)
    mk = lambda k, shape, s=0.1: (s * jax.random.normal(k, shape)).astype(jnp.float32)
    w1 = mk(keys[0], (32, in_channels, 5))
    b1 = mk(keys[1], (32,))
    w2 = mk(keys[2], (64, 32, 5))
    b2 = mk(keys[3], (64,))
    wfc = mk(keys[4], (128, flat), 0.05)
    bfc = mk(keys[5], (128,))
    wc = mk(keys[6], (2, 128))
    bc = mk(keys[7], (2,))
    wk = mk(keys[8], (1, 128))
    bk = mk(keys[9], (1,))
    return (w1, b1, w2, b2, wfc, bfc, wc, bc, wk, bk)


def reference_forward(x, torch_params):
    """Plain-JAX replica of the PyTorch forward (NCL), for the correctness check."""
    w1, b1, w2, b2, wfc, bfc, wc, bc, wk, bk = torch_params

    def conv1d_same2(xin, w, b):
        t = xin.shape[-1]
        xp = jnp.pad(xin, ((0, 0), (0, 0), (2, 2)))
        out = sum(jnp.einsum('bct,oc->bot', xp[:, :, k:k + t], w[:, :, k],
                             precision='highest') for k in range(K_TAPS))
        return out + b[None, :, None]

    h = jnp.maximum(conv1d_same2(x, w1, b1), 0.0)
    h = jnp.max(h.reshape(h.shape[0], h.shape[1], -1, 2), axis=-1)
    h = jnp.maximum(conv1d_same2(h, w2, b2), 0.0)
    h = jnp.max(h.reshape(h.shape[0], h.shape[1], -1, 2), axis=-1)
    f = h.reshape(h.shape[0], -1)                              # channel-major flatten
    s = jnp.maximum(jnp.dot(f, wfc.T, precision='highest') + bfc, 0.0)
    return (jnp.dot(s, wc.T, precision='highest') + bc,
            jnp.dot(s, wk.T, precision='highest') + bk)


if __name__ == "__main__":
    CIN, T = 3, 32   # small shapes: in_channels=3, time_steps=32 (divisible by 4)
    key = jax.random.PRNGKey(0)
    kx, kx2, kp = jax.random.split(key, 3)
    params = init_params(kp, CIN, T)

    fwd = jax.jit(trajectory_cnn_forward, static_argnames=("b_tile",))

    # case 1: tiny batch (padded up to one B_TILE=8 grid step)
    B1 = 2
    x1 = jax.random.normal(kx, (B1, CIN, T), dtype=jnp.float32)
    cls1, k1 = jax.block_until_ready(fwd(x1, params))
    cls1_exp, k1_exp = reference_forward(x1, params)
    assert cls1.shape == (B1, 2) and k1.shape == (B1, 1)
    assert jnp.allclose(cls1, cls1_exp, atol=2e-2, rtol=2e-2)
    assert jnp.allclose(k1, k1_exp, atol=2e-2, rtol=2e-2)

    # case 2: batch that is not a tile multiple, multi-step grid (exercises padding + parallel grid)
    B2 = 20
    x2 = jax.random.normal(kx2, (B2, CIN, T), dtype=jnp.float32)
    cls2, k2 = jax.block_until_ready(fwd(x2, params, b_tile=8))
    cls2_exp, k2_exp = reference_forward(x2, params)
    assert cls2.shape == (B2, 2) and k2.shape == (B2, 1)
    assert jnp.allclose(cls2, cls2_exp, atol=2e-2, rtol=2e-2)
    assert jnp.allclose(k2, k2_exp, atol=2e-2, rtol=2e-2)

    print("KERNEL_OK")
</pallas_src>

<mosaic_0001>
module attributes {stable_mosaic.version = 11 : i64} {
  func.func @fused_kernel(%arg0: i32, %arg1: memref<36x8x3xbf16, #tpu.memory_space<vmem>>, %arg2: memref<5x3x32xbf16, #tpu.memory_space<vmem>>, %arg3: memref<1x32xf32, #tpu.memory_space<vmem>>, %arg4: memref<5x32x64xbf16, #tpu.memory_space<vmem>>, %arg5: memref<1x64xf32, #tpu.memory_space<vmem>>, %arg6: memref<8x64x128xbf16, #tpu.memory_space<vmem>>, %arg7: memref<1x128xf32, #tpu.memory_space<vmem>>, %arg8: memref<128x128xbf16, #tpu.memory_space<vmem>>, %arg9: memref<1x128xf32, #tpu.memory_space<vmem>>, %arg10: memref<8x128xf32, #tpu.memory_space<vmem>>, %arg11: memref<20x8x32xbf16, #tpu.memory_space<vmem>>) attributes {dimension_semantics = [#tpu.dimension_semantics<parallel>], iteration_bounds = array<i64: 1>, scalar_prefetch = 0 : i64, scratch_operands = 1 : i64, tpu.core_type = #tpu.core_type<tc>, window_params = [{transform_indices = @transform_0, window_bounds = array<i64: 36, 8, 3>}, {pipeline_mode = #tpu.pipeline_mode<synchronous>, transform_indices = @transform_1, window_bounds = array<i64: 5, 3, 32>}, {pipeline_mode = #tpu.pipeline_mode<synchronous>, transform_indices = @transform_2, window_bounds = array<i64: 1, 32>}, {pipeline_mode = #tpu.pipeline_mode<synchronous>, transform_indices = @transform_3, window_bounds = array<i64: 5, 32, 64>}, {pipeline_mode = #tpu.pipeline_mode<synchronous>, transform_indices = @transform_4, window_bounds = array<i64: 1, 64>}, {pipeline_mode = #tpu.pipeline_mode<synchronous>, transform_indices = @transform_5, window_bounds = array<i64: 8, 64, 128>}, {pipeline_mode = #tpu.pipeline_mode<synchronous>, transform_indices = @transform_6, window_bounds = array<i64: 1, 128>}, {pipeline_mode = #tpu.pipeline_mode<synchronous>, transform_indices = @transform_7, window_bounds = array<i64: 128, 128>}, {pipeline_mode = #tpu.pipeline_mode<synchronous>, transform_indices = @transform_8, window_bounds = array<i64: 1, 128>}, {transform_indices = @transform_9, window_bounds = array<i64: 8, 128>}]} {
    %cst = arith.constant 0.000000e+00 : f32
    %0 = vector.broadcast %cst : f32 to vector<256x32xf32>
    %c0 = arith.constant 0 : index
    %c0_0 = arith.constant 0 : index
    %c0_1 = arith.constant 0 : index
    %1 = vector.load %arg1[%c0, %c0_0, %c0_1] : memref<36x8x3xbf16, #tpu.memory_space<vmem>>, vector<32x8x3xbf16>
    %2 = vector.shape_cast %1 : vector<32x8x3xbf16> to vector<256x3xbf16>
    %c0_2 = arith.constant 0 : index
    %c0_3 = arith.constant 0 : index
    %c0_4 = arith.constant 0 : index
    %3 = vector.load %arg2[%c0_2, %c0_3, %c0_4] : memref<5x3x32xbf16, #tpu.memory_space<vmem>>, vector<1x3x32xbf16>
    %4 = vector.shape_cast %3 : vector<1x3x32xbf16> to vector<3x32xbf16>
    %cst_5 = arith.constant dense<0.000000e+00> : vector<256x32xf32>
    %5 = tpu.matmul %2, %4, %cst_5 {dimension_numbers = #tpu.dot_dimension_numbers<[1], [0], [0], [1], [0, 0, 1, 1], [], []>} : vector<256x3xbf16>, vector<3x32xbf16>, vector<256x32xf32> -> vector<256x32xf32>
    %6 = arith.addf %0, %5 : vector<256x32xf32>
    %c1 = arith.constant 1 : index
    %c0_6 = arith.constant 0 : index
    %c0_7 = arith.constant 0 : index
    %7 = vector.load %arg1[%c1, %c0_6, %c0_7] : memref<36x8x3xbf16, #tpu.memory_space<vmem>>, vector<32x8x3xbf16>
    %8 = vector.shape_cast %7 : vector<32x8x3xbf16> to vector<256x3xbf16>
    %c1_8 = arith.constant 1 : index
    %c0_9 = arith.constant 0 : index
    %c0_10 = arith.constant 0 : index
    %9 = vector.load %arg2[%c1_8, %c0_9, %c0_10] : memref<5x3x32xbf16, #tpu.memory_space<vmem>>, vector<1x3x32xbf16>
    %10 = vector.shape_cast %9 : vector<1x3x32xbf16> to vector<3x32xbf16>
    %cst_11 = arith.constant dense<0.000000e+00> : vector<256x32xf32>
    %11 = tpu.matmul %8, %10, %cst_11 {dimension_numbers = #tpu.dot_dimension_numbers<[1], [0], [0], [1], [0, 0, 1, 1], [], []>} : vector<256x3xbf16>, vector<3x32xbf16>, vector<256x32xf32> -> vector<256x32xf32>
    %12 = arith.addf %6, %11 : vector<256x32xf32>
    %c2 = arith.constant 2 : index
    %c0_12 = arith.constant 0 : index
    %c0_13 = arith.constant 0 : index
    %13 = vector.load %arg1[%c2, %c0_12, %c0_13] : memref<36x8x3xbf16, #tpu.memory_space<vmem>>, vector<32x8x3xbf16>
    %14 = vector.shape_cast %13 : vector<32x8x3xbf16> to vector<256x3xbf16>
    %c2_14 = arith.constant 2 : index
    %c0_15 = arith.constant 0 : index
    %c0_16 = arith.constant 0 : index
    %15 = vector.load %arg2[%c2_14, %c0_15, %c0_16] : memref<5x3x32xbf16, #tpu.memory_space<vmem>>, vector<1x3x32xbf16>
    %16 = vector.shape_cast %15 : vector<1x3x32xbf16> to vector<3x32xbf16>
    %cst_17 = arith.constant dense<0.000000e+00> : vector<256x32xf32>
    %17 = tpu.matmul %14, %16, %cst_17 {dimension_numbers = #tpu.dot_dimension_numbers<[1], [0], [0], [1], [0, 0, 1, 1], [], []>} : vector<256x3xbf16>, vector<3x32xbf16>, vector<256x32xf32> -> vector<256x32xf32>
    %18 = arith.addf %12, %17 : vector<256x32xf32>
    %c3 = arith.constant 3 : index
    %c0_18 = arith.constant 0 : index
    %c0_19 = arith.constant 0 : index
    %19 = vector.load %arg1[%c3, %c0_18, %c0_19] : memref<36x8x3xbf16, #tpu.memory_space<vmem>>, vector<32x8x3xbf16>
    %20 = vector.shape_cast %19 : vector<32x8x3xbf16> to vector<256x3xbf16>
    %c3_20 = arith.constant 3 : index
    %c0_21 = arith.constant 0 : index
    %c0_22 = arith.constant 0 : index
    %21 = vector.load %arg2[%c3_20, %c0_21, %c0_22] : memref<5x3x32xbf16, #tpu.memory_space<vmem>>, vector<1x3x32xbf16>
    %22 = vector.shape_cast %21 : vector<1x3x32xbf16> to vector<3x32xbf16>
    %cst_23 = arith.constant dense<0.000000e+00> : vector<256x32xf32>
    %23 = tpu.matmul %20, %22, %cst_23 {dimension_numbers = #tpu.dot_dimension_numbers<[1], [0], [0], [1], [0, 0, 1, 1], [], []>} : vector<256x3xbf16>, vector<3x32xbf16>, vector<256x32xf32> -> vector<256x32xf32>
    %24 = arith.addf %18, %23 : vector<256x32xf32>
    %c4 = arith.constant 4 : index
    %c0_24 = arith.constant 0 : index
    %c0_25 = arith.constant 0 : index
    %25 = vector.load %arg1[%c4, %c0_24, %c0_25] : memref<36x8x3xbf16, #tpu.memory_space<vmem>>, vector<32x8x3xbf16>
    %26 = vector.shape_cast %25 : vector<32x8x3xbf16> to vector<256x3xbf16>
    %c4_26 = arith.constant 4 : index
    %c0_27 = arith.constant 0 : index
    %c0_28 = arith.constant 0 : index
    %27 = vector.load %arg2[%c4_26, %c0_27, %c0_28] : memref<5x3x32xbf16, #tpu.memory_space<vmem>>, vector<1x3x32xbf16>
    %28 = vector.shape_cast %27 : vector<1x3x32xbf16> to vector<3x32xbf16>
    %cst_29 = arith.constant dense<0.000000e+00> : vector<256x32xf32>
    %29 = tpu.matmul %26, %28, %cst_29 {dimension_numbers = #tpu.dot_dimension_numbers<[1], [0], [0], [1], [0, 0, 1, 1], [], []>} : vector<256x3xbf16>, vector<3x32xbf16>, vector<256x32xf32> -> vector<256x32xf32>
    %30 = arith.addf %24, %29 : vector<256x32xf32>
    %c0_30 = arith.constant 0 : index
    %c0_31 = arith.constant 0 : index
    %31 = vector.load %arg3[%c0_30, %c0_31] : memref<1x32xf32, #tpu.memory_space<vmem>>, vector<1x32xf32>
    %32 = vector.broadcast %31 : vector<1x32xf32> to vector<256x32xf32>
    %33 = arith.addf %30, %32 : vector<256x32xf32>
    %cst_32 = arith.constant 0.000000e+00 : f32
    %34 = vector.broadcast %cst_32 : f32 to vector<256x32xf32>
    %35 = arith.maximumf %33, %34 : vector<256x32xf32>
    %36 = vector.shape_cast %35 : vector<256x32xf32> to vector<16x2x8x32xf32>
    %37 = vector.extract_strided_slice %36 {offsets = [0, 0, 0, 0], sizes = [16, 1, 8, 32], strides = [1, 1, 1, 1]} : vector<16x2x8x32xf32> to vector<16x1x8x32xf32>
    %38 = vector.shape_cast %37 : vector<16x1x8x32xf32> to vector<16x8x32xf32>
    %39 = vector.extract_strided_slice %36 {offsets = [0, 1, 0, 0], sizes = [16, 1, 8, 32], strides = [1, 1, 1, 1]} : vector<16x2x8x32xf32> to vector<16x1x8x32xf32>
    %40 = vector.shape_cast %39 : vector<16x1x8x32xf32> to vector<16x8x32xf32>
    %41 = arith.maximumf %38, %40 : vector<16x8x32xf32>
    %cst_33 = arith.constant 0.000000e+00 : bf16
    %42 = vector.broadcast %cst_33 : bf16 to vector<2x8x32xbf16>
    %c0_34 = arith.constant 0 : index
    %c0_35 = arith.constant 0 : index
    %c0_36 = arith.constant 0 : index
    %43 = vector.load %arg11[%c0_34, %c0_35, %c0_36] : memref<20x8x32xbf16, #tpu.memory_space<vmem>>, vector<2x8x32xbf16>
    tpu.vector_store %arg11[%c0_34, %c0_35, %c0_36], %42 {strides = array<i32>} : memref<20x8x32xbf16, #tpu.memory_space<vmem>>, vector<2x8x32xbf16>,
    %cst_37 = arith.constant 0.000000e+00 : bf16
    %44 = vector.broadcast %cst_37 : bf16 to vector<2x8x32xbf16>
    %c18 = arith.constant 18 : index
    %c0_38 = arith.constant 0 : index
    %c0_39 = arith.constant 0 : index
    %45 = vector.load %arg11[%c18, %c0_38, %c0_39] : memref<20x8x32xbf16, #tpu.memory_space<vmem>>, vector<2x8x32xbf16>
    tpu.vector_store %arg11[%c18, %c0_38, %c0_39], %44 {strides = array<i32>} : memref<20x8x32xbf16, #tpu.memory_space<vmem>>, vector<2x8x32xbf16>,
    %46 = arith.truncf %41 : vector<16x8x32xf32> to vector<16x8x32xbf16>
    %c2_40 = arith.constant 2 : index
    %c0_41 = arith.constant 0 : index
    %c0_42 = arith.constant 0 : index
    %47 = vector.load %arg11[%c2_40, %c0_41, %c0_42] : memref<20x8x32xbf16, #tpu.memory_space<vmem>>, vector<16x8x32xbf16>
    tpu.vector_store %arg11[%c2_40, %c0_41, %c0_42], %46 {strides = array<i32>} : memref<20x8x32xbf16, #tpu.memory_space<vmem>>, vector<16x8x32xbf16>,
    %cst_43 = arith.constant 0.000000e+00 : f32
    %48 = vector.broadcast %cst_43 : f32 to vector<128x64xf32>
    %c0_44 = arith.constant 0 : index
    %c0_45 = arith.constant 0 : index
    %c0_46 = arith.constant 0 : index
    %49 = vector.load %arg11[%c0_44, %c0_45, %c0_46] : memref<20x8x32xbf16, #tpu.memory_space<vmem>>, vector<16x8x32xbf16>
    %50 = vector.shape_cast %49 : vector<16x8x32xbf16> to vector<128x32xbf16>
    %c0_47 = arith.constant 0 : index
    %c0_48 = arith.constant 0 : index
    %c0_49 = arith.constant 0 : index
    %51 = vector.load %arg4[%c0_47, %c0_48, %c0_49] : memref<5x32x64xbf16, #tpu.memory_space<vmem>>, vector<1x32x64xbf16>
    %52 = vector.shape_cast %51 : vector<1x32x64xbf16> to vector<32x64xbf16>
    %cst_50 = arith.constant dense<0.000000e+00> : vector<128x64xf32>
    %53 = tpu.matmul %50, %52, %cst_50 {dimension_numbers = #tpu.dot_dimension_numbers<[1], [0], [0], [1], [0, 0, 1, 1], [], []>} : vector<128x32xbf16>, vector<32x64xbf16>, vector<128x64xf32> -> vector<128x64xf32>
    %54 = arith.addf %48, %53 : vector<128x64xf32>
    %c1_51 = arith.constant 1 : index
    %c0_52 = arith.constant 0 : index
    %c0_53 = arith.constant 0 : index
    %55 = vector.load %arg11[%c1_51, %c0_52, %c0_53] : memref<20x8x32xbf16, #tpu.memory_space<vmem>>, vector<16x8x32xbf16>
    %56 = vector.shape_cast %55 : vector<16x8x32xbf16> to vector<128x32xbf16>
    %c1_54 = arith.constant 1 : index
    %c0_55 = arith.constant 0 : index
    %c0_56 = arith.constant 0 : index
    %57 = vector.load %arg4[%c1_54, %c0_55, %c0_56] : memref<5x32x64xbf16, #tpu.memory_space<vmem>>, vector<1x32x64xbf16>
    %58 = vector.shape_cast %57 : vector<1x32x64xbf16> to vector<32x64xbf16>
    %cst_57 = arith.constant dense<0.000000e+00> : vector<128x64xf32>
    %59 = tpu.matmul %56, %58, %cst_57 {dimension_numbers = #tpu.dot_dimension_numbers<[1], [0], [0], [1], [0, 0, 1, 1], [], []>} : vector<128x32xbf16>, vector<32x64xbf16>, vector<128x64xf32> -> vector<128x64xf32>
    %60 = arith.addf %54, %59 : vector<128x64xf32>
    %c2_58 = arith.constant 2 : index
    %c0_59 = arith.constant 0 : index
    %c0_60 = arith.constant 0 : index
    %61 = vector.load %arg11[%c2_58, %c0_59, %c0_60] : memref<20x8x32xbf16, #tpu.memory_space<vmem>>, vector<16x8x32xbf16>
    %62 = vector.shape_cast %61 : vector<16x8x32xbf16> to vector<128x32xbf16>
    %c2_61 = arith.constant 2 : index
    %c0_62 = arith.constant 0 : index
    %c0_63 = arith.constant 0 : index
    %63 = vector.load %arg4[%c2_61, %c0_62, %c0_63] : memref<5x32x64xbf16, #tpu.memory_space<vmem>>, vector<1x32x64xbf16>
    %64 = vector.shape_cast %63 : vector<1x32x64xbf16> to vector<32x64xbf16>
    %cst_64 = arith.constant dense<0.000000e+00> : vector<128x64xf32>
    %65 = tpu.matmul %62, %64, %cst_64 {dimension_numbers = #tpu.dot_dimension_numbers<[1], [0], [0], [1], [0, 0, 1, 1], [], []>} : vector<128x32xbf16>, vector<32x64xbf16>, vector<128x64xf32> -> vector<128x64xf32>
    %66 = arith.addf %60, %65 : vector<128x64xf32>
    %c3_65 = arith.constant 3 : index
    %c0_66 = arith.constant 0 : index
    %c0_67 = arith.constant 0 : index
    %67 = vector.load %arg11[%c3_65, %c0_66, %c0_67] : memref<20x8x32xbf16, #tpu.memory_space<vmem>>, vector<16x8x32xbf16>
    %68 = vector.shape_cast %67 : vector<16x8x32xbf16> to vector<128x32xbf16>
    %c3_68 = arith.constant 3 : index
    %c0_69 = arith.constant 0 : index
    %c0_70 = arith.constant 0 : index
    %69 = vector.load %arg4[%c3_68, %c0_69, %c0_70] : memref<5x32x64xbf16, #tpu.memory_space<vmem>>, vector<1x32x64xbf16>
    %70 = vector.shape_cast %69 : vector<1x32x64xbf16> to vector<32x64xbf16>
    %cst_71 = arith.constant dense<0.000000e+00> : vector<128x64xf32>
    %71 = tpu.matmul %68, %70, %cst_71 {dimension_numbers = #tpu.dot_dimension_numbers<[1], [0], [0], [1], [0, 0, 1, 1], [], []>} : vector<128x32xbf16>, vector<32x64xbf16>, vector<128x64xf32> -> vector<128x64xf32>
    %72 = arith.addf %66, %71 : vector<128x64xf32>
    %c4_72 = arith.constant 4 : index
    %c0_73 = arith.constant 0 : index
    %c0_74 = arith.constant 0 : index
    %73 = vector.load %arg11[%c4_72, %c0_73, %c0_74] : memref<20x8x32xbf16, #tpu.memory_space<vmem>>, vector<16x8x32xbf16>
    %74 = vector.shape_cast %73 : vector<16x8x32xbf16> to vector<128x32xbf16>
    %c4_75 = arith.constant 4 : index
    %c0_76 = arith.constant 0 : index
    %c0_77 = arith.constant 0 : index
    %75 = vector.load %arg4[%c4_75, %c0_76, %c0_77] : memref<5x32x64xbf16, #tpu.memory_space<vmem>>, vector<1x32x64xbf16>
    %76 = vector.shape_cast %75 : vector<1x32x64xbf16> to vector<32x64xbf16>
    %cst_78 = arith.constant dense<0.000000e+00> : vector<128x64xf32>
    %77 = tpu.matmul %74, %76, %cst_78 {dimension_numbers = #tpu.dot_dimension_numbers<[1], [0], [0], [1], [0, 0, 1, 1], [], []>} : vector<128x32xbf16>, vector<32x64xbf16>, vector<128x64xf32> -> vector<128x64xf32>
    %78 = arith.addf %72, %77 : vector<128x64xf32>
    %c0_79 = arith.constant 0 : index
    %c0_80 = arith.constant 0 : index
    %79 = vector.load %arg5[%c0_79, %c0_80] : memref<1x64xf32, #tpu.memory_space<vmem>>, vector<1x64xf32>
    %80 = vector.broadcast %79 : vector<1x64xf32> to vector<128x64xf32>
    %81 = arith.addf %78, %80 : vector<128x64xf32>
    %cst_81 = arith.constant 0.000000e+00 : f32
    %82 = vector.broadcast %cst_81 : f32 to vector<128x64xf32>
    %83 = arith.maximumf %81, %82 : vector<128x64xf32>
    %84 = vector.shape_cast %83 : vector<128x64xf32> to vector<8x2x8x64xf32>
    %85 = vector.extract_strided_slice %84 {offsets = [0, 0, 0, 0], sizes = [8, 1, 8, 64], strides = [1, 1, 1, 1]} : vector<8x2x8x64xf32> to vector<8x1x8x64xf32>
    %86 = vector.shape_cast %85 : vector<8x1x8x64xf32> to vector<8x8x64xf32>
    %87 = vector.extract_strided_slice %84 {offsets = [0, 1, 0, 0], sizes = [8, 1, 8, 64], strides = [1, 1, 1, 1]} : vector<8x2x8x64xf32> to vector<8x1x8x64xf32>
    %88 = vector.shape_cast %87 : vector<8x1x8x64xf32> to vector<8x8x64xf32>
    %89 = arith.maximumf %86, %88 : vector<8x8x64xf32>
    %cst_82 = arith.constant 0.000000e+00 : f32
    %90 = vector.broadcast %cst_82 : f32 to vector<8x128xf32>
    %91 = vector.extract_strided_slice %89 {offsets = [0, 0, 0], sizes = [1, 8, 64], strides = [1, 1, 1]} : vector<8x8x64xf32> to vector<1x8x64xf32>
    %92 = vector.shape_cast %91 : vector<1x8x64xf32> to vector<8x64xf32>
    %93 = arith.truncf %92 : vector<8x64xf32> to vector<8x64xbf16>
    %c0_83 = arith.constant 0 : index
    %c0_84 = arith.constant 0 : index
    %c0_85 = arith.constant 0 : index
    %94 = vector.load %arg6[%c0_83, %c0_84, %c0_85] : memref<8x64x128xbf16, #tpu.memory_space<vmem>>, vector<1x64x128xbf16>
    %95 = vector.shape_cast %94 : vector<1x64x128xbf16> to vector<64x128xbf16>
    %cst_86 = arith.constant dense<0.000000e+00> : vector<8x128xf32>
    %96 = tpu.matmul %93, %95, %cst_86 {dimension_numbers = #tpu.dot_dimension_numbers<[1], [0], [0], [1], [0, 0, 1, 1], [], []>} : vector<8x64xbf16>, vector<64x128xbf16>, vector<8x128xf32> -> vector<8x128xf32>
    %97 = arith.addf %90, %96 : vector<8x128xf32>
    %98 = vector.extract_strided_slice %89 {offsets = [1, 0, 0], sizes = [1, 8, 64], strides = [1, 1, 1]} : vector<8x8x64xf32> to vector<1x8x64xf32>
    %99 = vector.shape_cast %98 : vector<1x8x64xf32> to vector<8x64xf32>
    %100 = arith.truncf %99 : vector<8x64xf32> to vector<8x64xbf16>
    %c1_87 = arith.constant 1 : index
    %c0_88 = arith.constant 0 : index
    %c0_89 = arith.constant 0 : index
    %101 = vector.load %arg6[%c1_87, %c0_88, %c0_89] : memref<8x64x128xbf16, #tpu.memory_space<vmem>>, vector<1x64x128xbf16>
    %102 = vector.shape_cast %101 : vector<1x64x128xbf16> to vector<64x128xbf16>
    %cst_90 = arith.constant dense<0.000000e+00> : vector<8x128xf32>
    %103 = tpu.matmul %100, %102, %cst_90 {dimension_numbers = #tpu.dot_dimension_numbers<[1], [0], [0], [1], [0, 0, 1, 1], [], []>} : vector<8x64xbf16>, vector<64x128xbf16>, vector<8x128xf32> -> vector<8x128xf32>
    %104 = arith.addf %97, %103 : vector<8x128xf32>
    %105 = vector.extract_strided_slice %89 {offsets = [2, 0, 0], sizes = [1, 8, 64], strides = [1, 1, 1]} : vector<8x8x64xf32> to vector<1x8x64xf32>
    %106 = vector.shape_cast %105 : vector<1x8x64xf32> to vector<8x64xf32>
    %107 = arith.truncf %106 : vector<8x64xf32> to vector<8x64xbf16>
    %c2_91 = arith.constant 2 : index
    %c0_92 = arith.constant 0 : index
    %c0_93 = arith.constant 0 : index
    %108 = vector.load %arg6[%c2_91, %c0_92, %c0_93] : memref<8x64x128xbf16, #tpu.memory_space<vmem>>, vector<1x64x128xbf16>
    %109 = vector.shape_cast %108 : vector<1x64x128xbf16> to vector<64x128xbf16>
    %cst_94 = arith.constant dense<0.000000e+00> : vector<8x128xf32>
    %110 = tpu.matmul %107, %109, %cst_94 {dimension_numbers = #tpu.dot_dimension_numbers<[1], [0], [0], [1], [0, 0, 1, 1], [], []>} : vector<8x64xbf16>, vector<64x128xbf16>, vector<8x128xf32> -> vector<8x128xf32>
    %111 = arith.addf %104, %110 : vector<8x128xf32>
    %112 = vector.extract_strided_slice %89 {offsets = [3, 0, 0], sizes = [1, 8, 64], strides = [1, 1, 1]} : vector<8x8x64xf32> to vector<1x8x64xf32>
    %113 = vector.shape_cast %112 : vector<1x8x64xf32> to vector<8x64xf32>
    %114 = arith.truncf %113 : vector<8x64xf32> to vector<8x64xbf16>
    %c3_95 = arith.constant 3 : index
    %c0_96 = arith.constant 0 : index
    %c0_97 = arith.constant 0 : index
    %115 = vector.load %arg6[%c3_95, %c0_96, %c0_97] : memref<8x64x128xbf16, #tpu.memory_space<vmem>>, vector<1x64x128xbf16>
    %116 = vector.shape_cast %115 : vector<1x64x128xbf16> to vector<64x128xbf16>
    %cst_98 = arith.constant dense<0.000000e+00> : vector<8x128xf32>
    %117 = tpu.matmul %114, %116, %cst_98 {dimension_numbers = #tpu.dot_dimension_numbers<[1], [0], [0], [1], [0, 0, 1, 1], [], []>} : vector<8x64xbf16>, vector<64x128xbf16>, vector<8x128xf32> -> vector<8x128xf32>
    %118 = arith.addf %111, %117 : vector<8x128xf32>
    %119 = vector.extract_strided_slice %89 {offsets = [4, 0, 0], sizes = [1, 8, 64], strides = [1, 1, 1]} : vector<8x8x64xf32> to vector<1x8x64xf32>
    %120 = vector.shape_cast %119 : vector<1x8x64xf32> to vector<8x64xf32>
    %121 = arith.truncf %120 : vector<8x64xf32> to vector<8x64xbf16>
    %c4_99 = arith.constant 4 : index
    %c0_100 = arith.constant 0 : index
    %c0_101 = arith.constant 0 : index
    %122 = vector.load %arg6[%c4_99, %c0_100, %c0_101] : memref<8x64x128xbf16, #tpu.memory_space<vmem>>, vector<1x64x128xbf16>
    %123 = vector.shape_cast %122 : vector<1x64x128xbf16> to vector<64x128xbf16>
    %cst_102 = arith.constant dense<0.000000e+00> : vector<8x128xf32>
    %124 = tpu.matmul %121, %123, %cst_102 {dimension_numbers = #tpu.dot_dimension_numbers<[1], [0], [0], [1], [0, 0, 1, 1], [], []>} : vector<8x64xbf16>, vector<64x128xbf16>, vector<8x128xf32> -> vector<8x128xf32>
    %125 = arith.addf %118, %124 : vector<8x128xf32>
    %126 = vector.extract_strided_slice %89 {offsets = [5, 0, 0], sizes = [1, 8, 64], strides = [1, 1, 1]} : vector<8x8x64xf32> to vector<1x8x64xf32>
    %127 = vector.shape_cast %126 : vector<1x8x64xf32> to vector<8x64xf32>
    %128 = arith.truncf %127 : vector<8x64xf32> to vector<8x64xbf16>
    %c5 = arith.constant 5 : index
    %c0_103 = arith.constant 0 : index
    %c0_104 = arith.constant 0 : index
    %129 = vector.load %arg6[%c5, %c0_103, %c0_104] : memref<8x64x128xbf16, #tpu.memory_space<vmem>>, vector<1x64x128xbf16>
    %130 = vector.shape_cast %129 : vector<1x64x128xbf16> to vector<64x128xbf16>
    %cst_105 = arith.constant dense<0.000000e+00> : vector<8x128xf32>
    %131 = tpu.matmul %128, %130, %cst_105 {dimension_numbers = #tpu.dot_dimension_numbers<[1], [0], [0], [1], [0, 0, 1, 1], [], []>} : vector<8x64xbf16>, vector<64x128xbf16>, vector<8x128xf32> -> vector<8x128xf32>
    %132 = arith.addf %125, %131 : vector<8x128xf32>
    %133 = vector.extract_strided_slice %89 {offsets = [6, 0, 0], sizes = [1, 8, 64], strides = [1, 1, 1]} : vector<8x8x64xf32> to vector<1x8x64xf32>
    %134 = vector.shape_cast %133 : vector<1x8x64xf32> to vector<8x64xf32>
    %135 = arith.truncf %134 : vector<8x64xf32> to vector<8x64xbf16>
    %c6 = arith.constant 6 : index
    %c0_106 = arith.constant 0 : index
    %c0_107 = arith.constant 0 : index
    %136 = vector.load %arg6[%c6, %c0_106, %c0_107] : memref<8x64x128xbf16, #tpu.memory_space<vmem>>, vector<1x64x128xbf16>
    %137 = vector.shape_cast %136 : vector<1x64x128xbf16> to vector<64x128xbf16>
    %cst_108 = arith.constant dense<0.000000e+00> : vector<8x128xf32>
    %138 = tpu.matmul %135, %137, %cst_108 {dimension_numbers = #tpu.dot_dimension_numbers<[1], [0], [0], [1], [0, 0, 1, 1], [], []>} : vector<8x64xbf16>, vector<64x128xbf16>, vector<8x128xf32> -> vector<8x128xf32>
    %139 = arith.addf %132, %138 : vector<8x128xf32>
    %140 = vector.extract_strided_slice %89 {offsets = [7, 0, 0], sizes = [1, 8, 64], strides = [1, 1, 1]} : vector<8x8x64xf32> to vector<1x8x64xf32>
    %141 = vector.shape_cast %140 : vector<1x8x64xf32> to vector<8x64xf32>
    %142 = arith.truncf %141 : vector<8x64xf32> to vector<8x64xbf16>
    %c7 = arith.constant 7 : index
    %c0_109 = arith.constant 0 : index
    %c0_110 = arith.constant 0 : index
    %143 = vector.load %arg6[%c7, %c0_109, %c0_110] : memref<8x64x128xbf16, #tpu.memory_space<vmem>>, vector<1x64x128xbf16>
    %144 = vector.shape_cast %143 : vector<1x64x128xbf16> to vector<64x128xbf16>
    %cst_111 = arith.constant dense<0.000000e+00> : vector<8x128xf32>
    %145 = tpu.matmul %142, %144, %cst_111 {dimension_numbers = #tpu.dot_dimension_numbers<[1], [0], [0], [1], [0, 0, 1, 1], [], []>} : vector<8x64xbf16>, vector<64x128xbf16>, vector<8x128xf32> -> vector<8x128xf32>
    %146 = arith.addf %139, %145 : vector<8x128xf32>
    %c0_112 = arith.constant 0 : index
    %c0_113 = arith.constant 0 : index
    %147 = vector.load %arg7[%c0_112, %c0_113] : memref<1x128xf32, #tpu.memory_space<vmem>>, vector<1x128xf32>
    %148 = vector.broadcast %147 : vector<1x128xf32> to vector<8x128xf32>
    %149 = arith.addf %146, %148 : vector<8x128xf32>
    %cst_114 = arith.constant 0.000000e+00 : f32
    %150 = vector.broadcast %cst_114 : f32 to vector<8x128xf32>
    %151 = arith.maximumf %149, %150 : vector<8x128xf32>
    %152 = arith.truncf %151 : vector<8x128xf32> to vector<8x128xbf16>
    %c0_115 = arith.constant 0 : index
    %c0_116 = arith.constant 0 : index
    %153 = vector.load %arg8[%c0_115, %c0_116] : memref<128x128xbf16, #tpu.memory_space<vmem>>, vector<128x128xbf16>
    %cst_117 = arith.constant dense<0.000000e+00> : vector<8x128xf32>
    %154 = tpu.matmul %152, %153, %cst_117 {dimension_numbers = #tpu.dot_dimension_numbers<[1], [0], [0], [1], [0, 0, 1, 1], [], []>} : vector<8x128xbf16>, vector<128x128xbf16>, vector<8x128xf32> -> vector<8x128xf32>
    %c0_118 = arith.constant 0 : index
    %c0_119 = arith.constant 0 : index
    %155 = vector.load %arg9[%c0_118, %c0_119] : memref<1x128xf32, #tpu.memory_space<vmem>>, vector<1x128xf32>
    %156 = vector.broadcast %155 : vector<1x128xf32> to vector<8x128xf32>
    %157 = arith.addf %154, %156 : vector<8x128xf32>
    %c0_120 = arith.constant 0 : index
    %c0_121 = arith.constant 0 : index
    %158 = vector.load %arg10[%c0_120, %c0_121] : memref<8x128xf32, #tpu.memory_space<vmem>>, vector<8x128xf32>
    tpu.vector_store %arg10[%c0_120, %c0_121], %157 {strides = array<i32>} : memref<8x128xf32, #tpu.memory_space<vmem>>, vector<8x128xf32>,
    return
  }
  func.func @transform_0(%arg0: i32) -> (i32, i32, i32) {
    %c0_i32 = arith.constant 0 : i32
    %c0_i32_0 = arith.constant 0 : i32
    %c0_i32_1 = arith.constant 0 : i32
    return %c0_i32, %arg0, %c0_i32_0 : i32, i32, i32
  }
  func.func @transform_1(%arg0: i32) -> (i32, i32, i32) {
    %c0_i32 = arith.constant 0 : i32
    %c0_i32_0 = arith.constant 0 : i32
    %c0_i32_1 = arith.constant 0 : i32
    %c0_i32_2 = arith.constant 0 : i32
    return %c0_i32, %c0_i32_0, %c0_i32_1 : i32, i32, i32
  }
  func.func @transform_2(%arg0: i32) -> (i32, i32) {
    %c0_i32 = arith.constant 0 : i32
    %c0_i32_0 = arith.constant 0 : i32
    %c0_i32_1 = arith.constant 0 : i32
    return %c0_i32, %c0_i32_0 : i32, i32
  }
  func.func @transform_3(%arg0: i32) -> (i32, i32, i32) {
    %c0_i32 = arith.constant 0 : i32
    %c0_i32_0 = arith.constant 0 : i32
    %c0_i32_1 = arith.constant 0 : i32
    %c0_i32_2 = arith.constant 0 : i32
    return %c0_i32, %c0_i32_0, %c0_i32_1 : i32, i32, i32
  }
  func.func @transform_4(%arg0: i32) -> (i32, i32) {
    %c0_i32 = arith.constant 0 : i32
    %c0_i32_0 = arith.constant 0 : i32
    %c0_i32_1 = arith.constant 0 : i32
    return %c0_i32, %c0_i32_0 : i32, i32
  }
  func.func @transform_5(%arg0: i32) -> (i32, i32, i32) {
    %c0_i32 = arith.constant 0 : i32
    %c0_i32_0 = arith.constant 0 : i32
    %c0_i32_1 = arith.constant 0 : i32
    %c0_i32_2 = arith.constant 0 : i32
    return %c0_i32, %c0_i32_0, %c0_i32_1 : i32, i32, i32
  }
  func.func @transform_6(%arg0: i32) -> (i32, i32) {
    %c0_i32 = arith.constant 0 : i32
    %c0_i32_0 = arith.constant 0 : i32
    %c0_i32_1 = arith.constant 0 : i32
    return %c0_i32, %c0_i32_0 : i32, i32
  }
  func.func @transform_7(%arg0: i32) -> (i32, i32) {
    %c0_i32 = arith.constant 0 : i32
    %c0_i32_0 = arith.constant 0 : i32
    %c0_i32_1 = arith.constant 0 : i32
    return %c0_i32, %c0_i32_0 : i32, i32
  }
  func.func @transform_8(%arg0: i32) -> (i32, i32) {
    %c0_i32 = arith.constant 0 : i32
    %c0_i32_0 = arith.constant 0 : i32
    %c0_i32_1 = arith.constant 0 : i32
    return %c0_i32, %c0_i32_0 : i32, i32
  }
  func.func @transform_9(%arg0: i32) -> (i32, i32) {
    %c0_i32 = arith.constant 0 : i32
    %c0_i32_0 = arith.constant 0 : i32
    return %arg0, %c0_i32 : i32, i32
  }
}

</mosaic_0001>

<llo_original>
// kernel: trajectory_cnn_forward.1
$region0: #{trajectory_cnn_forward.1}
  #allocation0 [shape = 'u32[]', space=smem, size = 0x4, offset = 0x4, fixed_abs, tag = 'smem constant byte address 0x4 - core index']
  #allocation1 [shape = 'u32[144,128]{1,0:T(1,128)}', space=vmem, size = 0x12000, scoped, tag = 'internal scratch']
  #allocation2 [shape = 'bf16[20,8,32]{2,1,0:T(8,128)(2,1)}', space=vmem, size = 0xa000, scoped, tag = 'scratch operand']
  %s0 = inlined_call_operand.vmem [shape: bf16[36,8,3], index: 0, kind: input, shape index: {}]
  %s1 = inlined_call_operand.vmem [shape: bf16[5,3,32], index: 1, kind: input, shape index: {}]
  %s2 = inlined_call_operand.vmem [shape: f32[1,32], index: 2, kind: input, shape index: {}]
  %s3 = inlined_call_operand.vmem [shape: bf16[5,32,64], index: 3, kind: input, shape index: {}]
  %s4 = inlined_call_operand.vmem [shape: f32[1,64], index: 4, kind: input, shape index: {}]
  %s5 = inlined_call_operand.vmem [shape: bf16[8,64,128], index: 5, kind: input, shape index: {}]
  %s6 = inlined_call_operand.vmem [shape: f32[1,128], index: 6, kind: input, shape index: {}]
  %s7 = inlined_call_operand.vmem [shape: bf16[128,128], index: 7, kind: input, shape index: {}]
  %s8 = inlined_call_operand.vmem [shape: f32[1,128], index: 8, kind: input, shape index: {}]
  %s9 = inlined_call_operand.vmem [shape: f32[8,128], index: 9, kind: output, shape index: {}]
  %s10 = sld [smem:[#allocation0]]
  $region46: #{trajectory_cnn_forward.1} parent=0
    _
  %s12 = ssub.s32 1, %s10
  %s13 = scalar_select 0, %s12, %s10
  // Predicated region
  $region2: #{trajectory_cnn_forward.1} parent=0 // pred_check
    _
  $region3: #{trajectory_cnn_forward.1} parent=0 // pred_check_branch
    %15 = sbr.rel (0) target = $region5
  $region4: #{trajectory_cnn_forward.1} parent=0 // pred_region
    _
  $region5: #{trajectory_cnn_forward.1} parent=0 // pred_fallthru
    _
  // Predicated region
  $region6: #{trajectory_cnn_forward.1} parent=0 // pred_check
    _
  $region7: #{trajectory_cnn_forward.1} parent=0 // pred_check_branch
    %17 = sbr.rel (0) target = $region9
  $region8: #{trajectory_cnn_forward.1} parent=0 // pred_region
    _
  $region9: #{trajectory_cnn_forward.1} parent=0 // pred_fallthru
    _
  // Predicated region
  $region10: #{trajectory_cnn_forward.1} parent=0 // pred_check
    _
  $region11: #{trajectory_cnn_forward.1} parent=0 // pred_check_branch
    %19 = sbr.rel (0) target = $region13
  $region12: #{trajectory_cnn_forward.1} parent=0 // pred_region
    _
  $region13: #{trajectory_cnn_forward.1} parent=0 // pred_fallthru
    _
  // Predicated region
  $region14: #{trajectory_cnn_forward.1} parent=0 // pred_check
    _
  $region15: #{trajectory_cnn_forward.1} parent=0 // pred_check_branch
    %21 = sbr.rel (0) target = $region17
  $region16: #{trajectory_cnn_forward.1} parent=0 // pred_region
    _
  $region17: #{trajectory_cnn_forward.1} parent=0 // pred_fallthru
    _
  // Predicated region
  $region18: #{trajectory_cnn_forward.1} parent=0 // pred_check
    _
  $region19: #{trajectory_cnn_forward.1} parent=0 // pred_check_branch
    %23 = sbr.rel (0) target = $region21
  $region20: #{trajectory_cnn_forward.1} parent=0 // pred_region
    _
  $region21: #{trajectory_cnn_forward.1} parent=0 // pred_fallthru
    _
  // Predicated region
  $region22: #{trajectory_cnn_forward.1} parent=0 // pred_check
    _
  $region23: #{trajectory_cnn_forward.1} parent=0 // pred_check_branch
    %25 = sbr.rel (0) target = $region25
  $region24: #{trajectory_cnn_forward.1} parent=0 // pred_region
    _
  $region25: #{trajectory_cnn_forward.1} parent=0 // pred_fallthru
    _
  // Predicated region
  $region26: #{trajectory_cnn_forward.1} parent=0 // pred_check
    _
  $region27: #{trajectory_cnn_forward.1} parent=0 // pred_check_branch
    %27 = sbr.rel (0) target = $region29
  $region28: #{trajectory_cnn_forward.1} parent=0 // pred_region
    _
  $region29: #{trajectory_cnn_forward.1} parent=0 // pred_fallthru
    _
  // Predicated region
  $region30: #{trajectory_cnn_forward.1} parent=0 // pred_check
    _
  $region31: #{trajectory_cnn_forward.1} parent=0 // pred_check_branch
    %29 = sbr.rel (0) target = $region33
  $region32: #{trajectory_cnn_forward.1} parent=0 // pred_region
    _
  $region33: #{trajectory_cnn_forward.1} parent=0 // pred_fallthru
    _
  // Predicated region
  $region34: #{trajectory_cnn_forward.1} parent=0 // pred_check
    _
  $region35: #{trajectory_cnn_forward.1} parent=0 // pred_check_branch
    %31 = sbr.rel (0) target = $region37
  $region36: #{trajectory_cnn_forward.1} parent=0 // pred_region
    _
  $region37: #{trajectory_cnn_forward.1} parent=0 // pred_fallthru
    _
  %v33 = vld [vmem:[%s0] sm:$0xf]
  %v34 = vld [vmem:[%s0 + $0x4] sm:$0xf]
  %v35 = vld [vmem:[%s0 + $0x8] sm:$0xf]
  %v36 = vld [vmem:[%s0 + $0xc] sm:$0xf]
  %v37 = vld [vmem:[%s0 + $0x10] sm:$0xf]
  %v38 = vld [vmem:[%s0 + $0x14] sm:$0xf]
  %v39 = vld [vmem:[%s0 + $0x18] sm:$0xf]
  %v40 = vld [vmem:[%s0 + $0x1c] sm:$0xf]
  %v41 = vld [vmem:[%s0 + $0x20] sm:$0xf]
  %v42 = vld [vmem:[%s0 + $0x24] sm:$0xf]
  %v43 = vld [vmem:[%s0 + $0x28] sm:$0xf]
  %v44 = vld [vmem:[%s0 + $0x2c] sm:$0xf]
  %v45 = vld [vmem:[%s0 + $0x30] sm:$0xf]
  %v46 = vld [vmem:[%s0 + $0x34] sm:$0xf]
  %v47 = vld [vmem:[%s0 + $0x38] sm:$0xf]
  %v48 = vld [vmem:[%s0 + $0x3c] sm:$0xf]
  %v49 = vld [vmem:[%s0 + $0x40] sm:$0xf]
  %v50 = vld [vmem:[%s0 + $0x44] sm:$0xf]
  %v51 = vld [vmem:[%s0 + $0x48] sm:$0xf]
  %v52 = vld [vmem:[%s0 + $0x4c] sm:$0xf]
  %v53 = vld [vmem:[%s0 + $0x50] sm:$0xf]
  %v54 = vld [vmem:[%s0 + $0x54] sm:$0xf]
  %v55 = vld [vmem:[%s0 + $0x58] sm:$0xf]
  %v56 = vld [vmem:[%s0 + $0x5c] sm:$0xf]
  %v57 = vld [vmem:[%s0 + $0x60] sm:$0xf]
  %v58 = vld [vmem:[%s0 + $0x64] sm:$0xf]
  %v59 = vld [vmem:[%s0 + $0x68] sm:$0xf]
  %v60 = vld [vmem:[%s0 + $0x6c] sm:$0xf]
  %v61 = vld [vmem:[%s0 + $0x70] sm:$0xf]
  %v62 = vld [vmem:[%s0 + $0x74] sm:$0xf]
  %v63 = vld [vmem:[%s0 + $0x78] sm:$0xf]
  %v64 = vld [vmem:[%s0 + $0x7c] sm:$0xf]
  %v65 = vld [vmem:[%s1] sm:$0x3]
  %s66 = scalar_lea.vmem %s0, 4
  %v67 = vld [vmem:[%s66] sm:$0xf]
  %v68 = vld [vmem:[%s66 + $0x4] sm:$0xf]
  %v69 = vld [vmem:[%s66 + $0x8] sm:$0xf]
  %v70 = vld [vmem:[%s66 + $0xc] sm:$0xf]
  %v71 = vld [vmem:[%s66 + $0x10] sm:$0xf]
  %v72 = vld [vmem:[%s66 + $0x14] sm:$0xf]
  %v73 = vld [vmem:[%s66 + $0x18] sm:$0xf]
  %v74 = vld [vmem:[%s66 + $0x1c] sm:$0xf]
  %v75 = vld [vmem:[%s66 + $0x20] sm:$0xf]
  %v76 = vld [vmem:[%s66 + $0x24] sm:$0xf]
  %v77 = vld [vmem:[%s66 + $0x28] sm:$0xf]
  %v78 = vld [vmem:[%s66 + $0x2c] sm:$0xf]
  %v79 = vld [vmem:[%s66 + $0x30] sm:$0xf]
  %v80 = vld [vmem:[%s66 + $0x34] sm:$0xf]
  %v81 = vld [vmem:[%s66 + $0x38] sm:$0xf]
  %v82 = vld [vmem:[%s66 + $0x3c] sm:$0xf]
  %v83 = vld [vmem:[%s66 + $0x40] sm:$0xf]
  %v84 = vld [vmem:[%s66 + $0x44] sm:$0xf]
  %v85 = vld [vmem:[%s66 + $0x48] sm:$0xf]
  %v86 = vld [vmem:[%s66 + $0x4c] sm:$0xf]
  %v87 = vld [vmem:[%s66 + $0x50] sm:$0xf]
  %v88 = vld [vmem:[%s66 + $0x54] sm:$0xf]
  %v89 = vld [vmem:[%s66 + $0x58] sm:$0xf]
  %v90 = vld [vmem:[%s66 + $0x5c] sm:$0xf]
  %v91 = vld [vmem:[%s66 + $0x60] sm:$0xf]
  %v92 = vld [vmem:[%s66 + $0x64] sm:$0xf]
  %v93 = vld [vmem:[%s66 + $0x68] sm:$0xf]
  %v94 = vld [vmem:[%s66 + $0x6c] sm:$0xf]
  %v95 = vld [vmem:[%s66 + $0x70] sm:$0xf]
  %v96 = vld [vmem:[%s66 + $0x74] sm:$0xf]
  %v97 = vld [vmem:[%s66 + $0x78] sm:$0xf]
  %v98 = vld [vmem:[%s66 + $0x7c] sm:$0xf]
  %s99 = scalar_lea.vmem %s1, 2
  %v100 = vld [vmem:[%s99] sm:$0x3]
  %v133 = vunpack.c.l.b16 %v67
  %v134 = vunpack.c.l.b16 %v68
  %v135 = vunpack.c.l.b16 %v69
  %v136 = vunpack.c.l.b16 %v70
  %v137 = vunpack.c.l.b16 %v71
  %v138 = vunpack.c.l.b16 %v72
  %v139 = vunpack.c.l.b16 %v73
  %v140 = vunpack.c.l.b16 %v74
  %v141 = vunpack.c.l.b16 %v75
  %v142 = vunpack.c.l.b16 %v76
  %v143 = vunpack.c.l.b16 %v77
  %v144 = vunpack.c.l.b16 %v78
  %v145 = vunpack.c.l.b16 %v79
  %v146 = vunpack.c.l.b16 %v80
  %v147 = vunpack.c.l.b16 %v81
  %v148 = vunpack.c.l.b16 %v82
  %v149 = vunpack.c.l.b16 %v83
  %v150 = vunpack.c.l.b16 %v84
  %v151 = vunpack.c.l.b16 %v85
  %v152 = vunpack.c.l.b16 %v86
  %v153 = vunpack.c.l.b16 %v87
  %v154 = vunpack.c.l.b16 %v88
  %v155 = vunpack.c.l.b16 %v89
  %v156 = vunpack.c.l.b16 %v90
  %v157 = vunpack.c.l.b16 %v91
  %v158 = vunpack.c.l.b16 %v92
  %v159 = vunpack.c.l.b16 %v93
  %v160 = vunpack.c.l.b16 %v94
  %v161 = vunpack.c.l.b16 %v95
  %v162 = vunpack.c.l.b16 %v96
  %v163 = vunpack.c.l.b16 %v97
  %v164 = vunpack.c.l.b16 %v98
  %v165 = vpack.c.b16 %v134, %v133
  %v166 = vpack.c.b16 %v136, %v135
  %v167 = vpack.c.b16 %v138, %v137
  %v168 = vpack.c.b16 %v140, %v139
  %v169 = vpack.c.b16 %v142, %v141
  %v170 = vpack.c.b16 %v144, %v143
  %v171 = vpack.c.b16 %v146, %v145
  %v172 = vpack.c.b16 %v148, %v147
  %v173 = vpack.c.b16 %v150, %v149
  %v174 = vpack.c.b16 %v152, %v151
  %v175 = vpack.c.b16 %v154, %v153
  %v176 = vpack.c.b16 %v156, %v155
  %v177 = vpack.c.b16 %v158, %v157
  %v178 = vpack.c.b16 %v160, %v159
  %v179 = vpack.c.b16 %v162, %v161
  %v180 = vpack.c.b16 %v164, %v163
  %vm181 = vcmask 23552
  %v183 = vsel %vm181, %v165, 0
  %v186 = vsel %vm181, %v166, 0
  %v189 = vsel %vm181, %v167, 0
  %v192 = vsel %vm181, %v168, 0
  %v195 = vsel %vm181, %v169, 0
  %v198 = vsel %vm181, %v170, 0
  %v201 = vsel %vm181, %v171, 0
  %v204 = vsel %vm181, %v172, 0
  %v207 = vsel %vm181, %v173, 0
  %v210 = vsel %vm181, %v174, 0
  %v213 = vsel %vm181, %v175, 0
  %v216 = vsel %vm181, %v176, 0
  %v219 = vsel %vm181, %v177, 0
  %v222 = vsel %vm181, %v178, 0
  %v225 = vsel %vm181, %v179, 0
  %v228 = vsel %vm181, %v180, 0
  %vm230 = vcmask 1040384
  %vm231 = vcmask 1041408
  %v232 = vsel %vm230, 4294967295, 65535
  %v233 = vsel %vm231, %v232, 0
  %v235 = vand.u32 %v100, %v233
  %237 = vmatprep.subr.bf16.mxu0 0
  %238 = vmatpush1.bf16.msra.mxu0 %v235
  %239 = vmatprep.subr.bf16.mxu0 0
  %240 = vmatpush1.bf16.msra.mxu0 0
  %241 = vmatprep.subr.bf16.mxu0 0
  %242 = vmatpush1.bf16.msra.mxu0 0
  %243 = vmatprep.subr.bf16.mxu0 0
  %244 = vmatpush1.bf16.msra.mxu0 0
  %245 = vmatprep.subr.bf16.mxu0 0
  %246 = vmatpush1.bf16.msra.mxu0 0
  %247 = vmatprep.subr.bf16.mxu0 0
  %248 = vmatpush1.bf16.msra.mxu0 0
  %249 = vmatprep.subr.bf16.mxu0 0
  %250 = vmatpush1.bf16.msra.mxu0 0
  %251 = vmatprep.subr.bf16.mxu0 0
  %252 = vmatpush1.bf16.msra.mxu0 0
  %253 = vmatprep.subr.bf16.mxu0 0
  %254 = vmatpush1.bf16.msra.mxu0 0
  %255 = vmatprep.subr.bf16.mxu0 0
  %256 = vmatpush1.bf16.msra.mxu0 0
  %257 = vmatprep.subr.bf16.mxu0 0
  %258 = vmatpush1.bf16.msra.mxu0 0
  %259 = vmatprep.subr.bf16.mxu0 0
  %260 = vmatpush1.bf16.msra.mxu0 0
  %261 = vmatprep.subr.bf16.mxu0 0
  %262 = vmatpush1.bf16.msra.mxu0 0
  %263 = vmatprep.subr.bf16.mxu0 0
  %264 = vmatpush1.bf16.msra.mxu0 0
  %265 = vmatprep.subr.bf16.mxu0 0
  %266 = vmatpush1.bf16.msra.mxu0 0
  %267 = vmatprep.subr.bf16.mxu0 0
  %268 = vmatpush1.bf16.msra.mxu0 0
  %269 = vmatprep.mubr.bf16.mxu0 0
  %270 = vmatmul.mubr.bf16.gmra.mrb[0].mxu0 %v183
  %v271 = vpop.f32.mrb[0].mxu0
  %v272 = vadd.f32 0.0, %v271
  %v273 = vpop.f32.mrb[0].mxu0
  %v274 = vpop.f32.mrb[0].mxu0
  %v275 = vadd.f32 0.0, %v274
  %v276 = vpop.f32.mrb[0].mxu0
  %277 = vmatprep.mubr.bf16.mxu0 0
  %278 = vmatmul.mubr.bf16.gmra.mrb[0].mxu0 %v186
  %v279 = vpop.f32.mrb[0].mxu0
  %v280 = vadd.f32 0.0, %v279
  %v281 = vpop.f32.mrb[0].mxu0
  %v282 = vpop.f32.mrb[0].mxu0
  %v283 = vadd.f32 0.0, %v282
  %v284 = vpop.f32.mrb[0].mxu0
  %285 = vmatprep.mubr.bf16.mxu0 0
  %286 = vmatmul.mubr.bf16.gmra.mrb[0].mxu0 %v189
  %v287 = vpop.f32.mrb[0].mxu0
  %v288 = vadd.f32 0.0, %v287
  %v289 = vpop.f32.mrb[0].mxu0
  %v290 = vpop.f32.mrb[0].mxu0
  %v291 = vadd.f32 0.0, %v290
  %v292 = vpop.f32.mrb[0].mxu0
  %293 = vmatprep.mubr.bf16.mxu0 0
  %294 = vmatmul.mubr.bf16.gmra.mrb[0].mxu0 %v192
  %v295 = vpop.f32.mrb[0].mxu0
  %v296 = vadd.f32 0.0, %v295
  %v297 = vpop.f32.mrb[0].mxu0
  %v298 = vpop.f32.mrb[0].mxu0
  %v299 = vadd.f32 0.0, %v298
  %v300 = vpop.f32.mrb[0].mxu0
  %301 = vmatprep.mubr.bf16.mxu0 0
  %302 = vmatmul.mubr.bf16.gmra.mrb[0].mxu0 %v195
  %v303 = vpop.f32.mrb[0].mxu0
  %v304 = vadd.f32 0.0, %v303
  %v305 = vpop.f32.mrb[0].mxu0
  %v306 = vpop.f32.mrb[0].mxu0
  %v307 = vadd.f32 0.0, %v306
  %v308 = vpop.f32.mrb[0].mxu0
  %309 = vmatprep.mubr.bf16.mxu0 0
  %310 = vmatmul.mubr.bf16.gmra.mrb[0].mxu0 %v198
  %v311 = vpop.f32.mrb[0].mxu0
  %v312 = vadd.f32 0.0, %v311
  %v313 = vpop.f32.mrb[0].mxu0
  %v314 = vpop.f32.mrb[0].mxu0
  %v315 = vadd.f32 0.0, %v314
  %v316 = vpop.f32.mrb[0].mxu0
  %317 = vmatprep.mubr.bf16.mxu0 0
  %318 = vmatmul.mubr.bf16.gmra.mrb[0].mxu0 %v201
  %v319 = vpop.f32.mrb[0].mxu0
  %v320 = vadd.f32 0.0, %v319
  %v321 = vpop.f32.mrb[0].mxu0
  %v322 = vpop.f32.mrb[0].mxu0
  %v323 = vadd.f32 0.0, %v322
  %v324 = vpop.f32.mrb[0].mxu0
  %325 = vmatprep.mubr.bf16.mxu0 0
  %326 = vmatmul.mubr.bf16.gmra.mrb[0].mxu0 %v204
  %v327 = vpop.f32.mrb[0].mxu0
  %v328 = vadd.f32 0.0, %v327
  %v329 = vpop.f32.mrb[0].mxu0
  %v330 = vpop.f32.mrb[0].mxu0
  %v331 = vadd.f32 0.0, %v330
  %v332 = vpop.f32.mrb[0].mxu0
  %333 = vmatprep.mubr.bf16.mxu0 0
  %334 = vmatmul.mubr.bf16.gmra.mrb[0].mxu0 %v207
  %v335 = vpop.f32.mrb[0].mxu0
  %v336 = vadd.f32 0.0, %v335
  %v337 = vpop.f32.mrb[0].mxu0
  %v338 = vpop.f32.mrb[0].mxu0
  %v339 = vadd.f32 0.0, %v338
  %v340 = vpop.f32.mrb[0].mxu0
  %341 = vmatprep.mubr.bf16.mxu0 0
  %342 = vmatmul.mubr.bf16.gmra.mrb[0].mxu0 %v210
  %v343 = vpop.f32.mrb[0].mxu0
  %v344 = vadd.f32 0.0, %v343
  %v345 = vpop.f32.mrb[0].mxu0
  %v346 = vpop.f32.mrb[0].mxu0
  %v347 = vadd.f32 0.0, %v346
  %v348 = vpop.f32.mrb[0].mxu0
  %349 = vmatprep.mubr.bf16.mxu0 0
  %350 = vmatmul.mubr.bf16.gmra.mrb[0].mxu0 %v213
  %v351 = vpop.f32.mrb[0].mxu0
  %v352 = vadd.f32 0.0, %v351
  %v353 = vpop.f32.mrb[0].mxu0
  %v354 = vpop.f32.mrb[0].mxu0
  %v355 = vadd.f32 0.0, %v354
  %v356 = vpop.f32.mrb[0].mxu0
  %357 = vmatprep.mubr.bf16.mxu0 0
  %358 = vmatmul.mubr.bf16.gmra.mrb[0].mxu0 %v216
  %v359 = vpop.f32.mrb[0].mxu0
  %v360 = vadd.f32 0.0, %v359
  %v361 = vpop.f32.mrb[0].mxu0
  %v362 = vpop.f32.mrb[0].mxu0
  %v363 = vadd.f32 0.0, %v362
  %v364 = vpop.f32.mrb[0].mxu0
  %365 = vmatprep.mubr.bf16.mxu0 0
  %366 = vmatmul.mubr.bf16.gmra.mrb[0].mxu0 %v219
  %v367 = vpop.f32.mrb[0].mxu0
  %v368 = vadd.f32 0.0, %v367
  %v369 = vpop.f32.mrb[0].mxu0
  %v370 = vpop.f32.mrb[0].mxu0
  %v371 = vadd.f32 0.0, %v370
  %v372 = vpop.f32.mrb[0].mxu0
  %373 = vmatprep.mubr.bf16.mxu0 0
  %374 = vmatmul.mubr.bf16.gmra.mrb[0].mxu0 %v222
  %v375 = vpop.f32.mrb[0].mxu0
  %v376 = vadd.f32 0.0, %v375
  %v377 = vpop.f32.mrb[0].mxu0
  %v378 = vpop.f32.mrb[0].mxu0
  %v379 = vadd.f32 0.0, %v378
  %v380 = vpop.f32.mrb[0].mxu0
  %381 = vmatprep.mubr.bf16.mxu0 0
  %382 = vmatmul.mubr.bf16.gmra.mrb[0].mxu0 %v225
  %v383 = vpop.f32.mrb[0].mxu0
  %v384 = vadd.f32 0.0, %v383
  %v385 = vpop.f32.mrb[0].mxu0
  %v386 = vpop.f32.mrb[0].mxu0
  %v387 = vadd.f32 0.0, %v386
  %v388 = vpop.f32.mrb[0].mxu0
  %389 = vmatprep.mubr.bf16.mxu0 0
  %390 = vmatmul.mubr.bf16.gmra.mrb[0].mxu0 %v228
  %v391 = vpop.f32.mrb[0].mxu0
  %v392 = vadd.f32 0.0, %v391
  %v393 = vpop.f32.mrb[0].mxu0
  %v394 = vpop.f32.mrb[0].mxu0
  %v395 = vadd.f32 0.0, %v394
  %v396 = vpop.f32.mrb[0].mxu0
  %397 = vdwg.mxu0
  %v430 = vunpack.c.l.b16 %v33
  %v431 = vunpack.c.l.b16 %v34
  %v432 = vunpack.c.l.b16 %v35
  %v433 = vunpack.c.l.b16 %v36
  %v434 = vunpack.c.l.b16 %v37
  %v435 = vunpack.c.l.b16 %v38
  %v436 = vunpack.c.l.b16 %v39
  %v437 = vunpack.c.l.b16 %v40
  %v438 = vunpack.c.l.b16 %v41
  %v439 = vunpack.c.l.b16 %v42
  %v440 = vunpack.c.l.b16 %v43
  %v441 = vunpack.c.l.b16 %v44
  %v442 = vunpack.c.l.b16 %v45
  %v443 = vunpack.c.l.b16 %v46
  %v444 = vunpack.c.l.b16 %v47
  %v445 = vunpack.c.l.b16 %v48
  %v446 = vunpack.c.l.b16 %v49
  %v447 = vunpack.c.l.b16 %v50
  %v448 = vunpack.c.l.b16 %v51
  %v449 = vunpack.c.l.b16 %v52
  %v450 = vunpack.c.l.b16 %v53
  %v451 = vunpack.c.l.b16 %v54
  %v452 = vunpack.c.l.b16 %v55
  %v453 = vunpack.c.l.b16 %v56
  %v454 = vunpack.c.l.b16 %v57
  %v455 = vunpack.c.l.b16 %v58
  %v456 = vunpack.c.l.b16 %v59
  %v457 = vunpack.c.l.b16 %v60
  %v458 = vunpack.c.l.b16 %v61
  %v459 = vunpack.c.l.b16 %v62
  %v460 = vunpack.c.l.b16 %v63
  %v461 = vunpack.c.l.b16 %v64
  %v462 = vpack.c.b16 %v431, %v430
  %v463 = vpack.c.b16 %v433, %v432
  %v464 = vpack.c.b16 %v435, %v434
  %v465 = vpack.c.b16 %v437, %v436
  %v466 = vpack.c.b16 %v439, %v438
  %v467 = vpack.c.b16 %v441, %v440
  %v468 = vpack.c.b16 %v443, %v442
  %v469 = vpack.c.b16 %v445, %v444
  %v470 = vpack.c.b16 %v447, %v446
  %v471 = vpack.c.b16 %v449, %v448
  %v472 = vpack.c.b16 %v451, %v450
  %v473 = vpack.c.b16 %v453, %v452
  %v474 = vpack.c.b16 %v455, %v454
  %v475 = vpack.c.b16 %v457, %v456
  %v476 = vpack.c.b16 %v459, %v458
  %v477 = vpack.c.b16 %v461, %v460
  %v479 = vsel %vm181, %v462, 0
  %v482 = vsel %vm181, %v463, 0
  %v485 = vsel %vm181, %v464, 0
  %v488 = vsel %vm181, %v465, 0
  %v491 = vsel %vm181, %v466, 0
  %v494 = vsel %vm181, %v467, 0
  %v497 = vsel %vm181, %v468, 0
  %v500 = vsel %vm181, %v469, 0
  %v503 = vsel %vm181, %v470, 0
  %v506 = vsel %vm181, %v471, 0
  %v509 = vsel %vm181, %v472, 0
  %v512 = vsel %vm181, %v473, 0
  %v515 = vsel %vm181, %v474, 0
  %v518 = vsel %vm181, %v475, 0
  %v521 = vsel %vm181, %v476, 0
  %v524 = vsel %vm181, %v477, 0
  %v527 = vand.u32 %v65, %v233
  %529 = vmatprep.subr.bf16.mxu0 0
  %530 = vmatpush1.bf16.msra.mxu0 %v527
  %531 = vmatprep.subr.bf16.mxu0 0
  %532 = vmatpush1.bf16.msra.mxu0 0
  %533 = vmatprep.subr.bf16.mxu0 0
  %534 = vmatpush1.bf16.msra.mxu0 0
  %535 = vmatprep.subr.bf16.mxu0 0
  %536 = vmatpush1.bf16.msra.mxu0 0
  %537 = vmatprep.subr.bf16.mxu0 0
  %538 = vmatpush1.bf16.msra.mxu0 0
  %539 = vmatprep.subr.bf16.mxu0 0
  %540 = vmatpush1.bf16.msra.mxu0 0
  %541 = vmatprep.subr.bf16.mxu0 0
  %542 = vmatpush1.bf16.msra.mxu0 0
  %543 = vmatprep.subr.bf16.mxu0 0
  %544 = vmatpush1.bf16.msra.mxu0 0
  %545 = vmatprep.subr.bf16.mxu0 0
  %546 = vmatpush1.bf16.msra.mxu0 0
  %547 = vmatprep.subr.bf16.mxu0 0
  %548 = vmatpush1.bf16.msra.mxu0 0
  %549 = vmatprep.subr.bf16.mxu0 0
  %550 = vmatpush1.bf16.msra.mxu0 0
  %551 = vmatprep.subr.bf16.mxu0 0
  %552 = vmatpush1.bf16.msra.mxu0 0
  %553 = vmatprep.subr.bf16.mxu0 0
  %554 = vmatpush1.bf16.msra.mxu0 0
  %555 = vmatprep.subr.bf16.mxu0 0
  %556 = vmatpush1.bf16.msra.mxu0 0
  %557 = vmatprep.subr.bf16.mxu0 0
  %558 = vmatpush1.bf16.msra.mxu0 0
  %559 = vmatprep.subr.bf16.mxu0 0
  %560 = vmatpush1.bf16.msra.mxu0 0
  %561 = vmatprep.mubr.bf16.mxu0 0
  %562 = vmatmul.mubr.bf16.gmra.mrb[0].mxu0 %v479
  %v563 = vpop.f32.mrb[0].mxu0
  %v564 = vadd.f32 %v272, %v563
  %v565 = vpop.f32.mrb[0].mxu0
  %v566 = vpop.f32.mrb[0].mxu0
  %v567 = vadd.f32 %v275, %v566
  %v568 = vpop.f32.mrb[0].mxu0
  %569 = vmatprep.mubr.bf16.mxu0 0
  %570 = vmatmul.mubr.bf16.gmra.mrb[0].mxu0 %v482
  %v571 = vpop.f32.mrb[0].mxu0
  %v572 = vadd.f32 %v280, %v571
  %v573 = vpop.f32.mrb[0].mxu0
  %v574 = vpop.f32.mrb[0].mxu0
  %v575 = vadd.f32 %v283, %v574
  %v576 = vpop.f32.mrb[0].mxu0
  %577 = vmatprep.mubr.bf16.mxu0 0
  %578 = vmatmul.mubr.bf16.gmra.mrb[0].mxu0 %v485
  %v579 = vpop.f32.mrb[0].mxu0
  %v580 = vadd.f32 %v288, %v579
  %v581 = vpop.f32.mrb[0].mxu0
  %v582 = vpop.f32.mrb[0].mxu0
  %v583 = vadd.f32 %v291, %v582
  %v584 = vpop.f32.mrb[0].mxu0
  %585 = vmatprep.mubr.bf16.mxu0 0
  %586 = vmatmul.mubr.bf16.gmra.mrb[0].mxu0 %v488
  %v587 = vpop.f32.mrb[0].mxu0
  %v588 = vadd.f32 %v296, %v587
  %v589 = vpop.f32.mrb[0].mxu0
  %v590 = vpop.f32.mrb[0].mxu0
  %v591 = vadd.f32 %v299, %v590
  %v592 = vpop.f32.mrb[0].mxu0
  %593 = vmatprep.mubr.bf16.mxu0 0
  %594 = vmatmul.mubr.bf16.gmra.mrb[0].mxu0 %v491
  %v595 = vpop.f32.mrb[0].mxu0
  %v596 = vadd.f32 %v304, %v595
  %v597 = vpop.f32.mrb[0].mxu0
  %v598 = vpop.f32.mrb[0].mxu0
  %v599 = vadd.f32 %v307, %v598
  %v600 = vpop.f32.mrb[0].mxu0
  %601 = vmatprep.mubr.bf16.mxu0 0
  %602 = vmatmul.mubr.bf16.gmra.mrb[0].mxu0 %v494
  %v603 = vpop.f32.mrb[0].mxu0
  %v604 = vadd.f32 %v312, %v603
  %v605 = vpop.f32.mrb[0].mxu0
  %v606 = vpop.f32.mrb[0].mxu0
  %v607 = vadd.f32 %v315, %v606
  %v608 = vpop.f32.mrb[0].mxu0
  %609 = vmatprep.mubr.bf16.mxu0 0
  %610 = vmatmul.mubr.bf16.gmra.mrb[0].mxu0 %v497
  %v611 = vpop.f32.mrb[0].mxu0
  %v612 = vadd.f32 %v320, %v611
  %v613 = vpop.f32.mrb[0].mxu0
  %v614 = vpop.f32.mrb[0].mxu0
  %v615 = vadd.f32 %v323, %v614
  %v616 = vpop.f32.mrb[0].mxu0
  %617 = vmatprep.mubr.bf16.mxu0 0
  %618 = vmatmul.mubr.bf16.gmra.mrb[0].mxu0 %v500
  %v619 = vpop.f32.mrb[0].mxu0
  %v620 = vadd.f32 %v328, %v619
  %v621 = vpop.f32.mrb[0].mxu0
  %v622 = vpop.f32.mrb[0].mxu0
  %v623 = vadd.f32 %v331, %v622
  %v624 = vpop.f32.mrb[0].mxu0
  %625 = vmatprep.mubr.bf16.mxu0 0
  %626 = vmatmul.mubr.bf16.gmra.mrb[0].mxu0 %v503
  %v627 = vpop.f32.mrb[0].mxu0
  %v628 = vadd.f32 %v336, %v627
  %v629 = vpop.f32.mrb[0].mxu0
  %v630 = vpop.f32.mrb[0].mxu0
  %v631 = vadd.f32 %v339, %v630
  %v632 = vpop.f32.mrb[0].mxu0
  %633 = vmatprep.mubr.bf16.mxu0 0
  %634 = vmatmul.mubr.bf16.gmra.mrb[0].mxu0 %v506
  %v635 = vpop.f32.mrb[0].mxu0
  %v636 = vadd.f32 %v344, %v635
  %v637 = vpop.f32.mrb[0].mxu0
  %v638 = vpop.f32.mrb[0].mxu0
  %v639 = vadd.f32 %v347, %v638
  %v640 = vpop.f32.mrb[0].mxu0
  %641 = vmatprep.mubr.bf16.mxu0 0
  %642 = vmatmul.mubr.bf16.gmra.mrb[0].mxu0 %v509
  %v643 = vpop.f32.mrb[0].mxu0
  %v644 = vadd.f32 %v352, %v643
  %v645 = vpop.f32.mrb[0].mxu0
  %v646 = vpop.f32.mrb[0].mxu0
  %v647 = vadd.f32 %v355, %v646
  %v648 = vpop.f32.mrb[0].mxu0
  %649 = vmatprep.mubr.bf16.mxu0 0
  %650 = vmatmul.mubr.bf16.gmra.mrb[0].mxu0 %v512
  %v651 = vpop.f32.mrb[0].mxu0
  %v652 = vadd.f32 %v360, %v651
  %v653 = vpop.f32.mrb[0].mxu0
  %v654 = vpop.f32.mrb[0].mxu0
  %v655 = vadd.f32 %v363, %v654
  %v656 = vpop.f32.mrb[0].mxu0
  %657 = vmatprep.mubr.bf16.mxu0 0
  %658 = vmatmul.mubr.bf16.gmra.mrb[0].mxu0 %v515
  %v659 = vpop.f32.mrb[0].mxu0
  %v660 = vadd.f32 %v368, %v659
  %v661 = vpop.f32.mrb[0].mxu0
  %v662 = vpop.f32.mrb[0].mxu0
  %v663 = vadd.f32 %v371, %v662
  %v664 = vpop.f32.mrb[0].mxu0
  %665 = vmatprep.mubr.bf16.mxu0 0
  %666 = vmatmul.mubr.bf16.gmra.mrb[0].mxu0 %v518
  %v667 = vpop.f32.mrb[0].mxu0
  %v668 = vadd.f32 %v376, %v667
  %v669 = vpop.f32.mrb[0].mxu0
  %v670 = vpop.f32.mrb[0].mxu0
  %v671 = vadd.f32 %v379, %v670
  %v672 = vpop.f32.mrb[0].mxu0
  %673 = vmatprep.mubr.bf16.mxu0 0
  %674 = vmatmul.mubr.bf16.gmra.mrb[0].mxu0 %v521
  %v675 = vpop.f32.mrb[0].mxu0
  %v676 = vadd.f32 %v384, %v675
  %v677 = vpop.f32.mrb[0].mxu0
  %v678 = vpop.f32.mrb[0].mxu0
  %v679 = vadd.f32 %v387, %v678
  %v680 = vpop.f32.mrb[0].mxu0
  %681 = vmatprep.mubr.bf16.mxu0 0
  %682 = vmatmul.mubr.bf16.gmra.mrb[0].mxu0 %v524
  %v683 = vpop.f32.mrb[0].mxu0
  %v684 = vadd.f32 %v392, %v683
  %v685 = vpop.f32.mrb[0].mxu0
  %v686 = vpop.f32.mrb[0].mxu0
  %v687 = vadd.f32 %v395, %v686
  %v688 = vpop.f32.mrb[0].mxu0
  %689 = vdwg.mxu0
  %s690 = scalar_lea.vmem %s0, 8
  %v691 = vld [vmem:[%s690] sm:$0xf]
  %v692 = vld [vmem:[%s690 + $0x4] sm:$0xf]
  %v693 = vld [vmem:[%s690 + $0x8] sm:$0xf]
  %v694 = vld [vmem:[%s690 + $0xc] sm:$0xf]
  %v695 = vld [vmem:[%s690 + $0x10] sm:$0xf]
  %v696 = vld [vmem:[%s690 + $0x14] sm:$0xf]
  %v697 = vld [vmem:[%s690 + $0x18] sm:$0xf]
  %v698 = vld [vmem:[%s690 + $0x1c] sm:$0xf]
  %v699 = vld [vmem:[%s690 + $0x20] sm:$0xf]
  %v700 = vld [vmem:[%s690 + $0x24] sm:$0xf]
  %v701 = vld [vmem:[%s690 + $0x28] sm:$0xf]
  %v702 = vld [vmem:[%s690 + $0x2c] sm:$0xf]
  %v703 = vld [vmem:[%s690 + $0x30] sm:$0xf]
  %v704 = vld [vmem:[%s690 + $0x34] sm:$0xf]
  %v705 = vld [vmem:[%s690 + $0x38] sm:$0xf]
  %v706 = vld [vmem:[%s690 + $0x3c] sm:$0xf]
  %v707 = vld [vmem:[%s690 + $0x40] sm:$0xf]
  %v708 = vld [vmem:[%s690 + $0x44] sm:$0xf]
  %v709 = vld [vmem:[%s690 + $0x48] sm:$0xf]
  %v710 = vld [vmem:[%s690 + $0x4c] sm:$0xf]
  %v711 = vld [vmem:[%s690 + $0x50] sm:$0xf]
  %v712 = vld [vmem:[%s690 + $0x54] sm:$0xf]
  %v713 = vld [vmem:[%s690 + $0x58] sm:$0xf]
  %v714 = vld [vmem:[%s690 + $0x5c] sm:$0xf]
  %v715 = vld [vmem:[%s690 + $0x60] sm:$0xf]
  %v716 = vld [vmem:[%s690 + $0x64] sm:$0xf]
  %v717 = vld [vmem:[%s690 + $0x68] sm:$0xf]
  %v718 = vld [vmem:[%s690 + $0x6c] sm:$0xf]
  %v719 = vld [vmem:[%s690 + $0x70] sm:$0xf]
  %v720 = vld [vmem:[%s690 + $0x74] sm:$0xf]
  %v721 = vld [vmem:[%s690 + $0x78] sm:$0xf]
  %v722 = vld [vmem:[%s690 + $0x7c] sm:$0xf]
  %s723 = scalar_lea.vmem %s1, 4
  %v724 = vld [vmem:[%s723] sm:$0x3]
  %v757 = vunpack.c.l.b16 %v691
  %v758 = vunpack.c.l.b16 %v692
  %v759 = vunpack.c.l.b16 %v693
  %v760 = vunpack.c.l.b16 %v694
  %v761 = vunpack.c.l.b16 %v695
  %v762 = vunpack.c.l.b16 %v696
  %v763 = vunpack.c.l.b16 %v697
  %v764 = vunpack.c.l.b16 %v698
  %v765 = vunpack.c.l.b16 %v699
  %v766 = vunpack.c.l.b16 %v700
  %v767 = vunpack.c.l.b16 %v701
  %v768 = vunpack.c.l.b16 %v702
  %v769 = vunpack.c.l.b16 %v703
  %v770 = vunpack.c.l.b16 %v704
  %v771 = vunpack.c.l.b16 %v705
  %v772 = vunpack.c.l.b16 %v706
  %v773 = vunpack.c.l.b16 %v707
  %v774 = vunpack.c.l.b16 %v708
  %v775 = vunpack.c.l.b16 %v709
  %v776 = vunpack.c.l.b16 %v710
  %v777 = vunpack.c.l.b16 %v711
  %v778 = vunpack.c.l.b16 %v712
  %v779 = vunpack.c.l.b16 %v713
  %v780 = vunpack.c.l.b16 %v714
  %v781 = vunpack.c.l.b16 %v715
  %v782 = vunpack.c.l.b16 %v716
  %v783 = vunpack.c.l.b16 %v717
  %v784 = vunpack.c.l.b16 %v718
  %v785 = vunpack.c.l.b16 %v719
  %v786 = vunpack.c.l.b16 %v720
  %v787 = vunpack.c.l.b16 %v721
  %v788 = vunpack.c.l.b16 %v722
  %v789 = vpack.c.b16 %v758, %v757
  %v790 = vpack.c.b16 %v760, %v759
  %v791 = vpack.c.b16 %v762, %v761
  %v792 = vpack.c.b16 %v764, %v763
  %v793 = vpack.c.b16 %v766, %v765
  %v794 = vpack.c.b16 %v768, %v767
  %v795 = vpack.c.b16 %v770, %v769
  %v796 = vpack.c.b16 %v772, %v771
  %v797 = vpack.c.b16 %v774, %v773
  %v798 = vpack.c.b16 %v776, %v775
  %v799 = vpack.c.b16 %v778, %v777
  %v800 = vpack.c.b16 %v780, %v779
  %v801 = vpack.c.b16 %v782, %v781
  %v802 = vpack.c.b16 %v784, %v783
  %v803 = vpack.c.b16 %v786, %v785
  %v804 = vpack.c.b16 %v788, %v787
  %v806 = vsel %vm181, %v789, 0
  %v809 = vsel %vm181, %v790, 0
  %v812 = vsel %vm181, %v791, 0
  %v815 = vsel %vm181, %v792, 0
  %v818 = vsel %vm181, %v793, 0
  %v821 = vsel %vm181, %v794, 0
  %v824 = vsel %vm181, %v795, 0
  %v827 = vsel %vm181, %v796, 0
  %v830 = vsel %vm181, %v797, 0
  %v833 = vsel %vm181, %v798, 0
  %v836 = vsel %vm181, %v799, 0
  %v839 = vsel %vm181, %v800, 0
  %v842 = vsel %vm181, %v801, 0
  %v845 = vsel %vm181, %v802, 0
  %v848 = vsel %vm181, %v803, 0
  %v851 = vsel %vm181, %v804, 0
  %v854 = vand.u32 %v724, %v233
  %856 = vmatprep.subr.bf16.mxu0 0
  %857 = vmatpush1.bf16.msra.mxu0 %v854
  %858 = vmatprep.subr.bf16.mxu0 0
  %859 = vmatpush1.bf16.msra.mxu0 0
  %860 = vmatprep.subr.bf16.mxu0 0
  %861 = vmatpush1.bf16.msra.mxu0 0
  %862 = vmatprep.subr.bf16.mxu0 0
  %863 = vmatpush1.bf16.msra.mxu0 0
  %864 = vmatprep.subr.bf16.mxu0 0
  %865 = vmatpush1.bf16.msra.mxu0 0
  %866 = vmatprep.subr.bf16.mxu0 0
  %867 = vmatpush1.bf16.msra.mxu0 0
  %868 = vmatprep.subr.bf16.mxu0 0
  %869 = vmatpush1.bf16.msra.mxu0 0
  %870 = vmatprep.subr.bf16.mxu0 0
  %871 = vmatpush1.bf16.msra.mxu0 0
  %872 = vmatprep.subr.bf16.mxu0 0
  %873 = vmatpush1.bf16.msra.mxu0 0
  %874 = vmatprep.subr.bf16.mxu0 0
  %875 = vmatpush1.bf16.msra.mxu0 0
  %876 = vmatprep.subr.bf16.mxu0 0
  %877 = vmatpush1.bf16.msra.mxu0 0
  %878 = vmatprep.subr.bf16.mxu0 0
  %879 = vmatpush1.bf16.msra.mxu0 0
  %880 = vmatprep.subr.bf16.mxu0 0
  %881 = vmatpush1.bf16.msra.mxu0 0
  %882 = vmatprep.subr.bf16.mxu0 0
  %883 = vmatpush1.bf16.msra.mxu0 0
  %884 = vmatprep.subr.bf16.mxu0 0
  %885 = vmatpush1.bf16.msra.mxu0 0
  %886 = vmatprep.subr.bf16.mxu0 0
  %887 = vmatpush1.bf16.msra.mxu0 0
  %888 = vmatprep.mubr.bf16.mxu0 0
  %889 = vmatmul.mubr.bf16.gmra.mrb[0].mxu0 %v806
  %v890 = vpop.f32.mrb[0].mxu0
  %v891 = vadd.f32 0.0, %v890
  %v892 = vpop.f32.mrb[0].mxu0
  %v893 = vpop.f32.mrb[0].mxu0
  %v894 = vadd.f32 0.0, %v893
  %v895 = vpop.f32.mrb[0].mxu0
  %896 = vmatprep.mubr.bf16.mxu0 0
  %897 = vmatmul.mubr.bf16.gmra.mrb[0].mxu0 %v809
  %v898 = vpop.f32.mrb[0].mxu0
  %v899 = vadd.f32 0.0, %v898
  %v900 = vpop.f32.mrb[0].mxu0
  %v901 = vpop.f32.mrb[0].mxu0
  %v902 = vadd.f32 0.0, %v901
  %v903 = vpop.f32.mrb[0].mxu0
  %904 = vmatprep.mubr.bf16.mxu0 0
  %905 = vmatmul.mubr.bf16.gmra.mrb[0].mxu0 %v812
  %v906 = vpop.f32.mrb[0].mxu0
  %v907 = vadd.f32 0.0, %v906
  %v908 = vpop.f32.mrb[0].mxu0
  %v909 = vpop.f32.mrb[0].mxu0
  %v910 = vadd.f32 0.0, %v909
  %v911 = vpop.f32.mrb[0].mxu0
  %912 = vmatprep.mubr.bf16.mxu0 0
  %913 = vmatmul.mubr.bf16.gmra.mrb[0].mxu0 %v815
  %v914 = vpop.f32.mrb[0].mxu0
  %v915 = vadd.f32 0.0, %v914
  %v916 = vpop.f32.mrb[0].mxu0
  %v917 = vpop.f32.mrb[0].mxu0
  %v918 = vadd.f32 0.0, %v917
  %v919 = vpop.f32.mrb[0].mxu0
  %920 = vmatprep.mubr.bf16.mxu0 0
  %921 = vmatmul.mubr.bf16.gmra.mrb[0].mxu0 %v818
  %v922 = vpop.f32.mrb[0].mxu0
  %v923 = vadd.f32 0.0, %v922
  %v924 = vpop.f32.mrb[0].mxu0
  %v925 = vpop.f32.mrb[0].mxu0
  %v926 = vadd.f32 0.0, %v925
  %v927 = vpop.f32.mrb[0].mxu0
  %928 = vmatprep.mubr.bf16.mxu0 0
  %929 = vmatmul.mubr.bf16.gmra.mrb[0].mxu0 %v821
  %v930 = vpop.f32.mrb[0].mxu0
  %v931 = vadd.f32 0.0, %v930
  %v932 = vpop.f32.mrb[0].mxu0
  %v933 = vpop.f32.mrb[0].mxu0
  %v934 = vadd.f32 0.0, %v933
  %v935 = vpop.f32.mrb[0].mxu0
  %936 = vmatprep.mubr.bf16.mxu0 0
  %937 = vmatmul.mubr.bf16.gmra.mrb[0].mxu0 %v824
  %v938 = vpop.f32.mrb[0].mxu0
  %v939 = vadd.f32 0.0, %v938
  %v940 = vpop.f32.mrb[0].mxu0
  %v941 = vpop.f32.mrb[0].mxu0
  %v942 = vadd.f32 0.0, %v941
  %v943 = vpop.f32.mrb[0].mxu0
  %944 = vmatprep.mubr.bf16.mxu0 0
  %945 = vmatmul.mubr.bf16.gmra.mrb[0].mxu0 %v827
  %v946 = vpop.f32.mrb[0].mxu0
  %v947 = vadd.f32 0.0, %v946
  %v948 = vpop.f32.mrb[0].mxu0
  %v949 = vpop.f32.mrb[0].mxu0
  %v950 = vadd.f32 0.0, %v949
  %v951 = vpop.f32.mrb[0].mxu0
  %952 = vmatprep.mubr.bf16.mxu0 0
  %953 = vmatmul.mubr.bf16.gmra.mrb[0].mxu0 %v830
  %v954 = vpop.f32.mrb[0].mxu0
  %v955 = vadd.f32 0.0, %v954
  %v956 = vpop.f32.mrb[0].mxu0
  %v957 = vpop.f32.mrb[0].mxu0
  %v958 = vadd.f32 0.0, %v957
  %v959 = vpop.f32.mrb[0].mxu0
  %960 = vmatprep.mubr.bf16.mxu0 0
  %961 = vmatmul.mubr.bf16.gmra.mrb[0].mxu0 %v833
  %v962 = vpop.f32.mrb[0].mxu0
  %v963 = vadd.f32 0.0, %v962
  %v964 = vpop.f32.mrb[0].mxu0
  %v965 = vpop.f32.mrb[0].mxu0
  %v966 = vadd.f32 0.0, %v965
  %v967 = vpop.f32.mrb[0].mxu0
  %968 = vmatprep.mubr.bf16.mxu0 0
  %969 = vmatmul.mubr.bf16.gmra.mrb[0].mxu0 %v836
  %v970 = vpop.f32.mrb[0].mxu0
  %v971 = vadd.f32 0.0, %v970
  %v972 = vpop.f32.mrb[0].mxu0
  %v973 = vpop.f32.mrb[0].mxu0
  %v974 = vadd.f32 0.0, %v973
  %v975 = vpop.f32.mrb[0].mxu0
  %976 = vmatprep.mubr.bf16.mxu0 0
  %977 = vmatmul.mubr.bf16.gmra.mrb[0].mxu0 %v839
  %v978 = vpop.f32.mrb[0].mxu0
  %v979 = vadd.f32 0.0, %v978
  %v980 = vpop.f32.mrb[0].mxu0
  %v981 = vpop.f32.mrb[0].mxu0
  %v982 = vadd.f32 0.0, %v981
  %v983 = vpop.f32.mrb[0].mxu0
  %984 = vmatprep.mubr.bf16.mxu0 0
  %985 = vmatmul.mubr.bf16.gmra.mrb[0].mxu0 %v842
  %v986 = vpop.f32.mrb[0].mxu0
  %v987 = vadd.f32 0.0, %v986
  %v988 = vpop.f32.mrb[0].mxu0
  %v989 = vpop.f32.mrb[0].mxu0
  %v990 = vadd.f32 0.0, %v989
  %v991 = vpop.f32.mrb[0].mxu0
  %992 = vmatprep.mubr.bf16.mxu0 0
  %993 = vmatmul.mubr.bf16.gmra.mrb[0].mxu0 %v845
  %v994 = vpop.f32.mrb[0].mxu0
  %v995 = vadd.f32 0.0, %v994
  %v996 = vpop.f32.mrb[0].mxu0
  %v997 = vpop.f32.mrb[0].mxu0
  %v998 = vadd.f32 0.0, %v997
  %v999 = vpop.f32.mrb[0].mxu0
  %1000 = vmatprep.mubr.bf16.mxu0 0
  %1001 = vmatmul.mubr.bf16.gmra.mrb[0].mxu0 %v848
  %v1002 = vpop.f32.mrb[0].mxu0
  %v1003 = vadd.f32 0.0, %v1002
  %v1004 = vpop.f32.mrb[0].mxu0
  %v1005 = vpop.f32.mrb[0].mxu0
  %v1006 = vadd.f32 0.0, %v1005
  %v1007 = vpop.f32.mrb[0].mxu0
  %1008 = vmatprep.mubr.bf16.mxu0 0
  %1009 = vmatmul.mubr.bf16.gmra.mrb[0].mxu0 %v851
  %v1010 = vpop.f32.mrb[0].mxu0
  %v1011 = vadd.f32 0.0, %v1010
  %v1012 = vpop.f32.mrb[0].mxu0
  %v1013 = vpop.f32.mrb[0].mxu0
  %v1014 = vadd.f32 0.0, %v1013
  %v1015 = vpop.f32.mrb[0].mxu0
  %1016 = vdwg.mxu0
  %v1017 = vadd.f32 %v564, %v891
  %v1018 = vadd.f32 %v567, %v894
  %v1019 = vadd.f32 %v572, %v899
  %v1020 = vadd.f32 %v575, %v902
  %v1021 = vadd.f32 %v580, %v907
  %v1022 = vadd.f32 %v583, %v910
  %v1023 = vadd.f32 %v588, %v915
  %v1024 = vadd.f32 %v591, %v918
  %v1025 = vadd.f32 %v596, %v923
  %v1026 = vadd.f32 %v599, %v926
  %v1027 = vadd.f32 %v604, %v931
  %v1028 = vadd.f32 %v607, %v934
  %v1029 = vadd.f32 %v612, %v939
  %v1030 = vadd.f32 %v615, %v942
  %v1031 = vadd.f32 %v620, %v947
  %v1032 = vadd.f32 %v623, %v950
  %v1033 = vadd.f32 %v628, %v955
  %v1034 = vadd.f32 %v631, %v958
  %v1035 = vadd.f32 %v636, %v963
  %v1036 = vadd.f32 %v639, %v966
  %v1037 = vadd.f32 %v644, %v971
  %v1038 = vadd.f32 %v647, %v974
  %v1039 = vadd.f32 %v652, %v979
  %v1040 = vadd.f32 %v655, %v982
  %v1041 = vadd.f32 %v660, %v987
  %v1042 = vadd.f32 %v663, %v990
  %v1043 = vadd.f32 %v668, %v995
  %v1044 = vadd.f32 %v671, %v998
  %v1045 = vadd.f32 %v676, %v1003
  %v1046 = vadd.f32 %v679, %v1006
  %v1047 = vadd.f32 %v684, %v1011
  %v1048 = vadd.f32 %v687, %v1014
  %s1049 = scalar_lea.vmem %s0, 12
  %v1050 = vld [vmem:[%s1049] sm:$0xf]
  %v1051 = vld [vmem:[%s1049 + $0x4] sm:$0xf]
  %v1052 = vld [vmem:[%s1049 + $0x8] sm:$0xf]
  %v1053 = vld [vmem:[%s1049 + $0xc] sm:$0xf]
  %v1054 = vld [vmem:[%s1049 + $0x10] sm:$0xf]
  %v1055 = vld [vmem:[%s1049 + $0x14] sm:$0xf]
  %v1056 = vld [vmem:[%s1049 + $0x18] sm:$0xf]
  %v1057 = vld [vmem:[%s1049 + $0x1c] sm:$0xf]
  %v1058 = vld [vmem:[%s1049 + $0x20] sm:$0xf]
  %v1059 = vld [vmem:[%s1049 + $0x24] sm:$0xf]
  %v1060 = vld [vmem:[%s1049 + $0x28] sm:$0xf]
  %v1061 = vld [vmem:[%s1049 + $0x2c] sm:$0xf]
  %v1062 = vld [vmem:[%s1049 + $0x30] sm:$0xf]
  %v1063 = vld [vmem:[%s1049 + $0x34] sm:$0xf]
  %v1064 = vld [vmem:[%s1049 + $0x38] sm:$0xf]
  %v1065 = vld [vmem:[%s1049 + $0x3c] sm:$0xf]
  %v1066 = vld [vmem:[%s1049 + $0x40] sm:$0xf]
  %v1067 = vld [vmem:[%s1049 + $0x44] sm:$0xf]
  %v1068 = vld [vmem:[%s1049 + $0x48] sm:$0xf]
  %v1069 = vld [vmem:[%s1049 + $0x4c] sm:$0xf]
  %v1070 = vld [vmem:[%s1049 + $0x50] sm:$0xf]
  %v1071 = vld [vmem:[%s1049 + $0x54] sm:$0xf]
  %v1072 = vld [vmem:[%s1049 + $0x58] sm:$0xf]
  %v1073 = vld [vmem:[%s1049 + $0x5c] sm:$0xf]
  %v1074 = vld [vmem:[%s1049 + $0x60] sm:$0xf]
  %v1075 = vld [vmem:[%s1049 + $0x64] sm:$0xf]
  %v1076 = vld [vmem:[%s1049 + $0x68] sm:$0xf]
  %v1077 = vld [vmem:[%s1049 + $0x6c] sm:$0xf]
  %v1078 = vld [vmem:[%s1049 + $0x70] sm:$0xf]
  %v1079 = vld [vmem:[%s1049 + $0x74] sm:$0xf]
  %v1080 = vld [vmem:[%s1049 + $0x78] sm:$0xf]
  %v1081 = vld [vmem:[%s1049 + $0x7c] sm:$0xf]
  %s1082 = scalar_lea.vmem %s1, 6
  %v1083 = vld [vmem:[%s1082] sm:$0x3]
  %v1116 = vunpack.c.l.b16 %v1050
  %v1117 = vunpack.c.l.b16 %v1051
  %v1118 = vunpack.c.l.b16 %v1052
  %v1119 = vunpack.c.l.b16 %v1053
  %v1120 = vunpack.c.l.b16 %v1054
  %v1121 = vunpack.c.l.b16 %v1055
  %v1122 = vunpack.c.l.b16 %v1056
  %v1123 = vunpack.c.l.b16 %v1057
  %v1124 = vunpack.c.l.b16 %v1058
  %v1125 = vunpack.c.l.b16 %v1059
  %v1126 = vunpack.c.l.b16 %v1060
  %v1127 = vunpack.c.l.b16 %v1061
  %v1128 = vunpack.c.l.b16 %v1062
  %v1129 = vunpack.c.l.b16 %v1063
  %v1130 = vunpack.c.l.b16 %v1064
  %v1131 = vunpack.c.l.b16 %v1065
  %v1132 = vunpack.c.l.b16 %v1066
  %v1133 = vunpack.c.l.b16 %v1067
  %v1134 = vunpack.c.l.b16 %v1068
  %v1135 = vunpack.c.l.b16 %v1069
  %v1136 = vunpack.c.l.b16 %v1070
  %v1137 = vunpack.c.l.b16 %v1071
  %v1138 = vunpack.c.l.b16 %v1072
  %v1139 = vunpack.c.l.b16 %v1073
  %v1140 = vunpack.c.l.b16 %v1074
  %v1141 = vunpack.c.l.b16 %v1075
  %v1142 = vunpack.c.l.b16 %v1076
  %v1143 = vunpack.c.l.b16 %v1077
  %v1144 = vunpack.c.l.b16 %v1078
  %v1145 = vunpack.c.l.b16 %v1079
  %v1146 = vunpack.c.l.b16 %v1080
  %v1147 = vunpack.c.l.b16 %v1081
  %v1148 = vpack.c.b16 %v1117, %v1116
  %v1149 = vpack.c.b16 %v1119, %v1118
  %v1150 = vpack.c.b16 %v1121, %v1120
  %v1151 = vpack.c.b16 %v1123, %v1122
  %v1152 = vpack.c.b16 %v1125, %v1124
  %v1153 = vpack.c.b16 %v1127, %v1126
  %v1154 = vpack.c.b16 %v1129, %v1128
  %v1155 = vpack.c.b16 %v1131, %v1130
  %v1156 = vpack.c.b16 %v1133, %v1132
  %v1157 = vpack.c.b16 %v1135, %v1134
  %v1158 = vpack.c.b16 %v1137, %v1136
  %v1159 = vpack.c.b16 %v1139, %v1138
  %v1160 = vpack.c.b16 %v1141, %v1140
  %v1161 = vpack.c.b16 %v1143, %v1142
  %v1162 = vpack.c.b16 %v1145, %v1144
  %v1163 = vpack.c.b16 %v1147, %v1146
  %v1165 = vsel %vm181, %v1148, 0
  %v1168 = vsel %vm181, %v1149, 0
  %v1171 = vsel %vm181, %v1150, 0
  %v1174 = vsel %vm181, %v1151, 0
  %v1177 = vsel %vm181, %v1152, 0
  %v1180 = vsel %vm181, %v1153, 0
  %v1183 = vsel %vm181, %v1154, 0
  %v1186 = vsel %vm181, %v1155, 0
  %v1189 = vsel %vm181, %v1156, 0
  %v1192 = vsel %vm181, %v1157, 0
  %v1195 = vsel %vm181, %v1158, 0
  %v1198 = vsel %vm181, %v1159, 0
  %v1201 = vsel %vm181, %v1160, 0
  %v1204 = vsel %vm181, %v1161, 0
  %v1207 = vsel %vm181, %v1162, 0
  %v1210 = vsel %vm181, %v1163, 0
  %v1213 = vand.u32 %v1083, %v233
  %1215 = vmatprep.subr.bf16.mxu0 0
  %1216 = vmatpush1.bf16.msra.mxu0 %v1213
  %1217 = vmatprep.subr.bf16.mxu0 0
  %1218 = vmatpush1.bf16.msra.mxu0 0
  %1219 = vmatprep.subr.bf16.mxu0 0
  %1220 = vmatpush1.bf16.msra.mxu0 0
  %1221 = vmatprep.subr.bf16.mxu0 0
  %1222 = vmatpush1.bf16.msra.mxu0 0
  %1223 = vmatprep.subr.bf16.mxu0 0
  %1224 = vmatpush1.bf16.msra.mxu0 0
  %1225 = vmatprep.subr.bf16.mxu0 0
  %1226 = vmatpush1.bf16.msra.mxu0 0
  %1227 = vmatprep.subr.bf16.mxu0 0
  %1228 = vmatpush1.bf16.msra.mxu0 0
  %1229 = vmatprep.subr.bf16.mxu0 0
  %1230 = vmatpush1.bf16.msra.mxu0 0
  %1231 = vmatprep.subr.bf16.mxu0 0
  %1232 = vmatpush1.bf16.msra.mxu0 0
  %1233 = vmatprep.subr.bf16.mxu0 0
  %1234 = vmatpush1.bf16.msra.mxu0 0
  %1235 = vmatprep.subr.bf16.mxu0 0
  %1236 = vmatpush1.bf16.msra.mxu0 0
  %1237 = vmatprep.subr.bf16.mxu0 0
  %1238 = vmatpush1.bf16.msra.mxu0 0
  %1239 = vmatprep.subr.bf16.mxu0 0
  %1240 = vmatpush1.bf16.msra.mxu0 0
  %1241 = vmatprep.subr.bf16.mxu0 0
  %1242 = vmatpush1.bf16.msra.mxu0 0
  %1243 = vmatprep.subr.bf16.mxu0 0
  %1244 = vmatpush1.bf16.msra.mxu0 0
  %1245 = vmatprep.subr.bf16.mxu0 0
  %1246 = vmatpush1.bf16.msra.mxu0 0
  %1247 = vmatprep.mubr.bf16.mxu0 0
  %1248 = vmatmul.mubr.bf16.gmra.mrb[0].mxu0 %v1165
  %v1249 = vpop.f32.mrb[0].mxu0
  %v1250 = vadd.f32 0.0, %v1249
  %v1251 = vpop.f32.mrb[0].mxu0
  %v1252 = vpop.f32.mrb[0].mxu0
  %v1253 = vadd.f32 0.0, %v1252
  %v1254 = vpop.f32.mrb[0].mxu0
  %1255 = vmatprep.mubr.bf16.mxu0 0
  %1256 = vmatmul.mubr.bf16.gmra.mrb[0].mxu0 %v1168
  %v1257 = vpop.f32.mrb[0].mxu0
  %v1258 = vadd.f32 0.0, %v1257
  %v1259 = vpop.f32.mrb[0].mxu0
  %v1260 = vpop.f32.mrb[0].mxu0
  %v1261 = vadd.f32 0.0, %v1260
  %v1262 = vpop.f32.mrb[0].mxu0
  %1263 = vmatprep.mubr.bf16.mxu0 0
  %1264 = vmatmul.mubr.bf16.gmra.mrb[0].mxu0 %v1171
  %v1265 = vpop.f32.mrb[0].mxu0
  %v1266 = vadd.f32 0.0, %v1265
  %v1267 = vpop.f32.mrb[0].mxu0
  %v1268 = vpop.f32.mrb[0].mxu0
  %v1269 = vadd.f32 0.0, %v1268
  %v1270 = vpop.f32.mrb[0].mxu0
  %1271 = vmatprep.mubr.bf16.mxu0 0
  %1272 = vmatmul.mubr.bf16.gmra.mrb[0].mxu0 %v1174
  %v1273 = vpop.f32.mrb[0].mxu0
  %v1274 = vadd.f32 0.0, %v1273
  %v1275 = vpop.f32.mrb[0].mxu0
  %v1276 = vpop.f32.mrb[0].mxu0
  %v1277 = vadd.f32 0.0, %v1276
  %v1278 = vpop.f32.mrb[0].mxu0
  %1279 = vmatprep.mubr.bf16.mxu0 0
  %1280 = vmatmul.mubr.bf16.gmra.mrb[0].mxu0 %v1177
  %v1281 = vpop.f32.mrb[0].mxu0
  %v1282 = vadd.f32 0.0, %v1281
  %v1283 = vpop.f32.mrb[0].mxu0
  %v1284 = vpop.f32.mrb[0].mxu0
  %v1285 = vadd.f32 0.0, %v1284
  %v1286 = vpop.f32.mrb[0].mxu0
  %1287 = vmatprep.mubr.bf16.mxu0 0
  %1288 = vmatmul.mubr.bf16.gmra.mrb[0].mxu0 %v1180
  %v1289 = vpop.f32.mrb[0].mxu0
  %v1290 = vadd.f32 0.0, %v1289
  %v1291 = vpop.f32.mrb[0].mxu0
  %v1292 = vpop.f32.mrb[0].mxu0
  %v1293 = vadd.f32 0.0, %v1292
  %v1294 = vpop.f32.mrb[0].mxu0
  %1295 = vmatprep.mubr.bf16.mxu0 0
  %1296 = vmatmul.mubr.bf16.gmra.mrb[0].mxu0 %v1183
  %v1297 = vpop.f32.mrb[0].mxu0
  %v1298 = vadd.f32 0.0, %v1297
  %v1299 = vpop.f32.mrb[0].mxu0
  %v1300 = vpop.f32.mrb[0].mxu0
  %v1301 = vadd.f32 0.0, %v1300
  %v1302 = vpop.f32.mrb[0].mxu0
  %1303 = vmatprep.mubr.bf16.mxu0 0
  %1304 = vmatmul.mubr.bf16.gmra.mrb[0].mxu0 %v1186
  %v1305 = vpop.f32.mrb[0].mxu0
  %v1306 = vadd.f32 0.0, %v1305
  %v1307 = vpop.f32.mrb[0].mxu0
  %v1308 = vpop.f32.mrb[0].mxu0
  %v1309 = vadd.f32 0.0, %v1308
  %v1310 = vpop.f32.mrb[0].mxu0
  %1311 = vmatprep.mubr.bf16.mxu0 0
  %1312 = vmatmul.mubr.bf16.gmra.mrb[0].mxu0 %v1189
  %v1313 = vpop.f32.mrb[0].mxu0
  %v1314 = vadd.f32 0.0, %v1313
  %v1315 = vpop.f32.mrb[0].mxu0
  %v1316 = vpop.f32.mrb[0].mxu0
  %v1317 = vadd.f32 0.0, %v1316
  %v1318 = vpop.f32.mrb[0].mxu0
  %1319 = vmatprep.mubr.bf16.mxu0 0
  %1320 = vmatmul.mubr.bf16.gmra.mrb[0].mxu0 %v1192
  %v1321 = vpop.f32.mrb[0].mxu0
  %v1322 = vadd.f32 0.0, %v1321
  %v1323 = vpop.f32.mrb[0].mxu0
  %v1324 = vpop.f32.mrb[0].mxu0
  %v1325 = vadd.f32 0.0, %v1324
  %v1326 = vpop.f32.mrb[0].mxu0
  %1327 = vmatprep.mubr.bf16.mxu0 0
  %1328 = vmatmul.mubr.bf16.gmra.mrb[0].mxu0 %v1195
  %v1329 = vpop.f32.mrb[0].mxu0
  %v1330 = vadd.f32 0.0, %v1329
  %v1331 = vpop.f32.mrb[0].mxu0
  %v1332 = vpop.f32.mrb[0].mxu0
  %v1333 = vadd.f32 0.0, %v1332
  %v1334 = vpop.f32.mrb[0].mxu0
  %1335 = vmatprep.mubr.bf16.mxu0 0
  %1336 = vmatmul.mubr.bf16.gmra.mrb[0].mxu0 %v1198
  %v1337 = vpop.f32.mrb[0].mxu0
  %v1338 = vadd.f32 0.0, %v1337
  %v1339 = vpop.f32.mrb[0].mxu0
  %v1340 = vpop.f32.mrb[0].mxu0
  %v1341 = vadd.f32 0.0, %v1340
  %v1342 = vpop.f32.mrb[0].mxu0
  %1343 = vmatprep.mubr.bf16.mxu0 0
  %1344 = vmatmul.mubr.bf16.gmra.mrb[0].mxu0 %v1201
  %v1345 = vpop.f32.mrb[0].mxu0
  %v1346 = vadd.f32 0.0, %v1345
  %v1347 = vpop.f32.mrb[0].mxu0
  %v1348 = vpop.f32.mrb[0].mxu0
  %v1349 = vadd.f32 0.0, %v1348
  %v1350 = vpop.f32.mrb[0].mxu0
  %1351 = vmatprep.mubr.bf16.mxu0 0
  %1352 = vmatmul.mubr.bf16.gmra.mrb[0].mxu0 %v1204
  %v1353 = vpop.f32.mrb[0].mxu0
  %v1354 = vadd.f32 0.0, %v1353
  %v1355 = vpop.f32.mrb[0].mxu0
  %v1356 = vpop.f32.mrb[0].mxu0
  %v1357 = vadd.f32 0.0, %v1356
  %v1358 = vpop.f32.mrb[0].mxu0
  %1359 = vmatprep.mubr.bf16.mxu0 0
  %1360 = vmatmul.mubr.bf16.gmra.mrb[0].mxu0 %v1207
  %v1361 = vpop.f32.mrb[0].mxu0
  %v1362 = vadd.f32 0.0, %v1361
  %v1363 = vpop.f32.mrb[0].mxu0
  %v1364 = vpop.f32.mrb[0].mxu0
  %v1365 = vadd.f32 0.0, %v1364
  %v1366 = vpop.f32.mrb[0].mxu0
  %1367 = vmatprep.mubr.bf16.mxu0 0
  %1368 = vmatmul.mubr.bf16.gmra.mrb[0].mxu0 %v1210
  %v1369 = vpop.f32.mrb[0].mxu0
  %v1370 = vadd.f32 0.0, %v1369
  %v1371 = vpop.f32.mrb[0].mxu0
  %v1372 = vpop.f32.mrb[0].mxu0
  %v1373 = vadd.f32 0.0, %v1372
  %v1374 = vpop.f32.mrb[0].mxu0
  %1375 = vdwg.mxu0
  %v1376 = vadd.f32 %v1017, %v1250
  %v1377 = vadd.f32 %v1018, %v1253
  %v1378 = vadd.f32 %v1019, %v1258
  %v1379 = vadd.f32 %v1020, %v1261
  %v1380 = vadd.f32 %v1021, %v1266
  %v1381 = vadd.f32 %v1022, %v1269
  %v1382 = vadd.f32 %v1023, %v1274
  %v1383 = vadd.f32 %v1024, %v1277
  %v1384 = vadd.f32 %v1025, %v1282
  %v1385 = vadd.f32 %v1026, %v1285
  %v1386 = vadd.f32 %v1027, %v1290
  %v1387 = vadd.f32 %v1028, %v1293
  %v1388 = vadd.f32 %v1029, %v1298
  %v1389 = vadd.f32 %v1030, %v1301
  %v1390 = vadd.f32 %v1031, %v1306
  %v1391 = vadd.f32 %v1032, %v1309
  %v1392 = vadd.f32 %v1033, %v1314
  %v1393 = vadd.f32 %v1034, %v1317
  %v1394 = vadd.f32 %v1035, %v1322
  %v1395 = vadd.f32 %v1036, %v1325
  %v1396 = vadd.f32 %v1037, %v1330
  %v1397 = vadd.f32 %v1038, %v1333
  %v1398 = vadd.f32 %v1039, %v1338
  %v1399 = vadd.f32 %v1040, %v1341
  %v1400 = vadd.f32 %v1041, %v1346
  %v1401 = vadd.f32 %v1042, %v1349
  %v1402 = vadd.f32 %v1043, %v1354
  %v1403 = vadd.f32 %v1044, %v1357
  %v1404 = vadd.f32 %v1045, %v1362
  %v1405 = vadd.f32 %v1046, %v1365
  %v1406 = vadd.f32 %v1047, %v1370
  %v1407 = vadd.f32 %v1048, %v1373
  %s1408 = scalar_lea.vmem %s0, 16
  %v1409 = vld [vmem:[%s1408] sm:$0xf]
  %v1410 = vld [vmem:[%s1408 + $0x4] sm:$0xf]
  %v1411 = vld [vmem:[%s1408 + $0x8] sm:$0xf]
  %v1412 = vld [vmem:[%s1408 + $0xc] sm:$0xf]
  %v1413 = vld [vmem:[%s1408 + $0x10] sm:$0xf]
  %v1414 = vld [vmem:[%s1408 + $0x14] sm:$0xf]
  %v1415 = vld [vmem:[%s1408 + $0x18] sm:$0xf]
  %v1416 = vld [vmem:[%s1408 + $0x1c] sm:$0xf]
  %v1417 = vld [vmem:[%s1408 + $0x20] sm:$0xf]
  %v1418 = vld [vmem:[%s1408 + $0x24] sm:$0xf]
  %v1419 = vld [vmem:[%s1408 + $0x28] sm:$0xf]
  %v1420 = vld [vmem:[%s1408 + $0x2c] sm:$0xf]
  %v1421 = vld [vmem:[%s1408 + $0x30] sm:$0xf]
  %v1422 = vld [vmem:[%s1408 + $0x34] sm:$0xf]
  %v1423 = vld [vmem:[%s1408 + $0x38] sm:$0xf]
  %v1424 = vld [vmem:[%s1408 + $0x3c] sm:$0xf]
  %v1425 = vld [vmem:[%s1408 + $0x40] sm:$0xf]
  %v1426 = vld [vmem:[%s1408 + $0x44] sm:$0xf]
  %v1427 = vld [vmem:[%s1408 + $0x48] sm:$0xf]
  %v1428 = vld [vmem:[%s1408 + $0x4c] sm:$0xf]
  %v1429 = vld [vmem:[%s1408 + $0x50] sm:$0xf]
  %v1430 = vld [vmem:[%s1408 + $0x54] sm:$0xf]
  %v1431 = vld [vmem:[%s1408 + $0x58] sm:$0xf]
  %v1432 = vld [vmem:[%s1408 + $0x5c] sm:$0xf]
  %v1433 = vld [vmem:[%s1408 + $0x60] sm:$0xf]
  %v1434 = vld [vmem:[%s1408 + $0x64] sm:$0xf]
  %v1435 = vld [vmem:[%s1408 + $0x68] sm:$0xf]
  %v1436 = vld [vmem:[%s1408 + $0x6c] sm:$0xf]
  %v1437 = vld [vmem:[%s1408 + $0x70] sm:$0xf]
  %v1438 = vld [vmem:[%s1408 + $0x74] sm:$0xf]
  %v1439 = vld [vmem:[%s1408 + $0x78] sm:$0xf]
  %v1440 = vld [vmem:[%s1408 + $0x7c] sm:$0xf]
  %s1441 = scalar_lea.vmem %s1, 8
  %v1442 = vld [vmem:[%s1441] sm:$0x3]
  %v1475 = vunpack.c.l.b16 %v1409
  %v1476 = vunpack.c.l.b16 %v1410
  %v1477 = vunpack.c.l.b16 %v1411
  %v1478 = vunpack.c.l.b16 %v1412
  %v1479 = vunpack.c.l.b16 %v1413
  %v1480 = vunpack.c.l.b16 %v1414
  %v1481 = vunpack.c.l.b16 %v1415
  %v1482 = vunpack.c.l.b16 %v1416
  %v1483 = vunpack.c.l.b16 %v1417
  %v1484 = vunpack.c.l.b16 %v1418
  %v1485 = vunpack.c.l.b16 %v1419
  %v1486 = vunpack.c.l.b16 %v1420
  %v1487 = vunpack.c.l.b16 %v1421
  %v1488 = vunpack.c.l.b16 %v1422
  %v1489 = vunpack.c.l.b16 %v1423
  %v1490 = vunpack.c.l.b16 %v1424
  %v1491 = vunpack.c.l.b16 %v1425
  %v1492 = vunpack.c.l.b16 %v1426
  %v1493 = vunpack.c.l.b16 %v1427
  %v1494 = vunpack.c.l.b16 %v1428
  %v1495 = vunpack.c.l.b16 %v1429
  %v1496 = vunpack.c.l.b16 %v1430
  %v1497 = vunpack.c.l.b16 %v1431
  %v1498 = vunpack.c.l.b16 %v1432
  %v1499 = vunpack.c.l.b16 %v1433
  %v1500 = vunpack.c.l.b16 %v1434
  %v1501 = vunpack.c.l.b16 %v1435
  %v1502 = vunpack.c.l.b16 %v1436
  %v1503 = vunpack.c.l.b16 %v1437
  %v1504 = vunpack.c.l.b16 %v1438
  %v1505 = vunpack.c.l.b16 %v1439
  %v1506 = vunpack.c.l.b16 %v1440
  %v1507 = vpack.c.b16 %v1476, %v1475
  %v1508 = vpack.c.b16 %v1478, %v1477
  %v1509 = vpack.c.b16 %v1480, %v1479
  %v1510 = vpack.c.b16 %v1482, %v1481
  %v1511 = vpack.c.b16 %v1484, %v1483
  %v1512 = vpack.c.b16 %v1486, %v1485
  %v1513 = vpack.c.b16 %v1488, %v1487
  %v1514 = vpack.c.b16 %v1490, %v1489
  %v1515 = vpack.c.b16 %v1492, %v1491
  %v1516 = vpack.c.b16 %v1494, %v1493
  %v1517 = vpack.c.b16 %v1496, %v1495
  %v1518 = vpack.c.b16 %v1498, %v1497
  %v1519 = vpack.c.b16 %v1500, %v1499
  %v1520 = vpack.c.b16 %v1502, %v1501
  %v1521 = vpack.c.b16 %v1504, %v1503
  %v1522 = vpack.c.b16 %v1506, %v1505
  %v1524 = vsel %vm181, %v1507, 0
  %v1527 = vsel %vm181, %v1508, 0
  %v1530 = vsel %vm181, %v1509, 0
  %v1533 = vsel %vm181, %v1510, 0
  %v1536 = vsel %vm181, %v1511, 0
  %v1539 = vsel %vm181, %v1512, 0
  %v1542 = vsel %vm181, %v1513, 0
  %v1545 = vsel %vm181, %v1514, 0
  %v1548 = vsel %vm181, %v1515, 0
  %v1551 = vsel %vm181, %v1516, 0
  %v1554 = vsel %vm181, %v1517, 0
  %v1557 = vsel %vm181, %v1518, 0
  %v1560 = vsel %vm181, %v1519, 0
  %v1563 = vsel %vm181, %v1520, 0
  %v1566 = vsel %vm181, %v1521, 0
  %v1569 = vsel %vm181, %v1522, 0
  %v1572 = vand.u32 %v1442, %v233
  %1574 = vmatprep.subr.bf16.mxu0 0
  %1575 = vmatpush1.bf16.msra.mxu0 %v1572
  %1576 = vmatprep.subr.bf16.mxu0 0
  %1577 = vmatpush1.bf16.msra.mxu0 0
  %1578 = vmatprep.subr.bf16.mxu0 0
  %1579 = vmatpush1.bf16.msra.mxu0 0
  %1580 = vmatprep.subr.bf16.mxu0 0
  %1581 = vmatpush1.bf16.msra.mxu0 0
  %1582 = vmatprep.subr.bf16.mxu0 0
  %1583 = vmatpush1.bf16.msra.mxu0 0
  %1584 = vmatprep.subr.bf16.mxu0 0
  %1585 = vmatpush1.bf16.msra.mxu0 0
  %1586 = vmatprep.subr.bf16.mxu0 0
  %1587 = vmatpush1.bf16.msra.mxu0 0
  %1588 = vmatprep.subr.bf16.mxu0 0
  %1589 = vmatpush1.bf16.msra.mxu0 0
  %1590 = vmatprep.subr.bf16.mxu0 0
  %1591 = vmatpush1.bf16.msra.mxu0 0
  %1592 = vmatprep.subr.bf16.mxu0 0
  %1593 = vmatpush1.bf16.msra.mxu0 0
  %1594 = vmatprep.subr.bf16.mxu0 0
  %1595 = vmatpush1.bf16.msra.mxu0 0
  %1596 = vmatprep.subr.bf16.mxu0 0
  %1597 = vmatpush1.bf16.msra.mxu0 0
  %1598 = vmatprep.subr.bf16.mxu0 0
  %1599 = vmatpush1.bf16.msra.mxu0 0
  %1600 = vmatprep.subr.bf16.mxu0 0
  %1601 = vmatpush1.bf16.msra.mxu0 0
  %1602 = vmatprep.subr.bf16.mxu0 0
  %1603 = vmatpush1.bf16.msra.mxu0 0
  %1604 = vmatprep.subr.bf16.mxu0 0
  %1605 = vmatpush1.bf16.msra.mxu0 0
  %1606 = vmatprep.mubr.bf16.mxu0 0
  %1607 = vmatmul.mubr.bf16.gmra.mrb[0].mxu0 %v1524
  %v1608 = vpop.f32.mrb[0].mxu0
  %v1609 = vadd.f32 0.0, %v1608
  %v1610 = vpop.f32.mrb[0].mxu0
  %v1611 = vpop.f32.mrb[0].mxu0
  %v1612 = vadd.f32 0.0, %v1611
  %v1613 = vpop.f32.mrb[0].mxu0
  %1614 = vmatprep.mubr.bf16.mxu0 0
  %1615 = vmatmul.mubr.bf16.gmra.mrb[0].mxu0 %v1527
  %v1616 = vpop.f32.mrb[0].mxu0
  %v1617 = vadd.f32 0.0, %v1616
  %v1618 = vpop.f32.mrb[0].mxu0
  %v1619 = vpop.f32.mrb[0].mxu0
  %v1620 = vadd.f32 0.0, %v1619
  %v1621 = vpop.f32.mrb[0].mxu0
  %1622 = vmatprep.mubr.bf16.mxu0 0
  %1623 = vmatmul.mubr.bf16.gmra.mrb[0].mxu0 %v1530
  %v1624 = vpop.f32.mrb[0].mxu0
  %v1625 = vadd.f32 0.0, %v1624
  %v1626 = vpop.f32.mrb[0].mxu0
  %v1627 = vpop.f32.mrb[0].mxu0
  %v1628 = vadd.f32 0.0, %v1627
  %v1629 = vpop.f32.mrb[0].mxu0
  %1630 = vmatprep.mubr.bf16.mxu0 0
  %1631 = vmatmul.mubr.bf16.gmra.mrb[0].mxu0 %v1533
  %v1632 = vpop.f32.mrb[0].mxu0
  %v1633 = vadd.f32 0.0, %v1632
  %v1634 = vpop.f32.mrb[0].mxu0
  %v1635 = vpop.f32.mrb[0].mxu0
  %v1636 = vadd.f32 0.0, %v1635
  %v1637 = vpop.f32.mrb[0].mxu0
  %1638 = vmatprep.mubr.bf16.mxu0 0
  %1639 = vmatmul.mubr.bf16.gmra.mrb[0].mxu0 %v1536
  %v1640 = vpop.f32.mrb[0].mxu0
  %v1641 = vadd.f32 0.0, %v1640
  %v1642 = vpop.f32.mrb[0].mxu0
  %v1643 = vpop.f32.mrb[0].mxu0
  %v1644 = vadd.f32 0.0, %v1643
  %v1645 = vpop.f32.mrb[0].mxu0
  %1646 = vmatprep.mubr.bf16.mxu0 0
  %1647 = vmatmul.mubr.bf16.gmra.mrb[0].mxu0 %v1539
  %v1648 = vpop.f32.mrb[0].mxu0
  %v1649 = vadd.f32 0.0, %v1648
  %v1650 = vpop.f32.mrb[0].mxu0
  %v1651 = vpop.f32.mrb[0].mxu0
  %v1652 = vadd.f32 0.0, %v1651
  %v1653 = vpop.f32.mrb[0].mxu0
  %1654 = vmatprep.mubr.bf16.mxu0 0
  %1655 = vmatmul.mubr.bf16.gmra.mrb[0].mxu0 %v1542
  %v1656 = vpop.f32.mrb[0].mxu0
  %v1657 = vadd.f32 0.0, %v1656
  %v1658 = vpop.f32.mrb[0].mxu0
  %v1659 = vpop.f32.mrb[0].mxu0
  %v1660 = vadd.f32 0.0, %v1659
  %v1661 = vpop.f32.mrb[0].mxu0
  %1662 = vmatprep.mubr.bf16.mxu0 0
  %1663 = vmatmul.mubr.bf16.gmra.mrb[0].mxu0 %v1545
  %v1664 = vpop.f32.mrb[0].mxu0
  %v1665 = vadd.f32 0.0, %v1664
  %v1666 = vpop.f32.mrb[0].mxu0
  %v1667 = vpop.f32.mrb[0].mxu0
  %v1668 = vadd.f32 0.0, %v1667
  %v1669 = vpop.f32.mrb[0].mxu0
  %1670 = vmatprep.mubr.bf16.mxu0 0
  %1671 = vmatmul.mubr.bf16.gmra.mrb[0].mxu0 %v1548
  %v1672 = vpop.f32.mrb[0].mxu0
  %v1673 = vadd.f32 0.0, %v1672
  %v1674 = vpop.f32.mrb[0].mxu0
  %v1675 = vpop.f32.mrb[0].mxu0
  %v1676 = vadd.f32 0.0, %v1675
  %v1677 = vpop.f32.mrb[0].mxu0
  %1678 = vmatprep.mubr.bf16.mxu0 0
  %1679 = vmatmul.mubr.bf16.gmra.mrb[0].mxu0 %v1551
  %v1680 = vpop.f32.mrb[0].mxu0
  %v1681 = vadd.f32 0.0, %v1680
  %v1682 = vpop.f32.mrb[0].mxu0
  %v1683 = vpop.f32.mrb[0].mxu0
  %v1684 = vadd.f32 0.0, %v1683
  %v1685 = vpop.f32.mrb[0].mxu0
  %1686 = vmatprep.mubr.bf16.mxu0 0
  %1687 = vmatmul.mubr.bf16.gmra.mrb[0].mxu0 %v1554
  %v1688 = vpop.f32.mrb[0].mxu0
  %v1689 = vadd.f32 0.0, %v1688
  %v1690 = vpop.f32.mrb[0].mxu0
  %v1691 = vpop.f32.mrb[0].mxu0
  %v1692 = vadd.f32 0.0, %v1691
  %v1693 = vpop.f32.mrb[0].mxu0
  %1694 = vmatprep.mubr.bf16.mxu0 0
  %1695 = vmatmul.mubr.bf16.gmra.mrb[0].mxu0 %v1557
  %v1696 = vpop.f32.mrb[0].mxu0
  %v1697 = vadd.f32 0.0, %v1696
  %v1698 = vpop.f32.mrb[0].mxu0
  %v1699 = vpop.f32.mrb[0].mxu0
  %v1700 = vadd.f32 0.0, %v1699
  %v1701 = vpop.f32.mrb[0].mxu0
  %1702 = vmatprep.mubr.bf16.mxu0 0
  %1703 = vmatmul.mubr.bf16.gmra.mrb[0].mxu0 %v1560
  %v1704 = vpop.f32.mrb[0].mxu0
  %v1705 = vadd.f32 0.0, %v1704
  %v1706 = vpop.f32.mrb[0].mxu0
  %v1707 = vpop.f32.mrb[0].mxu0
  %v1708 = vadd.f32 0.0, %v1707
  %v1709 = vpop.f32.mrb[0].mxu0
  %1710 = vmatprep.mubr.bf16.mxu0 0
  %1711 = vmatmul.mubr.bf16.gmra.mrb[0].mxu0 %v1563
  %v1712 = vpop.f32.mrb[0].mxu0
  %v1713 = vadd.f32 0.0, %v1712
  %v1714 = vpop.f32.mrb[0].mxu0
  %v1715 = vpop.f32.mrb[0].mxu0
  %v1716 = vadd.f32 0.0, %v1715
  %v1717 = vpop.f32.mrb[0].mxu0
  %1718 = vmatprep.mubr.bf16.mxu0 0
  %1719 = vmatmul.mubr.bf16.gmra.mrb[0].mxu0 %v1566
  %v1720 = vpop.f32.mrb[0].mxu0
  %v1721 = vadd.f32 0.0, %v1720
  %v1722 = vpop.f32.mrb[0].mxu0
  %v1723 = vpop.f32.mrb[0].mxu0
  %v1724 = vadd.f32 0.0, %v1723
  %v1725 = vpop.f32.mrb[0].mxu0
  %1726 = vmatprep.mubr.bf16.mxu0 0
  %1727 = vmatmul.mubr.bf16.gmra.mrb[0].mxu0 %v1569
  %v1728 = vpop.f32.mrb[0].mxu0
  %v1729 = vadd.f32 0.0, %v1728
  %v1730 = vpop.f32.mrb[0].mxu0
  %v1731 = vpop.f32.mrb[0].mxu0
  %v1732 = vadd.f32 0.0, %v1731
  %v1733 = vpop.f32.mrb[0].mxu0
  %1734 = vdwg.mxu0
  %v1735 = vadd.f32 %v1376, %v1609
  %v1736 = vadd.f32 %v1377, %v1612
  %v1737 = vadd.f32 %v1378, %v1617
  %v1738 = vadd.f32 %v1379, %v1620
  %v1739 = vadd.f32 %v1380, %v1625
  %v1740 = vadd.f32 %v1381, %v1628
  %v1741 = vadd.f32 %v1382, %v1633
  %v1742 = vadd.f32 %v1383, %v1636
  %v1743 = vadd.f32 %v1384, %v1641
  %v1744 = vadd.f32 %v1385, %v1644
  %v1745 = vadd.f32 %v1386, %v1649
  %v1746 = vadd.f32 %v1387, %v1652
  %v1747 = vadd.f32 %v1388, %v1657
  %v1748 = vadd.f32 %v1389, %v1660
  %v1749 = vadd.f32 %v1390, %v1665
  %v1750 = vadd.f32 %v1391, %v1668
  %v1751 = vadd.f32 %v1392, %v1673
  %v1752 = vadd.f32 %v1393, %v1676
  %v1753 = vadd.f32 %v1394, %v1681
  %v1754 = vadd.f32 %v1395, %v1684
  %v1755 = vadd.f32 %v1396, %v1689
  %v1756 = vadd.f32 %v1397, %v1692
  %v1757 = vadd.f32 %v1398, %v1697
  %v1758 = vadd.f32 %v1399, %v1700
  %v1759 = vadd.f32 %v1400, %v1705
  %v1760 = vadd.f32 %v1401, %v1708
  %v1761 = vadd.f32 %v1402, %v1713
  %v1762 = vadd.f32 %v1403, %v1716
  %v1763 = vadd.f32 %v1404, %v1721
  %v1764 = vadd.f32 %v1405, %v1724
  %v1765 = vadd.f32 %v1406, %v1729
  %v1766 = vadd.f32 %v1407, %v1732
  %v1767 = vld [vmem:[%s2] sm:$0x1]
  %v1769 = vlaneseq
  %v1770 = vshrl.u32 %v1769, 7
  %v1771 = vsub.s32 0, %v1770
  %v1772 = vrot.slane %v1767, %v1771
  %v1774 = vadd.f32 %v1735, %v1772
  %v1775 = vadd.f32 %v1736, %v1772
  %v1776 = vadd.f32 %v1737, %v1772
  %v1777 = vadd.f32 %v1738, %v1772
  %v1778 = vadd.f32 %v1739, %v1772
  %v1779 = vadd.f32 %v1740, %v1772
  %v1780 = vadd.f32 %v1741, %v1772
  %v1781 = vadd.f32 %v1742, %v1772
  %v1782 = vadd.f32 %v1743, %v1772
  %v1783 = vadd.f32 %v1744, %v1772
  %v1784 = vadd.f32 %v1745, %v1772
  %v1785 = vadd.f32 %v1746, %v1772
  %v1786 = vadd.f32 %v1747, %v1772
  %v1787 = vadd.f32 %v1748, %v1772
  %v1788 = vadd.f32 %v1749, %v1772
  %v1789 = vadd.f32 %v1750, %v1772
  %v1790 = vadd.f32 %v1751, %v1772
  %v1791 = vadd.f32 %v1752, %v1772
  %v1792 = vadd.f32 %v1753, %v1772
  %v1793 = vadd.f32 %v1754, %v1772
  %v1794 = vadd.f32 %v1755, %v1772
  %v1795 = vadd.f32 %v1756, %v1772
  %v1796 = vadd.f32 %v1757, %v1772
  %v1797 = vadd.f32 %v1758, %v1772
  %v1798 = vadd.f32 %v1759, %v1772
  %v1799 = vadd.f32 %v1760, %v1772
  %v1800 = vadd.f32 %v1761, %v1772
  %v1801 = vadd.f32 %v1762, %v1772
  %v1802 = vadd.f32 %v1763, %v1772
  %v1803 = vadd.f32 %v1764, %v1772
  %v1804 = vadd.f32 %v1765, %v1772
  %v1805 = vadd.f32 %v1766, %v1772
  %v1806 = vmax.f32 %v1774, 0.0
  %v1807 = vmax.f32 %v1775, 0.0
  %v1808 = vmax.f32 %v1776, 0.0
  %v1809 = vmax.f32 %v1777, 0.0
  %v1810 = vmax.f32 %v1778, 0.0
  %v1811 = vmax.f32 %v1779, 0.0
  %v1812 = vmax.f32 %v1780, 0.0
  %v1813 = vmax.f32 %v1781, 0.0
  %v1814 = vmax.f32 %v1782, 0.0
  %v1815 = vmax.f32 %v1783, 0.0
  %v1816 = vmax.f32 %v1784, 0.0
  %v1817 = vmax.f32 %v1785, 0.0
  %v1818 = vmax.f32 %v1786, 0.0
  %v1819 = vmax.f32 %v1787, 0.0
  %v1820 = vmax.f32 %v1788, 0.0
  %v1821 = vmax.f32 %v1789, 0.0
  %v1822 = vmax.f32 %v1790, 0.0
  %v1823 = vmax.f32 %v1791, 0.0
  %v1824 = vmax.f32 %v1792, 0.0
  %v1825 = vmax.f32 %v1793, 0.0
  %v1826 = vmax.f32 %v1794, 0.0
  %v1827 = vmax.f32 %v1795, 0.0
  %v1828 = vmax.f32 %v1796, 0.0
  %v1829 = vmax.f32 %v1797, 0.0
  %v1830 = vmax.f32 %v1798, 0.0
  %v1831 = vmax.f32 %v1799, 0.0
  %v1832 = vmax.f32 %v1800, 0.0
  %v1833 = vmax.f32 %v1801, 0.0
  %v1834 = vmax.f32 %v1802, 0.0
  %v1835 = vmax.f32 %v1803, 0.0
  %v1836 = vmax.f32 %v1804, 0.0
  %v1837 = vmax.f32 %v1805, 0.0
  %v1838 = vmax.f32 %v1806, %v1807
  %v1839 = vmax.f32 %v1808, %v1809
  %v1840 = vmax.f32 %v1810, %v1811
  %v1841 = vmax.f32 %v1812, %v1813
  %v1842 = vmax.f32 %v1814, %v1815
  %v1843 = vmax.f32 %v1816, %v1817
  %v1844 = vmax.f32 %v1818, %v1819
  %v1845 = vmax.f32 %v1820, %v1821
  %v1846 = vmax.f32 %v1822, %v1823
  %v1847 = vmax.f32 %v1824, %v1825
  %v1848 = vmax.f32 %v1826, %v1827
  %v1849 = vmax.f32 %v1828, %v1829
  %v1850 = vmax.f32 %v1830, %v1831
  %v1851 = vmax.f32 %v1832, %v1833
  %v1852 = vmax.f32 %v1834, %v1835
  %v1853 = vmax.f32 %v1836, %v1837
  %vm1854 = vcmask 257024
  %1855 = vst.msk [vmem:[#allocation2] sm:$0xf] %vm1854, 0
  %1856 = vst.msk [vmem:[#allocation2 + $0x4] sm:$0xf] %vm1854, 0
  %s1857 = scalar_lea.vmem [#allocation2], 72
  %1858 = vst.msk [vmem:[%s1857] sm:$0xf] %vm1854, 0
  %1859 = vst.msk [vmem:[%s1857 + $0x4] sm:$0xf] %vm1854, 0
  %v1860 = vpack.c.bf16 %v1838, %v1838
  %v1861 = vpack.c.bf16 %v1839, %v1839
  %v1862 = vpack.c.bf16 %v1840, %v1840
  %v1863 = vpack.c.bf16 %v1841, %v1841
  %v1864 = vpack.c.bf16 %v1842, %v1842
  %v1865 = vpack.c.bf16 %v1843, %v1843
  %v1866 = vpack.c.bf16 %v1844, %v1844
  %v1867 = vpack.c.bf16 %v1845, %v1845
  %v1868 = vpack.c.bf16 %v1846, %v1846
  %v1869 = vpack.c.bf16 %v1847, %v1847
  %v1870 = vpack.c.bf16 %v1848, %v1848
  %v1871 = vpack.c.bf16 %v1849, %v1849
  %v1872 = vpack.c.bf16 %v1850, %v1850
  %v1873 = vpack.c.bf16 %v1851, %v1851
  %v1874 = vpack.c.bf16 %v1852, %v1852
  %v1875 = vpack.c.bf16 %v1853, %v1853
  %s1876 = scalar_lea.vmem [#allocation2], 8
  %1877 = vst.msk [vmem:[%s1876] sm:$0xf] %vm1854, %v1860
  %1878 = vst.msk [vmem:[%s1876 + $0x4] sm:$0xf] %vm1854, %v1861
  %1879 = vst.msk [vmem:[%s1876 + $0x8] sm:$0xf] %vm1854, %v1862
  %1880 = vst.msk [vmem:[%s1876 + $0xc] sm:$0xf] %vm1854, %v1863
  %1881 = vst.msk [vmem:[%s1876 + $0x10] sm:$0xf] %vm1854, %v1864
  %1882 = vst.msk [vmem:[%s1876 + $0x14] sm:$0xf] %vm1854, %v1865
  %1883 = vst.msk [vmem:[%s1876 + $0x18] sm:$0xf] %vm1854, %v1866
  %1884 = vst.msk [vmem:[%s1876 + $0x1c] sm:$0xf] %vm1854, %v1867
  %1885 = vst.msk [vmem:[%s1876 + $0x20] sm:$0xf] %vm1854, %v1868
  %1886 = vst.msk [vmem:[%s1876 + $0x24] sm:$0xf] %vm1854, %v1869
  %1887 = vst.msk [vmem:[%s1876 + $0x28] sm:$0xf] %vm1854, %v1870
  %1888 = vst.msk [vmem:[%s1876 + $0x2c] sm:$0xf] %vm1854, %v1871
  %1889 = vst.msk [vmem:[%s1876 + $0x30] sm:$0xf] %vm1854, %v1872
  %1890 = vst.msk [vmem:[%s1876 + $0x34] sm:$0xf] %vm1854, %v1873
  %1891 = vst.msk [vmem:[%s1876 + $0x38] sm:$0xf] %vm1854, %v1874
  %1892 = vst.msk [vmem:[%s1876 + $0x3c] sm:$0xf] %vm1854, %v1875
  %v1893 = vld [vmem:[#allocation2] sm:$0xf]
  %v1894 = vld [vmem:[#allocation2 + $0x4] sm:$0xf]
  %v1895 = vld [vmem:[#allocation2 + $0x8] sm:$0xf]
  %v1896 = vld [vmem:[#allocation2 + $0xc] sm:$0xf]
  %v1897 = vld [vmem:[#allocation2 + $0x10] sm:$0xf]
  %v1898 = vld [vmem:[#allocation2 + $0x14] sm:$0xf]
  %v1899 = vld [vmem:[#allocation2 + $0x18] sm:$0xf]
  %v1900 = vld [vmem:[#allocation2 + $0x1c] sm:$0xf]
  %v1901 = vld [vmem:[#allocation2 + $0x20] sm:$0xf]
  %v1902 = vld [vmem:[#allocation2 + $0x24] sm:$0xf]
  %v1903 = vld [vmem:[#allocation2 + $0x28] sm:$0xf]
  %v1904 = vld [vmem:[#allocation2 + $0x2c] sm:$0xf]
  %v1905 = vld [vmem:[#allocation2 + $0x30] sm:$0xf]
  %v1906 = vld [vmem:[#allocation2 + $0x34] sm:$0xf]
  %v1907 = vld [vmem:[#allocation2 + $0x38] sm:$0xf]
  %v1908 = vld [vmem:[#allocation2 + $0x3c] sm:$0xf]
  %v1909 = vld [vmem:[%s3] sm:$0xf]
  %v1910 = vld [vmem:[%s3 + $0x4] sm:$0xf]
  %v1911 = vld [vmem:[%s3 + $0x8] sm:$0xf]
  %v1912 = vld [vmem:[%s3 + $0xc] sm:$0xf]
  %s1913 = scalar_lea.vmem [#allocation2], 4
  %v1914 = vld [vmem:[%s1913] sm:$0xf]
  %v1915 = vld [vmem:[%s1913 + $0x4] sm:$0xf]
  %v1916 = vld [vmem:[%s1913 + $0x8] sm:$0xf]
  %v1917 = vld [vmem:[%s1913 + $0xc] sm:$0xf]
  %v1918 = vld [vmem:[%s1913 + $0x10] sm:$0xf]
  %v1919 = vld [vmem:[%s1913 + $0x14] sm:$0xf]
  %v1920 = vld [vmem:[%s1913 + $0x18] sm:$0xf]
  %v1921 = vld [vmem:[%s1913 + $0x1c] sm:$0xf]
  %v1922 = vld [vmem:[%s1913 + $0x20] sm:$0xf]
  %v1923 = vld [vmem:[%s1913 + $0x24] sm:$0xf]
  %v1924 = vld [vmem:[%s1913 + $0x28] sm:$0xf]
  %v1925 = vld [vmem:[%s1913 + $0x2c] sm:$0xf]
  %v1926 = vld [vmem:[%s1913 + $0x30] sm:$0xf]
  %v1927 = vld [vmem:[%s1913 + $0x34] sm:$0xf]
  %v1928 = vld [vmem:[%s1913 + $0x38] sm:$0xf]
  %v1929 = vld [vmem:[%s1913 + $0x3c] sm:$0xf]
  %s1930 = scalar_lea.vmem %s3, 16
  %v1931 = vld [vmem:[%s1930] sm:$0xf]
  %v1932 = vld [vmem:[%s1930 + $0x4] sm:$0xf]
  %v1933 = vld [vmem:[%s1930 + $0x8] sm:$0xf]
  %v1934 = vld [vmem:[%s1930 + $0xc] sm:$0xf]
  %v1951 = vunpack.c.l.b16 %v1914
  %v1952 = vunpack.c.l.b16 %v1915
  %v1953 = vunpack.c.l.b16 %v1916
  %v1954 = vunpack.c.l.b16 %v1917
  %v1955 = vunpack.c.l.b16 %v1918
  %v1956 = vunpack.c.l.b16 %v1919
  %v1957 = vunpack.c.l.b16 %v1920
  %v1958 = vunpack.c.l.b16 %v1921
  %v1959 = vunpack.c.l.b16 %v1922
  %v1960 = vunpack.c.l.b16 %v1923
  %v1961 = vunpack.c.l.b16 %v1924
  %v1962 = vunpack.c.l.b16 %v1925
  %v1963 = vunpack.c.l.b16 %v1926
  %v1964 = vunpack.c.l.b16 %v1927
  %v1965 = vunpack.c.l.b16 %v1928
  %v1966 = vunpack.c.l.b16 %v1929
  %v1967 = vpack.c.b16 %v1952, %v1951
  %v1968 = vpack.c.b16 %v1954, %v1953
  %v1969 = vpack.c.b16 %v1956, %v1955
  %v1970 = vpack.c.b16 %v1958, %v1957
  %v1971 = vpack.c.b16 %v1960, %v1959
  %v1972 = vpack.c.b16 %v1962, %v1961
  %v1973 = vpack.c.b16 %v1964, %v1963
  %v1974 = vpack.c.b16 %v1966, %v1965
  %v1979 = vunpack.c.l.b16 %v1931
  %v1980 = vunpack.c.l.b16 %v1932
  %v1981 = vunpack.c.l.b16 %v1933
  %v1982 = vunpack.c.l.b16 %v1934
  %v1983 = vpack.c.b16 %v1980, %v1979
  %v1984 = vpack.c.b16 %v1982, %v1981
  %vm1987 = vcmask 261120
  %v1989 = vsel %vm1987, %v1967, 0
  %v1992 = vsel %vm1987, %v1968, 0
  %v1995 = vsel %vm1987, %v1969, 0
  %v1998 = vsel %vm1987, %v1970, 0
  %v2001 = vsel %vm1987, %v1971, 0
  %v2004 = vsel %vm1987, %v1972, 0
  %v2007 = vsel %vm1987, %v1973, 0
  %v2010 = vsel %vm1987, %v1974, 0
  %2012 = vmatprep.subr.bf16.mxu0 0
  %2013 = vmatpush1.bf16.msra.mxu0 %v1983
  %2014 = vmatprep.subr.bf16.mxu0 0
  %2015 = vmatpush1.bf16.msra.mxu0 %v1984
  %2016 = vmatprep.subr.bf16.mxu0 0
  %2017 = vmatpush1.bf16.msra.mxu0 0
  %2018 = vmatprep.subr.bf16.mxu0 0
  %2019 = vmatpush1.bf16.msra.mxu0 0
  %2020 = vmatprep.subr.bf16.mxu0 0
  %2021 = vmatpush1.bf16.msra.mxu0 0
  %2022 = vmatprep.subr.bf16.mxu0 0
  %2023 = vmatpush1.bf16.msra.mxu0 0
  %2024 = vmatprep.subr.bf16.mxu0 0
  %2025 = vmatpush1.bf16.msra.mxu0 0
  %2026 = vmatprep.subr.bf16.mxu0 0
  %2027 = vmatpush1.bf16.msra.mxu0 0
  %2028 = vmatprep.subr.bf16.mxu0 0
  %2029 = vmatpush1.bf16.msra.mxu0 0
  %2030 = vmatprep.subr.bf16.mxu0 0
  %2031 = vmatpush1.bf16.msra.mxu0 0
  %2032 = vmatprep.subr.bf16.mxu0 0
  %2033 = vmatpush1.bf16.msra.mxu0 0
  %2034 = vmatprep.subr.bf16.mxu0 0
  %2035 = vmatpush1.bf16.msra.mxu0 0
  %2036 = vmatprep.subr.bf16.mxu0 0
  %2037 = vmatpush1.bf16.msra.mxu0 0
  %2038 = vmatprep.subr.bf16.mxu0 0
  %2039 = vmatpush1.bf16.msra.mxu0 0
  %2040 = vmatprep.subr.bf16.mxu0 0
  %2041 = vmatpush1.bf16.msra.mxu0 0
  %2042 = vmatprep.subr.bf16.mxu0 0
  %2043 = vmatpush1.bf16.msra.mxu0 0
  %2044 = vmatprep.mubr.bf16.mxu0 0
  %2045 = vmatmul.mubr.bf16.gmra.mrb[0].mxu0 %v1989
  %v2046 = vpop.f32.mrb[0].mxu0
  %v2047 = vadd.f32 0.0, %v2046
  %v2048 = vpop.f32.mrb[0].mxu0
  %v2049 = vpop.f32.mrb[0].mxu0
  %v2050 = vadd.f32 0.0, %v2049
  %v2051 = vpop.f32.mrb[0].mxu0
  %2052 = vmatprep.mubr.bf16.mxu0 0
  %2053 = vmatmul.mubr.bf16.gmra.mrb[0].mxu0 %v1992
  %v2054 = vpop.f32.mrb[0].mxu0
  %v2055 = vadd.f32 0.0, %v2054
  %v2056 = vpop.f32.mrb[0].mxu0
  %v2057 = vpop.f32.mrb[0].mxu0
  %v2058 = vadd.f32 0.0, %v2057
  %v2059 = vpop.f32.mrb[0].mxu0
  %2060 = vmatprep.mubr.bf16.mxu0 0
  %2061 = vmatmul.mubr.bf16.gmra.mrb[0].mxu0 %v1995
  %v2062 = vpop.f32.mrb[0].mxu0
  %v2063 = vadd.f32 0.0, %v2062
  %v2064 = vpop.f32.mrb[0].mxu0
  %v2065 = vpop.f32.mrb[0].mxu0
  %v2066 = vadd.f32 0.0, %v2065
  %v2067 = vpop.f32.mrb[0].mxu0
  %2068 = vmatprep.mubr.bf16.mxu0 0
  %2069 = vmatmul.mubr.bf16.gmra.mrb[0].mxu0 %v1998
  %v2070 = vpop.f32.mrb[0].mxu0
  %v2071 = vadd.f32 0.0, %v2070
  %v2072 = vpop.f32.mrb[0].mxu0
  %v2073 = vpop.f32.mrb[0].mxu0
  %v2074 = vadd.f32 0.0, %v2073
  %v2075 = vpop.f32.mrb[0].mxu0
  %2076 = vmatprep.mubr.bf16.mxu0 0
  %2077 = vmatmul.mubr.bf16.gmra.mrb[0].mxu0 %v2001
  %v2078 = vpop.f32.mrb[0].mxu0
  %v2079 = vadd.f32 0.0, %v2078
  %v2080 = vpop.f32.mrb[0].mxu0
  %v2081 = vpop.f32.mrb[0].mxu0
  %v2082 = vadd.f32 0.0, %v2081
  %v2083 = vpop.f32.mrb[0].mxu0
  %2084 = vmatprep.mubr.bf16.mxu0 0
  %2085 = vmatmul.mubr.bf16.gmra.mrb[0].mxu0 %v2004
  %v2086 = vpop.f32.mrb[0].mxu0
  %v2087 = vadd.f32 0.0, %v2086
  %v2088 = vpop.f32.mrb[0].mxu0
  %v2089 = vpop.f32.mrb[0].mxu0
  %v2090 = vadd.f32 0.0, %v2089
  %v2091 = vpop.f32.mrb[0].mxu0
  %2092 = vmatprep.mubr.bf16.mxu0 0
  %2093 = vmatmul.mubr.bf16.gmra.mrb[0].mxu0 %v2007
  %v2094 = vpop.f32.mrb[0].mxu0
  %v2095 = vadd.f32 0.0, %v2094
  %v2096 = vpop.f32.mrb[0].mxu0
  %v2097 = vpop.f32.mrb[0].mxu0
  %v2098 = vadd.f32 0.0, %v2097
  %v2099 = vpop.f32.mrb[0].mxu0
  %2100 = vmatprep.mubr.bf16.mxu0 0
  %2101 = vmatmul.mubr.bf16.gmra.mrb[0].mxu0 %v2010
  %v2102 = vpop.f32.mrb[0].mxu0
  %v2103 = vadd.f32 0.0, %v2102
  %v2104 = vpop.f32.mrb[0].mxu0
  %v2105 = vpop.f32.mrb[0].mxu0
  %v2106 = vadd.f32 0.0, %v2105
  %v2107 = vpop.f32.mrb[0].mxu0
  %2108 = vdwg.mxu0
  %v2125 = vunpack.c.l.b16 %v1893
  %v2126 = vunpack.c.l.b16 %v1894
  %v2127 = vunpack.c.l.b16 %v1895
  %v2128 = vunpack.c.l.b16 %v1896
  %v2129 = vunpack.c.l.b16 %v1897
  %v2130 = vunpack.c.l.b16 %v1898
  %v2131 = vunpack.c.l.b16 %v1899
  %v2132 = vunpack.c.l.b16 %v1900
  %v2133 = vunpack.c.l.b16 %v1901
  %v2134 = vunpack.c.l.b16 %v1902
  %v2135 = vunpack.c.l.b16 %v1903
  %v2136 = vunpack.c.l.b16 %v1904
  %v2137 = vunpack.c.l.b16 %v1905
  %v2138 = vunpack.c.l.b16 %v1906
  %v2139 = vunpack.c.l.b16 %v1907
  %v2140 = vunpack.c.l.b16 %v1908
  %v2141 = vpack.c.b16 %v2126, %v2125
  %v2142 = vpack.c.b16 %v2128, %v2127
  %v2143 = vpack.c.b16 %v2130, %v2129
  %v2144 = vpack.c.b16 %v2132, %v2131
  %v2145 = vpack.c.b16 %v2134, %v2133
  %v2146 = vpack.c.b16 %v2136, %v2135
  %v2147 = vpack.c.b16 %v2138, %v2137
  %v2148 = vpack.c.b16 %v2140, %v2139
  %v2153 = vunpack.c.l.b16 %v1909
  %v2154 = vunpack.c.l.b16 %v1910
  %v2155 = vunpack.c.l.b16 %v1911
  %v2156 = vunpack.c.l.b16 %v1912
  %v2157 = vpack.c.b16 %v2154, %v2153
  %v2158 = vpack.c.b16 %v2156, %v2155
  %v2162 = vsel %vm1987, %v2141, 0
  %v2165 = vsel %vm1987, %v2142, 0
  %v2168 = vsel %vm1987, %v2143, 0
  %v2171 = vsel %vm1987, %v2144, 0
  %v2174 = vsel %vm1987, %v2145, 0
  %v2177 = vsel %vm1987, %v2146, 0
  %v2180 = vsel %vm1987, %v2147, 0
  %v2183 = vsel %vm1987, %v2148, 0
  %2185 = vmatprep.subr.bf16.mxu0 0
  %2186 = vmatpush1.bf16.msra.mxu0 %v2157
  %2187 = vmatprep.subr.bf16.mxu0 0
  %2188 = vmatpush1.bf16.msra.mxu0 %v2158
  %2189 = vmatprep.subr.bf16.mxu0 0
  %2190 = vmatpush1.bf16.msra.mxu0 0
  %2191 = vmatprep.subr.bf16.mxu0 0
  %2192 = vmatpush1.bf16.msra.mxu0 0
  %2193 = vmatprep.subr.bf16.mxu0 0
  %2194 = vmatpush1.bf16.msra.mxu0 0
  %2195 = vmatprep.subr.bf16.mxu0 0
  %2196 = vmatpush1.bf16.msra.mxu0 0
  %2197 = vmatprep.subr.bf16.mxu0 0
  %2198 = vmatpush1.bf16.msra.mxu0 0
  %2199 = vmatprep.subr.bf16.mxu0 0
  %2200 = vmatpush1.bf16.msra.mxu0 0
  %2201 = vmatprep.subr.bf16.mxu0 0
  %2202 = vmatpush1.bf16.msra.mxu0 0
  %2203 = vmatprep.subr.bf16.mxu0 0
  %2204 = vmatpush1.bf16.msra.mxu0 0
  %2205 = vmatprep.subr.bf16.mxu0 0
  %2206 = vmatpush1.bf16.msra.mxu0 0
  %2207 = vmatprep.subr.bf16.mxu0 0
  %2208 = vmatpush1.bf16.msra.mxu0 0
  %2209 = vmatprep.subr.bf16.mxu0 0
  %2210 = vmatpush1.bf16.msra.mxu0 0
  %2211 = vmatprep.subr.bf16.mxu0 0
  %2212 = vmatpush1.bf16.msra.mxu0 0
  %2213 = vmatprep.subr.bf16.mxu0 0
  %2214 = vmatpush1.bf16.msra.mxu0 0
  %2215 = vmatprep.subr.bf16.mxu0 0
  %2216 = vmatpush1.bf16.msra.mxu0 0
  %2217 = vmatprep.mubr.bf16.mxu0 0
  %2218 = vmatmul.mubr.bf16.gmra.mrb[0].mxu0 %v2162
  %v2219 = vpop.f32.mrb[0].mxu0
  %v2220 = vadd.f32 %v2047, %v2219
  %v2221 = vpop.f32.mrb[0].mxu0
  %v2222 = vpop.f32.mrb[0].mxu0
  %v2223 = vadd.f32 %v2050, %v2222
  %v2224 = vpop.f32.mrb[0].mxu0
  %2225 = vmatprep.mubr.bf16.mxu0 0
  %2226 = vmatmul.mubr.bf16.gmra.mrb[0].mxu0 %v2165
  %v2227 = vpop.f32.mrb[0].mxu0
  %v2228 = vadd.f32 %v2055, %v2227
  %v2229 = vpop.f32.mrb[0].mxu0
  %v2230 = vpop.f32.mrb[0].mxu0
  %v2231 = vadd.f32 %v2058, %v2230
  %v2232 = vpop.f32.mrb[0].mxu0
  %2233 = vmatprep.mubr.bf16.mxu0 0
  %2234 = vmatmul.mubr.bf16.gmra.mrb[0].mxu0 %v2168
  %v2235 = vpop.f32.mrb[0].mxu0
  %v2236 = vadd.f32 %v2063, %v2235
  %v2237 = vpop.f32.mrb[0].mxu0
  %v2238 = vpop.f32.mrb[0].mxu0
  %v2239 = vadd.f32 %v2066, %v2238
  %v2240 = vpop.f32.mrb[0].mxu0
  %2241 = vmatprep.mubr.bf16.mxu0 0
  %2242 = vmatmul.mubr.bf16.gmra.mrb[0].mxu0 %v2171
  %v2243 = vpop.f32.mrb[0].mxu0
  %v2244 = vadd.f32 %v2071, %v2243
  %v2245 = vpop.f32.mrb[0].mxu0
  %v2246 = vpop.f32.mrb[0].mxu0
  %v2247 = vadd.f32 %v2074, %v2246
  %v2248 = vpop.f32.mrb[0].mxu0
  %2249 = vmatprep.mubr.bf16.mxu0 0
  %2250 = vmatmul.mubr.bf16.gmra.mrb[0].mxu0 %v2174
  %v2251 = vpop.f32.mrb[0].mxu0
  %v2252 = vadd.f32 %v2079, %v2251
  %v2253 = vpop.f32.mrb[0].mxu0
  %v2254 = vpop.f32.mrb[0].mxu0
  %v2255 = vadd.f32 %v2082, %v2254
  %v2256 = vpop.f32.mrb[0].mxu0
  %2257 = vmatprep.mubr.bf16.mxu0 0
  %2258 = vmatmul.mubr.bf16.gmra.mrb[0].mxu0 %v2177
  %v2259 = vpop.f32.mrb[0].mxu0
  %v2260 = vadd.f32 %v2087, %v2259
  %v2261 = vpop.f32.mrb[0].mxu0
  %v2262 = vpop.f32.mrb[0].mxu0
  %v2263 = vadd.f32 %v2090, %v2262
  %v2264 = vpop.f32.mrb[0].mxu0
  %2265 = vmatprep.mubr.bf16.mxu0 0
  %2266 = vmatmul.mubr.bf16.gmra.mrb[0].mxu0 %v2180
  %v2267 = vpop.f32.mrb[0].mxu0
  %v2268 = vadd.f32 %v2095, %v2267
  %v2269 = vpop.f32.mrb[0].mxu0
  %v2270 = vpop.f32.mrb[0].mxu0
  %v2271 = vadd.f32 %v2098, %v2270
  %v2272 = vpop.f32.mrb[0].mxu0
  %2273 = vmatprep.mubr.bf16.mxu0 0
  %2274 = vmatmul.mubr.bf16.gmra.mrb[0].mxu0 %v2183
  %v2275 = vpop.f32.mrb[0].mxu0
  %v2276 = vadd.f32 %v2103, %v2275
  %v2277 = vpop.f32.mrb[0].mxu0
  %v2278 = vpop.f32.mrb[0].mxu0
  %v2279 = vadd.f32 %v2106, %v2278
  %v2280 = vpop.f32.mrb[0].mxu0
  %2281 = vdwg.mxu0
  %v2282 = vld [vmem:[%s1876] sm:$0xf]
  %v2283 = vld [vmem:[%s1876 + $0x4] sm:$0xf]
  %v2284 = vld [vmem:[%s1876 + $0x8] sm:$0xf]
  %v2285 = vld [vmem:[%s1876 + $0xc] sm:$0xf]
  %v2286 = vld [vmem:[%s1876 + $0x10] sm:$0xf]
  %v2287 = vld [vmem:[%s1876 + $0x14] sm:$0xf]
  %v2288 = vld [vmem:[%s1876 + $0x18] sm:$0xf]
  %v2289 = vld [vmem:[%s1876 + $0x1c] sm:$0xf]
  %v2290 = vld [vmem:[%s1876 + $0x20] sm:$0xf]
  %v2291 = vld [vmem:[%s1876 + $0x24] sm:$0xf]
  %v2292 = vld [vmem:[%s1876 + $0x28] sm:$0xf]
  %v2293 = vld [vmem:[%s1876 + $0x2c] sm:$0xf]
  %v2294 = vld [vmem:[%s1876 + $0x30] sm:$0xf]
  %v2295 = vld [vmem:[%s1876 + $0x34] sm:$0xf]
  %v2296 = vld [vmem:[%s1876 + $0x38] sm:$0xf]
  %v2297 = vld [vmem:[%s1876 + $0x3c] sm:$0xf]
  %s2298 = scalar_lea.vmem %s3, 32
  %v2299 = vld [vmem:[%s2298] sm:$0xf]
  %v2300 = vld [vmem:[%s2298 + $0x4] sm:$0xf]
  %v2301 = vld [vmem:[%s2298 + $0x8] sm:$0xf]
  %v2302 = vld [vmem:[%s2298 + $0xc] sm:$0xf]
  %v2319 = vunpack.c.l.b16 %v2282
  %v2320 = vunpack.c.l.b16 %v2283
  %v2321 = vunpack.c.l.b16 %v2284
  %v2322 = vunpack.c.l.b16 %v2285
  %v2323 = vunpack.c.l.b16 %v2286
  %v2324 = vunpack.c.l.b16 %v2287
  %v2325 = vunpack.c.l.b16 %v2288
  %v2326 = vunpack.c.l.b16 %v2289
  %v2327 = vunpack.c.l.b16 %v2290
  %v2328 = vunpack.c.l.b16 %v2291
  %v2329 = vunpack.c.l.b16 %v2292
  %v2330 = vunpack.c.l.b16 %v2293
  %v2331 = vunpack.c.l.b16 %v2294
  %v2332 = vunpack.c.l.b16 %v2295
  %v2333 = vunpack.c.l.b16 %v2296
  %v2334 = vunpack.c.l.b16 %v2297
  %v2335 = vpack.c.b16 %v2320, %v2319
  %v2336 = vpack.c.b16 %v2322, %v2321
  %v2337 = vpack.c.b16 %v2324, %v2323
  %v2338 = vpack.c.b16 %v2326, %v2325
  %v2339 = vpack.c.b16 %v2328, %v2327
  %v2340 = vpack.c.b16 %v2330, %v2329
  %v2341 = vpack.c.b16 %v2332, %v2331
  %v2342 = vpack.c.b16 %v2334, %v2333
  %v2347 = vunpack.c.l.b16 %v2299
  %v2348 = vunpack.c.l.b16 %v2300
  %v2349 = vunpack.c.l.b16 %v2301
  %v2350 = vunpack.c.l.b16 %v2302
  %v2351 = vpack.c.b16 %v2348, %v2347
  %v2352 = vpack.c.b16 %v2350, %v2349
  %v2356 = vsel %vm1987, %v2335, 0
  %v2359 = vsel %vm1987, %v2336, 0
  %v2362 = vsel %vm1987, %v2337, 0
  %v2365 = vsel %vm1987, %v2338, 0
  %v2368 = vsel %vm1987, %v2339, 0
  %v2371 = vsel %vm1987, %v2340, 0
  %v2374 = vsel %vm1987, %v2341, 0
  %v2377 = vsel %vm1987, %v2342, 0
  %2379 = vmatprep.subr.bf16.mxu0 0
  %2380 = vmatpush1.bf16.msra.mxu0 %v2351
  %2381 = vmatprep.subr.bf16.mxu0 0
  %2382 = vmatpush1.bf16.msra.mxu0 %v2352
  %2383 = vmatprep.subr.bf16.mxu0 0
  %2384 = vmatpush1.bf16.msra.mxu0 0
  %2385 = vmatprep.subr.bf16.mxu0 0
  %2386 = vmatpush1.bf16.msra.mxu0 0
  %2387 = vmatprep.subr.bf16.mxu0 0
  %2388 = vmatpush1.bf16.msra.mxu0 0
  %2389 = vmatprep.subr.bf16.mxu0 0
  %2390 = vmatpush1.bf16.msra.mxu0 0
  %2391 = vmatprep.subr.bf16.mxu0 0
  %2392 = vmatpush1.bf16.msra.mxu0 0
  %2393 = vmatprep.subr.bf16.mxu0 0
  %2394 = vmatpush1.bf16.msra.mxu0 0
  %2395 = vmatprep.subr.bf16.mxu0 0
  %2396 = vmatpush1.bf16.msra.mxu0 0
  %2397 = vmatprep.subr.bf16.mxu0 0
  %2398 = vmatpush1.bf16.msra.mxu0 0
  %2399 = vmatprep.subr.bf16.mxu0 0
  %2400 = vmatpush1.bf16.msra.mxu0 0
  %2401 = vmatprep.subr.bf16.mxu0 0
  %2402 = vmatpush1.bf16.msra.mxu0 0
  %2403 = vmatprep.subr.bf16.mxu0 0
  %2404 = vmatpush1.bf16.msra.mxu0 0
  %2405 = vmatprep.subr.bf16.mxu0 0
  %2406 = vmatpush1.bf16.msra.mxu0 0
  %2407 = vmatprep.subr.bf16.mxu0 0
  %2408 = vmatpush1.bf16.msra.mxu0 0
  %2409 = vmatprep.subr.bf16.mxu0 0
  %2410 = vmatpush1.bf16.msra.mxu0 0
  %2411 = vmatprep.mubr.bf16.mxu0 0
  %2412 = vmatmul.mubr.bf16.gmra.mrb[0].mxu0 %v2356
  %v2413 = vpop.f32.mrb[0].mxu0
  %v2414 = vadd.f32 0.0, %v2413
  %v2415 = vpop.f32.mrb[0].mxu0
  %v2416 = vpop.f32.mrb[0].mxu0
  %v2417 = vadd.f32 0.0, %v2416
  %v2418 = vpop.f32.mrb[0].mxu0
  %2419 = vmatprep.mubr.bf16.mxu0 0
  %2420 = vmatmul.mubr.bf16.gmra.mrb[0].mxu0 %v2359
  %v2421 = vpop.f32.mrb[0].mxu0
  %v2422 = vadd.f32 0.0, %v2421
  %v2423 = vpop.f32.mrb[0].mxu0
  %v2424 = vpop.f32.mrb[0].mxu0
  %v2425 = vadd.f32 0.0, %v2424
  %v2426 = vpop.f32.mrb[0].mxu0
  %2427 = vmatprep.mubr.bf16.mxu0 0
  %2428 = vmatmul.mubr.bf16.gmra.mrb[0].mxu0 %v2362
  %v2429 = vpop.f32.mrb[0].mxu0
  %v2430 = vadd.f32 0.0, %v2429
  %v2431 = vpop.f32.mrb[0].mxu0
  %v2432 = vpop.f32.mrb[0].mxu0
  %v2433 = vadd.f32 0.0, %v2432
  %v2434 = vpop.f32.mrb[0].mxu0
  %2435 = vmatprep.mubr.bf16.mxu0 0
  %2436 = vmatmul.mubr.bf16.gmra.mrb[0].mxu0 %v2365
  %v2437 = vpop.f32.mrb[0].mxu0
  %v2438 = vadd.f32 0.0, %v2437
  %v2439 = vpop.f32.mrb[0].mxu0
  %v2440 = vpop.f32.mrb[0].mxu0
  %v2441 = vadd.f32 0.0, %v2440
  %v2442 = vpop.f32.mrb[0].mxu0
  %2443 = vmatprep.mubr.bf16.mxu0 0
  %2444 = vmatmul.mubr.bf16.gmra.mrb[0].mxu0 %v2368
  %v2445 = vpop.f32.mrb[0].mxu0
  %v2446 = vadd.f32 0.0, %v2445
  %v2447 = vpop.f32.mrb[0].mxu0
  %v2448 = vpop.f32.mrb[0].mxu0
  %v2449 = vadd.f32 0.0, %v2448
  %v2450 = vpop.f32.mrb[0].mxu0
  %2451 = vmatprep.mubr.bf16.mxu0 0
  %2452 = vmatmul.mubr.bf16.gmra.mrb[0].mxu0 %v2371
  %v2453 = vpop.f32.mrb[0].mxu0
  %v2454 = vadd.f32 0.0, %v2453
  %v2455 = vpop.f32.mrb[0].mxu0
  %v2456 = vpop.f32.mrb[0].mxu0
  %v2457 = vadd.f32 0.0, %v2456
  %v2458 = vpop.f32.mrb[0].mxu0
  %2459 = vmatprep.mubr.bf16.mxu0 0
  %2460 = vmatmul.mubr.bf16.gmra.mrb[0].mxu0 %v2374
  %v2461 = vpop.f32.mrb[0].mxu0
  %v2462 = vadd.f32 0.0, %v2461
  %v2463 = vpop.f32.mrb[0].mxu0
  %v2464 = vpop.f32.mrb[0].mxu0
  %v2465 = vadd.f32 0.0, %v2464
  %v2466 = vpop.f32.mrb[0].mxu0
  %2467 = vmatprep.mubr.bf16.mxu0 0
  %2468 = vmatmul.mubr.bf16.gmra.mrb[0].mxu0 %v2377
  %v2469 = vpop.f32.mrb[0].mxu0
  %v2470 = vadd.f32 0.0, %v2469
  %v2471 = vpop.f32.mrb[0].mxu0
  %v2472 = vpop.f32.mrb[0].mxu0
  %v2473 = vadd.f32 0.0, %v2472
  %v2474 = vpop.f32.mrb[0].mxu0
  %2475 = vdwg.mxu0
  %v2476 = vadd.f32 %v2220, %v2414
  %v2477 = vadd.f32 %v2223, %v2417
  %v2478 = vadd.f32 %v2228, %v2422
  %v2479 = vadd.f32 %v2231, %v2425
  %v2480 = vadd.f32 %v2236, %v2430
  %v2481 = vadd.f32 %v2239, %v2433
  %v2482 = vadd.f32 %v2244, %v2438
  %v2483 = vadd.f32 %v2247, %v2441
  %v2484 = vadd.f32 %v2252, %v2446
  %v2485 = vadd.f32 %v2255, %v2449
  %v2486 = vadd.f32 %v2260, %v2454
  %v2487 = vadd.f32 %v2263, %v2457
  %v2488 = vadd.f32 %v2268, %v2462
  %v2489 = vadd.f32 %v2271, %v2465
  %v2490 = vadd.f32 %v2276, %v2470
  %v2491 = vadd.f32 %v2279, %v2473
  %s2492 = scalar_lea.vmem [#allocation2], 12
  %v2493 = vld [vmem:[%s2492] sm:$0xf]
  %v2494 = vld [vmem:[%s2492 + $0x4] sm:$0xf]
  %v2495 = vld [vmem:[%s2492 + $0x8] sm:$0xf]
  %v2496 = vld [vmem:[%s2492 + $0xc] sm:$0xf]
  %v2497 = vld [vmem:[%s2492 + $0x10] sm:$0xf]
  %v2498 = vld [vmem:[%s2492 + $0x14] sm:$0xf]
  %v2499 = vld [vmem:[%s2492 + $0x18] sm:$0xf]
  %v2500 = vld [vmem:[%s2492 + $0x1c] sm:$0xf]
  %v2501 = vld [vmem:[%s2492 + $0x20] sm:$0xf]
  %v2502 = vld [vmem:[%s2492 + $0x24] sm:$0xf]
  %v2503 = vld [vmem:[%s2492 + $0x28] sm:$0xf]
  %v2504 = vld [vmem:[%s2492 + $0x2c] sm:$0xf]
  %v2505 = vld [vmem:[%s2492 + $0x30] sm:$0xf]
  %v2506 = vld [vmem:[%s2492 + $0x34] sm:$0xf]
  %v2507 = vld [vmem:[%s2492 + $0x38] sm:$0xf]
  %v2508 = vld [vmem:[%s2492 + $0x3c] sm:$0xf]
  %s2509 = scalar_lea.vmem %s3, 48
  %v2510 = vld [vmem:[%s2509] sm:$0xf]
  %v2511 = vld [vmem:[%s2509 + $0x4] sm:$0xf]
  %v2512 = vld [vmem:[%s2509 + $0x8] sm:$0xf]
  %v2513 = vld [vmem:[%s2509 + $0xc] sm:$0xf]
  %v2530 = vunpack.c.l.b16 %v2493
  %v2531 = vunpack.c.l.b16 %v2494
  %v2532 = vunpack.c.l.b16 %v2495
  %v2533 = vunpack.c.l.b16 %v2496
  %v2534 = vunpack.c.l.b16 %v2497
  %v2535 = vunpack.c.l.b16 %v2498
  %v2536 = vunpack.c.l.b16 %v2499
  %v2537 = vunpack.c.l.b16 %v2500
  %v2538 = vunpack.c.l.b16 %v2501
  %v2539 = vunpack.c.l.b16 %v2502
  %v2540 = vunpack.c.l.b16 %v2503
  %v2541 = vunpack.c.l.b16 %v2504
  %v2542 = vunpack.c.l.b16 %v2505
  %v2543 = vunpack.c.l.b16 %v2506
  %v2544 = vunpack.c.l.b16 %v2507
  %v2545 = vunpack.c.l.b16 %v2508
  %v2546 = vpack.c.b16 %v2531, %v2530
  %v2547 = vpack.c.b16 %v2533, %v2532
  %v2548 = vpack.c.b16 %v2535, %v2534
  %v2549 = vpack.c.b16 %v2537, %v2536
  %v2550 = vpack.c.b16 %v2539, %v2538
  %v2551 = vpack.c.b16 %v2541, %v2540
  %v2552 = vpack.c.b16 %v2543, %v2542
  %v2553 = vpack.c.b16 %v2545, %v2544
  %v2558 = vunpack.c.l.b16 %v2510
  %v2559 = vunpack.c.l.b16 %v2511
  %v2560 = vunpack.c.l.b16 %v2512
  %v2561 = vunpack.c.l.b16 %v2513
  %v2562 = vpack.c.b16 %v2559, %v2558
  %v2563 = vpack.c.b16 %v2561, %v2560
  %v2567 = vsel %vm1987, %v2546, 0
  %v2570 = vsel %vm1987, %v2547, 0
  %v2573 = vsel %vm1987, %v2548, 0
  %v2576 = vsel %vm1987, %v2549, 0
  %v2579 = vsel %vm1987, %v2550, 0
  %v2582 = vsel %vm1987, %v2551, 0
  %v2585 = vsel %vm1987, %v2552, 0
  %v2588 = vsel %vm1987, %v2553, 0
  %2590 = vmatprep.subr.bf16.mxu0 0
  %2591 = vmatpush1.bf16.msra.mxu0 %v2562
  %2592 = vmatprep.subr.bf16.mxu0 0
  %2593 = vmatpush1.bf16.msra.mxu0 %v2563
  %2594 = vmatprep.subr.bf16.mxu0 0
  %2595 = vmatpush1.bf16.msra.mxu0 0
  %2596 = vmatprep.subr.bf16.mxu0 0
  %2597 = vmatpush1.bf16.msra.mxu0 0
  %2598 = vmatprep.subr.bf16.mxu0 0
  %2599 = vmatpush1.bf16.msra.mxu0 0
  %2600 = vmatprep.subr.bf16.mxu0 0
  %2601 = vmatpush1.bf16.msra.mxu0 0
  %2602 = vmatprep.subr.bf16.mxu0 0
  %2603 = vmatpush1.bf16.msra.mxu0 0
  %2604 = vmatprep.subr.bf16.mxu0 0
  %2605 = vmatpush1.bf16.msra.mxu0 0
  %2606 = vmatprep.subr.bf16.mxu0 0
  %2607 = vmatpush1.bf16.msra.mxu0 0
  %2608 = vmatprep.subr.bf16.mxu0 0
  %2609 = vmatpush1.bf16.msra.mxu0 0
  %2610 = vmatprep.subr.bf16.mxu0 0
  %2611 = vmatpush1.bf16.msra.mxu0 0
  %2612 = vmatprep.subr.bf16.mxu0 0
  %2613 = vmatpush1.bf16.msra.mxu0 0
  %2614 = vmatprep.subr.bf16.mxu0 0
  %2615 = vmatpush1.bf16.msra.mxu0 0
  %2616 = vmatprep.subr.bf16.mxu0 0
  %2617 = vmatpush1.bf16.msra.mxu0 0
  %2618 = vmatprep.subr.bf16.mxu0 0
  %2619 = vmatpush1.bf16.msra.mxu0 0
  %2620 = vmatprep.subr.bf16.mxu0 0
  %2621 = vmatpush1.bf16.msra.mxu0 0
  %2622 = vmatprep.mubr.bf16.mxu0 0
  %2623 = vmatmul.mubr.bf16.gmra.mrb[0].mxu0 %v2567
  %v2624 = vpop.f32.mrb[0].mxu0
  %v2625 = vadd.f32 0.0, %v2624
  %v2626 = vpop.f32.mrb[0].mxu0
  %v2627 = vpop.f32.mrb[0].mxu0
  %v2628 = vadd.f32 0.0, %v2627
  %v2629 = vpop.f32.mrb[0].mxu0
  %2630 = vmatprep.mubr.bf16.mxu0 0
  %2631 = vmatmul.mubr.bf16.gmra.mrb[0].mxu0 %v2570
  %v2632 = vpop.f32.mrb[0].mxu0
  %v2633 = vadd.f32 0.0, %v2632
  %v2634 = vpop.f32.mrb[0].mxu0
  %v2635 = vpop.f32.mrb[0].mxu0
  %v2636 = vadd.f32 0.0, %v2635
  %v2637 = vpop.f32.mrb[0].mxu0
  %2638 = vmatprep.mubr.bf16.mxu0 0
  %2639 = vmatmul.mubr.bf16.gmra.mrb[0].mxu0 %v2573
  %v2640 = vpop.f32.mrb[0].mxu0
  %v2641 = vadd.f32 0.0, %v2640
  %v2642 = vpop.f32.mrb[0].mxu0
  %v2643 = vpop.f32.mrb[0].mxu0
  %v2644 = vadd.f32 0.0, %v2643
  %v2645 = vpop.f32.mrb[0].mxu0
  %2646 = vmatprep.mubr.bf16.mxu0 0
  %2647 = vmatmul.mubr.bf16.gmra.mrb[0].mxu0 %v2576
  %v2648 = vpop.f32.mrb[0].mxu0
  %v2649 = vadd.f32 0.0, %v2648
  %v2650 = vpop.f32.mrb[0].mxu0
  %v2651 = vpop.f32.mrb[0].mxu0
  %v2652 = vadd.f32 0.0, %v2651
  %v2653 = vpop.f32.mrb[0].mxu0
  %2654 = vmatprep.mubr.bf16.mxu0 0
  %2655 = vmatmul.mubr.bf16.gmra.mrb[0].mxu0 %v2579
  %v2656 = vpop.f32.mrb[0].mxu0
  %v2657 = vadd.f32 0.0, %v2656
  %v2658 = vpop.f32.mrb[0].mxu0
  %v2659 = vpop.f32.mrb[0].mxu0
  %v2660 = vadd.f32 0.0, %v2659
  %v2661 = vpop.f32.mrb[0].mxu0
  %2662 = vmatprep.mubr.bf16.mxu0 0
  %2663 = vmatmul.mubr.bf16.gmra.mrb[0].mxu0 %v2582
  %v2664 = vpop.f32.mrb[0].mxu0
  %v2665 = vadd.f32 0.0, %v2664
  %v2666 = vpop.f32.mrb[0].mxu0
  %v2667 = vpop.f32.mrb[0].mxu0
  %v2668 = vadd.f32 0.0, %v2667
  %v2669 = vpop.f32.mrb[0].mxu0
  %2670 = vmatprep.mubr.bf16.mxu0 0
  %2671 = vmatmul.mubr.bf16.gmra.mrb[0].mxu0 %v2585
  %v2672 = vpop.f32.mrb[0].mxu0
  %v2673 = vadd.f32 0.0, %v2672
  %v2674 = vpop.f32.mrb[0].mxu0
  %v2675 = vpop.f32.mrb[0].mxu0
  %v2676 = vadd.f32 0.0, %v2675
  %v2677 = vpop.f32.mrb[0].mxu0
  %2678 = vmatprep.mubr.bf16.mxu0 0
  %2679 = vmatmul.mubr.bf16.gmra.mrb[0].mxu0 %v2588
  %v2680 = vpop.f32.mrb[0].mxu0
  %v2681 = vadd.f32 0.0, %v2680
  %v2682 = vpop.f32.mrb[0].mxu0
  %v2683 = vpop.f32.mrb[0].mxu0
  %v2684 = vadd.f32 0.0, %v2683
  %v2685 = vpop.f32.mrb[0].mxu0
  %2686 = vdwg.mxu0
  %v2687 = vadd.f32 %v2476, %v2625
  %v2688 = vadd.f32 %v2477, %v2628
  %v2689 = vadd.f32 %v2478, %v2633
  %v2690 = vadd.f32 %v2479, %v2636
  %v2691 = vadd.f32 %v2480, %v2641
  %v2692 = vadd.f32 %v2481, %v2644
  %v2693 = vadd.f32 %v2482, %v2649
  %v2694 = vadd.f32 %v2483, %v2652
  %v2695 = vadd.f32 %v2484, %v2657
  %v2696 = vadd.f32 %v2485, %v2660
  %v2697 = vadd.f32 %v2486, %v2665
  %v2698 = vadd.f32 %v2487, %v2668
  %v2699 = vadd.f32 %v2488, %v2673
  %v2700 = vadd.f32 %v2489, %v2676
  %v2701 = vadd.f32 %v2490, %v2681
  %v2702 = vadd.f32 %v2491, %v2684
  %s2703 = scalar_lea.vmem [#allocation2], 16
  %v2704 = vld [vmem:[%s2703] sm:$0xf]
  %v2705 = vld [vmem:[%s2703 + $0x4] sm:$0xf]
  %v2706 = vld [vmem:[%s2703 + $0x8] sm:$0xf]
  %v2707 = vld [vmem:[%s2703 + $0xc] sm:$0xf]
  %v2708 = vld [vmem:[%s2703 + $0x10] sm:$0xf]
  %v2709 = vld [vmem:[%s2703 + $0x14] sm:$0xf]
  %v2710 = vld [vmem:[%s2703 + $0x18] sm:$0xf]
  %v2711 = vld [vmem:[%s2703 + $0x1c] sm:$0xf]
  %v2712 = vld [vmem:[%s2703 + $0x20] sm:$0xf]
  %v2713 = vld [vmem:[%s2703 + $0x24] sm:$0xf]
  %v2714 = vld [vmem:[%s2703 + $0x28] sm:$0xf]
  %v2715 = vld [vmem:[%s2703 + $0x2c] sm:$0xf]
  %v2716 = vld [vmem:[%s2703 + $0x30] sm:$0xf]
  %v2717 = vld [vmem:[%s2703 + $0x34] sm:$0xf]
  %v2718 = vld [vmem:[%s2703 + $0x38] sm:$0xf]
  %v2719 = vld [vmem:[%s2703 + $0x3c] sm:$0xf]
  %s2720 = scalar_lea.vmem %s3, 64
  %v2721 = vld [vmem:[%s2720] sm:$0xf]
  %v2722 = vld [vmem:[%s2720 + $0x4] sm:$0xf]
  %v2723 = vld [vmem:[%s2720 + $0x8] sm:$0xf]
  %v2724 = vld [vmem:[%s2720 + $0xc] sm:$0xf]
  %v2741 = vunpack.c.l.b16 %v2704
  %v2742 = vunpack.c.l.b16 %v2705
  %v2743 = vunpack.c.l.b16 %v2706
  %v2744 = vunpack.c.l.b16 %v2707
  %v2745 = vunpack.c.l.b16 %v2708
  %v2746 = vunpack.c.l.b16 %v2709
  %v2747 = vunpack.c.l.b16 %v2710
  %v2748 = vunpack.c.l.b16 %v2711
  %v2749 = vunpack.c.l.b16 %v2712
  %v2750 = vunpack.c.l.b16 %v2713
  %v2751 = vunpack.c.l.b16 %v2714
  %v2752 = vunpack.c.l.b16 %v2715
  %v2753 = vunpack.c.l.b16 %v2716
  %v2754 = vunpack.c.l.b16 %v2717
  %v2755 = vunpack.c.l.b16 %v2718
  %v2756 = vunpack.c.l.b16 %v2719
  %v2757 = vpack.c.b16 %v2742, %v2741
  %v2758 = vpack.c.b16 %v2744, %v2743
  %v2759 = vpack.c.b16 %v2746, %v2745
  %v2760 = vpack.c.b16 %v2748, %v2747
  %v2761 = vpack.c.b16 %v2750, %v2749
  %v2762 = vpack.c.b16 %v2752, %v2751
  %v2763 = vpack.c.b16 %v2754, %v2753
  %v2764 = vpack.c.b16 %v2756, %v2755
  %v2769 = vunpack.c.l.b16 %v2721
  %v2770 = vunpack.c.l.b16 %v2722
  %v2771 = vunpack.c.l.b16 %v2723
  %v2772 = vunpack.c.l.b16 %v2724
  %v2773 = vpack.c.b16 %v2770, %v2769
  %v2774 = vpack.c.b16 %v2772, %v2771
  %v2778 = vsel %vm1987, %v2757, 0
  %v2781 = vsel %vm1987, %v2758, 0
  %v2784 = vsel %vm1987, %v2759, 0
  %v2787 = vsel %vm1987, %v2760, 0
  %v2790 = vsel %vm1987, %v2761, 0
  %v2793 = vsel %vm1987, %v2762, 0
  %v2796 = vsel %vm1987, %v2763, 0
  %v2799 = vsel %vm1987, %v2764, 0
  %2801 = vmatprep.subr.bf16.mxu0 0
  %2802 = vmatpush1.bf16.msra.mxu0 %v2773
  %2803 = vmatprep.subr.bf16.mxu0 0
  %2804 = vmatpush1.bf16.msra.mxu0 %v2774
  %2805 = vmatprep.subr.bf16.mxu0 0
  %2806 = vmatpush1.bf16.msra.mxu0 0
  %2807 = vmatprep.subr.bf16.mxu0 0
  %2808 = vmatpush1.bf16.msra.mxu0 0
  %2809 = vmatprep.subr.bf16.mxu0 0
  %2810 = vmatpush1.bf16.msra.mxu0 0
  %2811 = vmatprep.subr.bf16.mxu0 0
  %2812 = vmatpush1.bf16.msra.mxu0 0
  %2813 = vmatprep.subr.bf16.mxu0 0
  %2814 = vmatpush1.bf16.msra.mxu0 0
  %2815 = vmatprep.subr.bf16.mxu0 0
  %2816 = vmatpush1.bf16.msra.mxu0 0
  %2817 = vmatprep.subr.bf16.mxu0 0
  %2818 = vmatpush1.bf16.msra.mxu0 0
  %2819 = vmatprep.subr.bf16.mxu0 0
  %2820 = vmatpush1.bf16.msra.mxu0 0
  %2821 = vmatprep.subr.bf16.mxu0 0
  %2822 = vmatpush1.bf16.msra.mxu0 0
  %2823 = vmatprep.subr.bf16.mxu0 0
  %2824 = vmatpush1.bf16.msra.mxu0 0
  %2825 = vmatprep.subr.bf16.mxu0 0
  %2826 = vmatpush1.bf16.msra.mxu0 0
  %2827 = vmatprep.subr.bf16.mxu0 0
  %2828 = vmatpush1.bf16.msra.mxu0 0
  %2829 = vmatprep.subr.bf16.mxu0 0
  %2830 = vmatpush1.bf16.msra.mxu0 0
  %2831 = vmatprep.subr.bf16.mxu0 0
  %2832 = vmatpush1.bf16.msra.mxu0 0
  %2833 = vmatprep.mubr.bf16.mxu0 0
  %2834 = vmatmul.mubr.bf16.gmra.mrb[0].mxu0 %v2778
  %v2835 = vpop.f32.mrb[0].mxu0
  %v2836 = vadd.f32 0.0, %v2835
  %v2837 = vpop.f32.mrb[0].mxu0
  %v2838 = vpop.f32.mrb[0].mxu0
  %v2839 = vadd.f32 0.0, %v2838
  %v2840 = vpop.f32.mrb[0].mxu0
  %2841 = vmatprep.mubr.bf16.mxu0 0
  %2842 = vmatmul.mubr.bf16.gmra.mrb[0].mxu0 %v2781
  %v2843 = vpop.f32.mrb[0].mxu0
  %v2844 = vadd.f32 0.0, %v2843
  %v2845 = vpop.f32.mrb[0].mxu0
  %v2846 = vpop.f32.mrb[0].mxu0
  %v2847 = vadd.f32 0.0, %v2846
  %v2848 = vpop.f32.mrb[0].mxu0
  %2849 = vmatprep.mubr.bf16.mxu0 0
  %2850 = vmatmul.mubr.bf16.gmra.mrb[0].mxu0 %v2784
  %v2851 = vpop.f32.mrb[0].mxu0
  %v2852 = vadd.f32 0.0, %v2851
  %v2853 = vpop.f32.mrb[0].mxu0
  %v2854 = vpop.f32.mrb[0].mxu0
  %v2855 = vadd.f32 0.0, %v2854
  %v2856 = vpop.f32.mrb[0].mxu0
  %2857 = vmatprep.mubr.bf16.mxu0 0
  %2858 = vmatmul.mubr.bf16.gmra.mrb[0].mxu0 %v2787
  %v2859 = vpop.f32.mrb[0].mxu0
  %v2860 = vadd.f32 0.0, %v2859
  %v2861 = vpop.f32.mrb[0].mxu0
  %v2862 = vpop.f32.mrb[0].mxu0
  %v2863 = vadd.f32 0.0, %v2862
  %v2864 = vpop.f32.mrb[0].mxu0
  %2865 = vmatprep.mubr.bf16.mxu0 0
  %2866 = vmatmul.mubr.bf16.gmra.mrb[0].mxu0 %v2790
  %v2867 = vpop.f32.mrb[0].mxu0
  %v2868 = vadd.f32 0.0, %v2867
  %v2869 = vpop.f32.mrb[0].mxu0
  %v2870 = vpop.f32.mrb[0].mxu0
  %v2871 = vadd.f32 0.0, %v2870
  %v2872 = vpop.f32.mrb[0].mxu0
  %2873 = vmatprep.mubr.bf16.mxu0 0
  %2874 = vmatmul.mubr.bf16.gmra.mrb[0].mxu0 %v2793
  %v2875 = vpop.f32.mrb[0].mxu0
  %v2876 = vadd.f32 0.0, %v2875
  %v2877 = vpop.f32.mrb[0].mxu0
  %v2878 = vpop.f32.mrb[0].mxu0
  %v2879 = vadd.f32 0.0, %v2878
  %v2880 = vpop.f32.mrb[0].mxu0
  %2881 = vmatprep.mubr.bf16.mxu0 0
  %2882 = vmatmul.mubr.bf16.gmra.mrb[0].mxu0 %v2796
  %v2883 = vpop.f32.mrb[0].mxu0
  %v2884 = vadd.f32 0.0, %v2883
  %v2885 = vpop.f32.mrb[0].mxu0
  %v2886 = vpop.f32.mrb[0].mxu0
  %v2887 = vadd.f32 0.0, %v2886
  %v2888 = vpop.f32.mrb[0].mxu0
  %2889 = vmatprep.mubr.bf16.mxu0 0
  %2890 = vmatmul.mubr.bf16.gmra.mrb[0].mxu0 %v2799
  %v2891 = vpop.f32.mrb[0].mxu0
  %v2892 = vadd.f32 0.0, %v2891
  %v2893 = vpop.f32.mrb[0].mxu0
  %v2894 = vpop.f32.mrb[0].mxu0
  %v2895 = vadd.f32 0.0, %v2894
  %v2896 = vpop.f32.mrb[0].mxu0
  %2897 = vdwg.mxu0
  %v2898 = vadd.f32 %v2687, %v2836
  %v2899 = vadd.f32 %v2688, %v2839
  %v2900 = vadd.f32 %v2689, %v2844
  %v2901 = vadd.f32 %v2690, %v2847
  %v2902 = vadd.f32 %v2691, %v2852
  %v2903 = vadd.f32 %v2692, %v2855
  %v2904 = vadd.f32 %v2693, %v2860
  %v2905 = vadd.f32 %v2694, %v2863
  %v2906 = vadd.f32 %v2695, %v2868
  %v2907 = vadd.f32 %v2696, %v2871
  %v2908 = vadd.f32 %v2697, %v2876
  %v2909 = vadd.f32 %v2698, %v2879
  %v2910 = vadd.f32 %v2699, %v2884
  %v2911 = vadd.f32 %v2700, %v2887
  %v2912 = vadd.f32 %v2701, %v2892
  %v2913 = vadd.f32 %v2702, %v2895
  %v2914 = vld [vmem:[%s4] sm:$0x1]
  %v2916 = vlaneseq
  %v2917 = vshrl.u32 %v2916, 7
  %v2918 = vsub.s32 0, %v2917
  %v2919 = vrot.slane %v2914, %v2918
  %v2921 = vadd.f32 %v2898, %v2919
  %v2922 = vadd.f32 %v2899, %v2919
  %v2923 = vadd.f32 %v2900, %v2919
  %v2924 = vadd.f32 %v2901, %v2919
  %v2925 = vadd.f32 %v2902, %v2919
  %v2926 = vadd.f32 %v2903, %v2919
  %v2927 = vadd.f32 %v2904, %v2919
  %v2928 = vadd.f32 %v2905, %v2919
  %v2929 = vadd.f32 %v2906, %v2919
  %v2930 = vadd.f32 %v2907, %v2919
  %v2931 = vadd.f32 %v2908, %v2919
  %v2932 = vadd.f32 %v2909, %v2919
  %v2933 = vadd.f32 %v2910, %v2919
  %v2934 = vadd.f32 %v2911, %v2919
  %v2935 = vadd.f32 %v2912, %v2919
  %v2936 = vadd.f32 %v2913, %v2919
  %v2937 = vmax.f32 %v2921, 0.0
  %v2938 = vmax.f32 %v2922, 0.0
  %v2939 = vmax.f32 %v2923, 0.0
  %v2940 = vmax.f32 %v2924, 0.0
  %v2941 = vmax.f32 %v2925, 0.0
  %v2942 = vmax.f32 %v2926, 0.0
  %v2943 = vmax.f32 %v2927, 0.0
  %v2944 = vmax.f32 %v2928, 0.0
  %v2945 = vmax.f32 %v2929, 0.0
  %v2946 = vmax.f32 %v2930, 0.0
  %v2947 = vmax.f32 %v2931, 0.0
  %v2948 = vmax.f32 %v2932, 0.0
  %v2949 = vmax.f32 %v2933, 0.0
  %v2950 = vmax.f32 %v2934, 0.0
  %v2951 = vmax.f32 %v2935, 0.0
  %v2952 = vmax.f32 %v2936, 0.0
  %v2953 = vmax.f32 %v2937, %v2938
  %v2954 = vmax.f32 %v2939, %v2940
  %v2955 = vmax.f32 %v2941, %v2942
  %v2956 = vmax.f32 %v2943, %v2944
  %v2957 = vmax.f32 %v2945, %v2946
  %v2958 = vmax.f32 %v2947, %v2948
  %v2959 = vmax.f32 %v2949, %v2950
  %v2960 = vmax.f32 %v2951, %v2952
  %v2961 = vpack.c.bf16 %v2953, %v2953
  %v2962 = vld [vmem:[%s5] sm:$0xf]
  %v2963 = vld [vmem:[%s5 + $0x4] sm:$0xf]
  %v2964 = vld [vmem:[%s5 + $0x8] sm:$0xf]
  %v2965 = vld [vmem:[%s5 + $0xc] sm:$0xf]
  %v2966 = vld [vmem:[%s5 + $0x10] sm:$0xf]
  %v2967 = vld [vmem:[%s5 + $0x14] sm:$0xf]
  %v2968 = vld [vmem:[%s5 + $0x18] sm:$0xf]
  %v2969 = vld [vmem:[%s5 + $0x1c] sm:$0xf]
  %v2970 = vpack.c.bf16 %v2954, %v2954
  %s2971 = scalar_lea.vmem %s5, 32
  %v2972 = vld [vmem:[%s2971] sm:$0xf]
  %v2973 = vld [vmem:[%s2971 + $0x4] sm:$0xf]
  %v2974 = vld [vmem:[%s2971 + $0x8] sm:$0xf]
  %v2975 = vld [vmem:[%s2971 + $0xc] sm:$0xf]
  %v2976 = vld [vmem:[%s2971 + $0x10] sm:$0xf]
  %v2977 = vld [vmem:[%s2971 + $0x14] sm:$0xf]
  %v2978 = vld [vmem:[%s2971 + $0x18] sm:$0xf]
  %v2979 = vld [vmem:[%s2971 + $0x1c] sm:$0xf]
  %v2988 = vunpack.c.l.b16 %v2972
  %v2989 = vunpack.c.l.b16 %v2973
  %v2990 = vunpack.c.l.b16 %v2974
  %v2991 = vunpack.c.l.b16 %v2975
  %v2992 = vunpack.c.l.b16 %v2976
  %v2993 = vunpack.c.l.b16 %v2977
  %v2994 = vunpack.c.l.b16 %v2978
  %v2995 = vunpack.c.l.b16 %v2979
  %v2996 = vpack.c.b16 %v2989, %v2988
  %v2997 = vpack.c.b16 %v2991, %v2990
  %v2998 = vpack.c.b16 %v2993, %v2992
  %v2999 = vpack.c.b16 %v2995, %v2994
  %vm3004 = vcmask 523264
  %v3006 = vsel %vm3004, %v2970, 0
  %3008 = vmatprep.subr.bf16.mxu0 0
  %3009 = vmatpush1.bf16.msra.mxu0 %v2996
  %3010 = vmatprep.subr.bf16.mxu0 0
  %3011 = vmatpush1.bf16.msra.mxu0 %v2997
  %3012 = vmatprep.subr.bf16.mxu0 0
  %3013 = vmatpush1.bf16.msra.mxu0 %v2998
  %3014 = vmatprep.subr.bf16.mxu0 0
  %3015 = vmatpush1.bf16.msra.mxu0 %v2999
  %3016 = vmatprep.subr.bf16.mxu0 0
  %3017 = vmatpush1.bf16.msra.mxu0 0
  %3018 = vmatprep.subr.bf16.mxu0 0
  %3019 = vmatpush1.bf16.msra.mxu0 0
  %3020 = vmatprep.subr.bf16.mxu0 0
  %3021 = vmatpush1.bf16.msra.mxu0 0
  %3022 = vmatprep.subr.bf16.mxu0 0
  %3023 = vmatpush1.bf16.msra.mxu0 0
  %3024 = vmatprep.subr.bf16.mxu0 0
  %3025 = vmatpush1.bf16.msra.mxu0 0
  %3026 = vmatprep.subr.bf16.mxu0 0
  %3027 = vmatpush1.bf16.msra.mxu0 0
  %3028 = vmatprep.subr.bf16.mxu0 0
  %3029 = vmatpush1.bf16.msra.mxu0 0
  %3030 = vmatprep.subr.bf16.mxu0 0
  %3031 = vmatpush1.bf16.msra.mxu0 0
  %3032 = vmatprep.subr.bf16.mxu0 0
  %3033 = vmatpush1.bf16.msra.mxu0 0
  %3034 = vmatprep.subr.bf16.mxu0 0
  %3035 = vmatpush1.bf16.msra.mxu0 0
  %3036 = vmatprep.subr.bf16.mxu0 0
  %3037 = vmatpush1.bf16.msra.mxu0 0
  %3038 = vmatprep.subr.bf16.mxu0 0
  %3039 = vmatpush1.bf16.msra.mxu0 0
  %3040 = vmatprep.mubr.bf16.mxu0 0
  %3041 = vmatmul.mubr.bf16.gmra.mrb[0].mxu0 %v3006
  %v3042 = vpop.f32.mrb[0].mxu0
  %v3043 = vadd.f32 0.0, %v3042
  %v3044 = vpop.f32.mrb[0].mxu0
  %v3045 = vpop.f32.mrb[0].mxu0
  %v3046 = vpop.f32.mrb[0].mxu0
  %3047 = vdwg.mxu0
  %v3056 = vunpack.c.l.b16 %v2962
  %v3057 = vunpack.c.l.b16 %v2963
  %v3058 = vunpack.c.l.b16 %v2964
  %v3059 = vunpack.c.l.b16 %v2965
  %v3060 = vunpack.c.l.b16 %v2966
  %v3061 = vunpack.c.l.b16 %v2967
  %v3062 = vunpack.c.l.b16 %v2968
  %v3063 = vunpack.c.l.b16 %v2969
  %v3064 = vpack.c.b16 %v3057, %v3056
  %v3065 = vpack.c.b16 %v3059, %v3058
  %v3066 = vpack.c.b16 %v3061, %v3060
  %v3067 = vpack.c.b16 %v3063, %v3062
  %v3073 = vsel %vm3004, %v2961, 0
  %3075 = vmatprep.subr.bf16.mxu0 0
  %3076 = vmatpush1.bf16.msra.mxu0 %v3064
  %3077 = vmatprep.subr.bf16.mxu0 0
  %3078 = vmatpush1.bf16.msra.mxu0 %v3065
  %3079 = vmatprep.subr.bf16.mxu0 0
  %3080 = vmatpush1.bf16.msra.mxu0 %v3066
  %3081 = vmatprep.subr.bf16.mxu0 0
  %3082 = vmatpush1.bf16.msra.mxu0 %v3067
  %3083 = vmatprep.subr.bf16.mxu0 0
  %3084 = vmatpush1.bf16.msra.mxu0 0
  %3085 = vmatprep.subr.bf16.mxu0 0
  %3086 = vmatpush1.bf16.msra.mxu0 0
  %3087 = vmatprep.subr.bf16.mxu0 0
  %3088 = vmatpush1.bf16.msra.mxu0 0
  %3089 = vmatprep.subr.bf16.mxu0 0
  %3090 = vmatpush1.bf16.msra.mxu0 0
  %3091 = vmatprep.subr.bf16.mxu0 0
  %3092 = vmatpush1.bf16.msra.mxu0 0
  %3093 = vmatprep.subr.bf16.mxu0 0
  %3094 = vmatpush1.bf16.msra.mxu0 0
  %3095 = vmatprep.subr.bf16.mxu0 0
  %3096 = vmatpush1.bf16.msra.mxu0 0
  %3097 = vmatprep.subr.bf16.mxu0 0
  %3098 = vmatpush1.bf16.msra.mxu0 0
  %3099 = vmatprep.subr.bf16.mxu0 0
  %3100 = vmatpush1.bf16.msra.mxu0 0
  %3101 = vmatprep.subr.bf16.mxu0 0
  %3102 = vmatpush1.bf16.msra.mxu0 0
  %3103 = vmatprep.subr.bf16.mxu0 0
  %3104 = vmatpush1.bf16.msra.mxu0 0
  %3105 = vmatprep.subr.bf16.mxu0 0
  %3106 = vmatpush1.bf16.msra.mxu0 0
  %3107 = vmatprep.mubr.bf16.mxu0 0
  %3108 = vmatmul.mubr.bf16.gmra.mrb[0].mxu0 %v3073
  %v3109 = vpop.f32.mrb[0].mxu0
  %v3110 = vadd.f32 %v3043, %v3109
  %v3111 = vpop.f32.mrb[0].mxu0
  %v3112 = vpop.f32.mrb[0].mxu0
  %v3113 = vpop.f32.mrb[0].mxu0
  %3114 = vdwg.mxu0
  %v3115 = vpack.c.bf16 %v2955, %v2955
  %s3116 = scalar_lea.vmem %s5, 64
  %v3117 = vld [vmem:[%s3116] sm:$0xf]
  %v3118 = vld [vmem:[%s3116 + $0x4] sm:$0xf]
  %v3119 = vld [vmem:[%s3116 + $0x8] sm:$0xf]
  %v3120 = vld [vmem:[%s3116 + $0xc] sm:$0xf]
  %v3121 = vld [vmem:[%s3116 + $0x10] sm:$0xf]
  %v3122 = vld [vmem:[%s3116 + $0x14] sm:$0xf]
  %v3123 = vld [vmem:[%s3116 + $0x18] sm:$0xf]
  %v3124 = vld [vmem:[%s3116 + $0x1c] sm:$0xf]
  %v3133 = vunpack.c.l.b16 %v3117
  %v3134 = vunpack.c.l.b16 %v3118
  %v3135 = vunpack.c.l.b16 %v3119
  %v3136 = vunpack.c.l.b16 %v3120
  %v3137 = vunpack.c.l.b16 %v3121
  %v3138 = vunpack.c.l.b16 %v3122
  %v3139 = vunpack.c.l.b16 %v3123
  %v3140 = vunpack.c.l.b16 %v3124
  %v3141 = vpack.c.b16 %v3134, %v3133
  %v3142 = vpack.c.b16 %v3136, %v3135
  %v3143 = vpack.c.b16 %v3138, %v3137
  %v3144 = vpack.c.b16 %v3140, %v3139
  %v3150 = vsel %vm3004, %v3115, 0
  %3152 = vmatprep.subr.bf16.mxu0 0
  %3153 = vmatpush1.bf16.msra.mxu0 %v3141
  %3154 = vmatprep.subr.bf16.mxu0 0
  %3155 = vmatpush1.bf16.msra.mxu0 %v3142
  %3156 = vmatprep.subr.bf16.mxu0 0
  %3157 = vmatpush1.bf16.msra.mxu0 %v3143
  %3158 = vmatprep.subr.bf16.mxu0 0
  %3159 = vmatpush1.bf16.msra.mxu0 %v3144
  %3160 = vmatprep.subr.bf16.mxu0 0
  %3161 = vmatpush1.bf16.msra.mxu0 0
  %3162 = vmatprep.subr.bf16.mxu0 0
  %3163 = vmatpush1.bf16.msra.mxu0 0
  %3164 = vmatprep.subr.bf16.mxu0 0
  %3165 = vmatpush1.bf16.msra.mxu0 0
  %3166 = vmatprep.subr.bf16.mxu0 0
  %3167 = vmatpush1.bf16.msra.mxu0 0
  %3168 = vmatprep.subr.bf16.mxu0 0
  %3169 = vmatpush1.bf16.msra.mxu0 0
  %3170 = vmatprep.subr.bf16.mxu0 0
  %3171 = vmatpush1.bf16.msra.mxu0 0
  %3172 = vmatprep.subr.bf16.mxu0 0
  %3173 = vmatpush1.bf16.msra.mxu0 0
  %3174 = vmatprep.subr.bf16.mxu0 0
  %3175 = vmatpush1.bf16.msra.mxu0 0
  %3176 = vmatprep.subr.bf16.mxu0 0
  %3177 = vmatpush1.bf16.msra.mxu0 0
  %3178 = vmatprep.subr.bf16.mxu0 0
  %3179 = vmatpush1.bf16.msra.mxu0 0
  %3180 = vmatprep.subr.bf16.mxu0 0
  %3181 = vmatpush1.bf16.msra.mxu0 0
  %3182 = vmatprep.subr.bf16.mxu0 0
  %3183 = vmatpush1.bf16.msra.mxu0 0
  %3184 = vmatprep.mubr.bf16.mxu0 0
  %3185 = vmatmul.mubr.bf16.gmra.mrb[0].mxu0 %v3150
  %v3186 = vpop.f32.mrb[0].mxu0
  %v3187 = vadd.f32 0.0, %v3186
  %v3188 = vpop.f32.mrb[0].mxu0
  %v3189 = vpop.f32.mrb[0].mxu0
  %v3190 = vpop.f32.mrb[0].mxu0
  %3191 = vdwg.mxu0
  %v3192 = vadd.f32 %v3110, %v3187
  %v3193 = vpack.c.bf16 %v2956, %v2956
  %s3194 = scalar_lea.vmem %s5, 96
  %v3195 = vld [vmem:[%s3194] sm:$0xf]
  %v3196 = vld [vmem:[%s3194 + $0x4] sm:$0xf]
  %v3197 = vld [vmem:[%s3194 + $0x8] sm:$0xf]
  %v3198 = vld [vmem:[%s3194 + $0xc] sm:$0xf]
  %v3199 = vld [vmem:[%s3194 + $0x10] sm:$0xf]
  %v3200 = vld [vmem:[%s3194 + $0x14] sm:$0xf]
  %v3201 = vld [vmem:[%s3194 + $0x18] sm:$0xf]
  %v3202 = vld [vmem:[%s3194 + $0x1c] sm:$0xf]
  %v3211 = vunpack.c.l.b16 %v3195
  %v3212 = vunpack.c.l.b16 %v3196
  %v3213 = vunpack.c.l.b16 %v3197
  %v3214 = vunpack.c.l.b16 %v3198
  %v3215 = vunpack.c.l.b16 %v3199
  %v3216 = vunpack.c.l.b16 %v3200
  %v3217 = vunpack.c.l.b16 %v3201
  %v3218 = vunpack.c.l.b16 %v3202
  %v3219 = vpack.c.b16 %v3212, %v3211
  %v3220 = vpack.c.b16 %v3214, %v3213
  %v3221 = vpack.c.b16 %v3216, %v3215
  %v3222 = vpack.c.b16 %v3218, %v3217
  %v3228 = vsel %vm3004, %v3193, 0
  %3230 = vmatprep.subr.bf16.mxu0 0
  %3231 = vmatpush1.bf16.msra.mxu0 %v3219
  %3232 = vmatprep.subr.bf16.mxu0 0
  %3233 = vmatpush1.bf16.msra.mxu0 %v3220
  %3234 = vmatprep.subr.bf16.mxu0 0
  %3235 = vmatpush1.bf16.msra.mxu0 %v3221
  %3236 = vmatprep.subr.bf16.mxu0 0
  %3237 = vmatpush1.bf16.msra.mxu0 %v3222
  %3238 = vmatprep.subr.bf16.mxu0 0
  %3239 = vmatpush1.bf16.msra.mxu0 0
  %3240 = vmatprep.subr.bf16.mxu0 0
  %3241 = vmatpush1.bf16.msra.mxu0 0
  %3242 = vmatprep.subr.bf16.mxu0 0
  %3243 = vmatpush1.bf16.msra.mxu0 0
  %3244 = vmatprep.subr.bf16.mxu0 0
  %3245 = vmatpush1.bf16.msra.mxu0 0
  %3246 = vmatprep.subr.bf16.mxu0 0
  %3247 = vmatpush1.bf16.msra.mxu0 0
  %3248 = vmatprep.subr.bf16.mxu0 0
  %3249 = vmatpush1.bf16.msra.mxu0 0
  %3250 = vmatprep.subr.bf16.mxu0 0
  %3251 = vmatpush1.bf16.msra.mxu0 0
  %3252 = vmatprep.subr.bf16.mxu0 0
  %3253 = vmatpush1.bf16.msra.mxu0 0
  %3254 = vmatprep.subr.bf16.mxu0 0
  %3255 = vmatpush1.bf16.msra.mxu0 0
  %3256 = vmatprep.subr.bf16.mxu0 0
  %3257 = vmatpush1.bf16.msra.mxu0 0
  %3258 = vmatprep.subr.bf16.mxu0 0
  %3259 = vmatpush1.bf16.msra.mxu0 0
  %3260 = vmatprep.subr.bf16.mxu0 0
  %3261 = vmatpush1.bf16.msra.mxu0 0
  %3262 = vmatprep.mubr.bf16.mxu0 0
  %3263 = vmatmul.mubr.bf16.gmra.mrb[0].mxu0 %v3228
  %v3264 = vpop.f32.mrb[0].mxu0
  %v3265 = vadd.f32 0.0, %v3264
  %v3266 = vpop.f32.mrb[0].mxu0
  %v3267 = vpop.f32.mrb[0].mxu0
  %v3268 = vpop.f32.mrb[0].mxu0
  %3269 = vdwg.mxu0
  %v3270 = vadd.f32 %v3192, %v3265
  %v3271 = vpack.c.bf16 %v2957, %v2957
  %s3272 = scalar_lea.vmem %s5, 128
  %v3273 = vld [vmem:[%s3272] sm:$0xf]
  %v3274 = vld [vmem:[%s3272 + $0x4] sm:$0xf]
  %v3275 = vld [vmem:[%s3272 + $0x8] sm:$0xf]
  %v3276 = vld [vmem:[%s3272 + $0xc] sm:$0xf]
  %v3277 = vld [vmem:[%s3272 + $0x10] sm:$0xf]
  %v3278 = vld [vmem:[%s3272 + $0x14] sm:$0xf]
  %v3279 = vld [vmem:[%s3272 + $0x18] sm:$0xf]
  %v3280 = vld [vmem:[%s3272 + $0x1c] sm:$0xf]
  %v3289 = vunpack.c.l.b16 %v3273
  %v3290 = vunpack.c.l.b16 %v3274
  %v3291 = vunpack.c.l.b16 %v3275
  %v3292 = vunpack.c.l.b16 %v3276
  %v3293 = vunpack.c.l.b16 %v3277
  %v3294 = vunpack.c.l.b16 %v3278
  %v3295 = vunpack.c.l.b16 %v3279
  %v3296 = vunpack.c.l.b16 %v3280
  %v3297 = vpack.c.b16 %v3290, %v3289
  %v3298 = vpack.c.b16 %v3292, %v3291
  %v3299 = vpack.c.b16 %v3294, %v3293
  %v3300 = vpack.c.b16 %v3296, %v3295
  %v3306 = vsel %vm3004, %v3271, 0
  %3308 = vmatprep.subr.bf16.mxu0 0
  %3309 = vmatpush1.bf16.msra.mxu0 %v3297
  %3310 = vmatprep.subr.bf16.mxu0 0
  %3311 = vmatpush1.bf16.msra.mxu0 %v3298
  %3312 = vmatprep.subr.bf16.mxu0 0
  %3313 = vmatpush1.bf16.msra.mxu0 %v3299
  %3314 = vmatprep.subr.bf16.mxu0 0
  %3315 = vmatpush1.bf16.msra.mxu0 %v3300
  %3316 = vmatprep.subr.bf16.mxu0 0
  %3317 = vmatpush1.bf16.msra.mxu0 0
  %3318 = vmatprep.subr.bf16.mxu0 0
  %3319 = vmatpush1.bf16.msra.mxu0 0
  %3320 = vmatprep.subr.bf16.mxu0 0
  %3321 = vmatpush1.bf16.msra.mxu0 0
  %3322 = vmatprep.subr.bf16.mxu0 0
  %3323 = vmatpush1.bf16.msra.mxu0 0
  %3324 = vmatprep.subr.bf16.mxu0 0
  %3325 = vmatpush1.bf16.msra.mxu0 0
  %3326 = vmatprep.subr.bf16.mxu0 0
  %3327 = vmatpush1.bf16.msra.mxu0 0
  %3328 = vmatprep.subr.bf16.mxu0 0
  %3329 = vmatpush1.bf16.msra.mxu0 0
  %3330 = vmatprep.subr.bf16.mxu0 0
  %3331 = vmatpush1.bf16.msra.mxu0 0
  %3332 = vmatprep.subr.bf16.mxu0 0
  %3333 = vmatpush1.bf16.msra.mxu0 0
  %3334 = vmatprep.subr.bf16.mxu0 0
  %3335 = vmatpush1.bf16.msra.mxu0 0
  %3336 = vmatprep.subr.bf16.mxu0 0
  %3337 = vmatpush1.bf16.msra.mxu0 0
  %3338 = vmatprep.subr.bf16.mxu0 0
  %3339 = vmatpush1.bf16.msra.mxu0 0
  %3340 = vmatprep.mubr.bf16.mxu0 0
  %3341 = vmatmul.mubr.bf16.gmra.mrb[0].mxu0 %v3306
  %v3342 = vpop.f32.mrb[0].mxu0
  %v3343 = vadd.f32 0.0, %v3342
  %v3344 = vpop.f32.mrb[0].mxu0
  %v3345 = vpop.f32.mrb[0].mxu0
  %v3346 = vpop.f32.mrb[0].mxu0
  %3347 = vdwg.mxu0
  %v3348 = vadd.f32 %v3270, %v3343
  %v3349 = vpack.c.bf16 %v2958, %v2958
  %s3350 = scalar_lea.vmem %s5, 160
  %v3351 = vld [vmem:[%s3350] sm:$0xf]
  %v3352 = vld [vmem:[%s3350 + $0x4] sm:$0xf]
  %v3353 = vld [vmem:[%s3350 + $0x8] sm:$0xf]
  %v3354 = vld [vmem:[%s3350 + $0xc] sm:$0xf]
  %v3355 = vld [vmem:[%s3350 + $0x10] sm:$0xf]
  %v3356 = vld [vmem:[%s3350 + $0x14] sm:$0xf]
  %v3357 = vld [vmem:[%s3350 + $0x18] sm:$0xf]
  %v3358 = vld [vmem:[%s3350 + $0x1c] sm:$0xf]
  %v3367 = vunpack.c.l.b16 %v3351
  %v3368 = vunpack.c.l.b16 %v3352
  %v3369 = vunpack.c.l.b16 %v3353
  %v3370 = vunpack.c.l.b16 %v3354
  %v3371 = vunpack.c.l.b16 %v3355
  %v3372 = vunpack.c.l.b16 %v3356
  %v3373 = vunpack.c.l.b16 %v3357
  %v3374 = vunpack.c.l.b16 %v3358
  %v3375 = vpack.c.b16 %v3368, %v3367
  %v3376 = vpack.c.b16 %v3370, %v3369
  %v3377 = vpack.c.b16 %v3372, %v3371
  %v3378 = vpack.c.b16 %v3374, %v3373
  %v3384 = vsel %vm3004, %v3349, 0
  %3386 = vmatprep.subr.bf16.mxu0 0
  %3387 = vmatpush1.bf16.msra.mxu0 %v3375
  %3388 = vmatprep.subr.bf16.mxu0 0
  %3389 = vmatpush1.bf16.msra.mxu0 %v3376
  %3390 = vmatprep.subr.bf16.mxu0 0
  %3391 = vmatpush1.bf16.msra.mxu0 %v3377
  %3392 = vmatprep.subr.bf16.mxu0 0
  %3393 = vmatpush1.bf16.msra.mxu0 %v3378
  %3394 = vmatprep.subr.bf16.mxu0 0
  %3395 = vmatpush1.bf16.msra.mxu0 0
  %3396 = vmatprep.subr.bf16.mxu0 0
  %3397 = vmatpush1.bf16.msra.mxu0 0
  %3398 = vmatprep.subr.bf16.mxu0 0
  %3399 = vmatpush1.bf16.msra.mxu0 0
  %3400 = vmatprep.subr.bf16.mxu0 0
  %3401 = vmatpush1.bf16.msra.mxu0 0
  %3402 = vmatprep.subr.bf16.mxu0 0
  %3403 = vmatpush1.bf16.msra.mxu0 0
  %3404 = vmatprep.subr.bf16.mxu0 0
  %3405 = vmatpush1.bf16.msra.mxu0 0
  %3406 = vmatprep.subr.bf16.mxu0 0
  %3407 = vmatpush1.bf16.msra.mxu0 0
  %3408 = vmatprep.subr.bf16.mxu0 0
  %3409 = vmatpush1.bf16.msra.mxu0 0
  %3410 = vmatprep.subr.bf16.mxu0 0
  %3411 = vmatpush1.bf16.msra.mxu0 0
  %3412 = vmatprep.subr.bf16.mxu0 0
  %3413 = vmatpush1.bf16.msra.mxu0 0
  %3414 = vmatprep.subr.bf16.mxu0 0
  %3415 = vmatpush1.bf16.msra.mxu0 0
  %3416 = vmatprep.subr.bf16.mxu0 0
  %3417 = vmatpush1.bf16.msra.mxu0 0
  %3418 = vmatprep.mubr.bf16.mxu0 0
  %3419 = vmatmul.mubr.bf16.gmra.mrb[0].mxu0 %v3384
  %v3420 = vpop.f32.mrb[0].mxu0
  %v3421 = vadd.f32 0.0, %v3420
  %v3422 = vpop.f32.mrb[0].mxu0
  %v3423 = vpop.f32.mrb[0].mxu0
  %v3424 = vpop.f32.mrb[0].mxu0
  %3425 = vdwg.mxu0
  %v3426 = vadd.f32 %v3348, %v3421
  %v3427 = vpack.c.bf16 %v2959, %v2959
  %s3428 = scalar_lea.vmem %s5, 192
  %v3429 = vld [vmem:[%s3428] sm:$0xf]
  %v3430 = vld [vmem:[%s3428 + $0x4] sm:$0xf]
  %v3431 = vld [vmem:[%s3428 + $0x8] sm:$0xf]
  %v3432 = vld [vmem:[%s3428 + $0xc] sm:$0xf]
  %v3433 = vld [vmem:[%s3428 + $0x10] sm:$0xf]
  %v3434 = vld [vmem:[%s3428 + $0x14] sm:$0xf]
  %v3435 = vld [vmem:[%s3428 + $0x18] sm:$0xf]
  %v3436 = vld [vmem:[%s3428 + $0x1c] sm:$0xf]
  %v3445 = vunpack.c.l.b16 %v3429
  %v3446 = vunpack.c.l.b16 %v3430
  %v3447 = vunpack.c.l.b16 %v3431
  %v3448 = vunpack.c.l.b16 %v3432
  %v3449 = vunpack.c.l.b16 %v3433
  %v3450 = vunpack.c.l.b16 %v3434
  %v3451 = vunpack.c.l.b16 %v3435
  %v3452 = vunpack.c.l.b16 %v3436
  %v3453 = vpack.c.b16 %v3446, %v3445
  %v3454 = vpack.c.b16 %v3448, %v3447
  %v3455 = vpack.c.b16 %v3450, %v3449
  %v3456 = vpack.c.b16 %v3452, %v3451
  %v3462 = vsel %vm3004, %v3427, 0
  %3464 = vmatprep.subr.bf16.mxu0 0
  %3465 = vmatpush1.bf16.msra.mxu0 %v3453
  %3466 = vmatprep.subr.bf16.mxu0 0
  %3467 = vmatpush1.bf16.msra.mxu0 %v3454
  %3468 = vmatprep.subr.bf16.mxu0 0
  %3469 = vmatpush1.bf16.msra.mxu0 %v3455
  %3470 = vmatprep.subr.bf16.mxu0 0
  %3471 = vmatpush1.bf16.msra.mxu0 %v3456
  %3472 = vmatprep.subr.bf16.mxu0 0
  %3473 = vmatpush1.bf16.msra.mxu0 0
  %3474 = vmatprep.subr.bf16.mxu0 0
  %3475 = vmatpush1.bf16.msra.mxu0 0
  %3476 = vmatprep.subr.bf16.mxu0 0
  %3477 = vmatpush1.bf16.msra.mxu0 0
  %3478 = vmatprep.subr.bf16.mxu0 0
  %3479 = vmatpush1.bf16.msra.mxu0 0
  %3480 = vmatprep.subr.bf16.mxu0 0
  %3481 = vmatpush1.bf16.msra.mxu0 0
  %3482 = vmatprep.subr.bf16.mxu0 0
  %3483 = vmatpush1.bf16.msra.mxu0 0
  %3484 = vmatprep.subr.bf16.mxu0 0
  %3485 = vmatpush1.bf16.msra.mxu0 0
  %3486 = vmatprep.subr.bf16.mxu0 0
  %3487 = vmatpush1.bf16.msra.mxu0 0
  %3488 = vmatprep.subr.bf16.mxu0 0
  %3489 = vmatpush1.bf16.msra.mxu0 0
  %3490 = vmatprep.subr.bf16.mxu0 0
  %3491 = vmatpush1.bf16.msra.mxu0 0
  %3492 = vmatprep.subr.bf16.mxu0 0
  %3493 = vmatpush1.bf16.msra.mxu0 0
  %3494 = vmatprep.subr.bf16.mxu0 0
  %3495 = vmatpush1.bf16.msra.mxu0 0
  %3496 = vmatprep.mubr.bf16.mxu0 0
  %3497 = vmatmul.mubr.bf16.gmra.mrb[0].mxu0 %v3462
  %v3498 = vpop.f32.mrb[0].mxu0
  %v3499 = vadd.f32 0.0, %v3498
  %v3500 = vpop.f32.mrb[0].mxu0
  %v3501 = vpop.f32.mrb[0].mxu0
  %v3502 = vpop.f32.mrb[0].mxu0
  %3503 = vdwg.mxu0
  %v3504 = vadd.f32 %v3426, %v3499
  %v3505 = vpack.c.bf16 %v2960, %v2960
  %s3506 = scalar_lea.vmem %s5, 224
  %v3507 = vld [vmem:[%s3506] sm:$0xf]
  %v3508 = vld [vmem:[%s3506 + $0x4] sm:$0xf]
  %v3509 = vld [vmem:[%s3506 + $0x8] sm:$0xf]
  %v3510 = vld [vmem:[%s3506 + $0xc] sm:$0xf]
  %v3511 = vld [vmem:[%s3506 + $0x10] sm:$0xf]
  %v3512 = vld [vmem:[%s3506 + $0x14] sm:$0xf]
  %v3513 = vld [vmem:[%s3506 + $0x18] sm:$0xf]
  %v3514 = vld [vmem:[%s3506 + $0x1c] sm:$0xf]
  %v3523 = vunpack.c.l.b16 %v3507
  %v3524 = vunpack.c.l.b16 %v3508
  %v3525 = vunpack.c.l.b16 %v3509
  %v3526 = vunpack.c.l.b16 %v3510
  %v3527 = vunpack.c.l.b16 %v3511
  %v3528 = vunpack.c.l.b16 %v3512
  %v3529 = vunpack.c.l.b16 %v3513
  %v3530 = vunpack.c.l.b16 %v3514
  %v3531 = vpack.c.b16 %v3524, %v3523
  %v3532 = vpack.c.b16 %v3526, %v3525
  %v3533 = vpack.c.b16 %v3528, %v3527
  %v3534 = vpack.c.b16 %v3530, %v3529
  %v3540 = vsel %vm3004, %v3505, 0
  %3542 = vmatprep.subr.bf16.mxu0 0
  %3543 = vmatpush1.bf16.msra.mxu0 %v3531
  %3544 = vmatprep.subr.bf16.mxu0 0
  %3545 = vmatpush1.bf16.msra.mxu0 %v3532
  %3546 = vmatprep.subr.bf16.mxu0 0
  %3547 = vmatpush1.bf16.msra.mxu0 %v3533
  %3548 = vmatprep.subr.bf16.mxu0 0
  %3549 = vmatpush1.bf16.msra.mxu0 %v3534
  %3550 = vmatprep.subr.bf16.mxu0 0
  %3551 = vmatpush1.bf16.msra.mxu0 0
  %3552 = vmatprep.subr.bf16.mxu0 0
  %3553 = vmatpush1.bf16.msra.mxu0 0
  %3554 = vmatprep.subr.bf16.mxu0 0
  %3555 = vmatpush1.bf16.msra.mxu0 0
  %3556 = vmatprep.subr.bf16.mxu0 0
  %3557 = vmatpush1.bf16.msra.mxu0 0
  %3558 = vmatprep.subr.bf16.mxu0 0
  %3559 = vmatpush1.bf16.msra.mxu0 0
  %3560 = vmatprep.subr.bf16.mxu0 0
  %3561 = vmatpush1.bf16.msra.mxu0 0
  %3562 = vmatprep.subr.bf16.mxu0 0
  %3563 = vmatpush1.bf16.msra.mxu0 0
  %3564 = vmatprep.subr.bf16.mxu0 0
  %3565 = vmatpush1.bf16.msra.mxu0 0
  %3566 = vmatprep.subr.bf16.mxu0 0
  %3567 = vmatpush1.bf16.msra.mxu0 0
  %3568 = vmatprep.subr.bf16.mxu0 0
  %3569 = vmatpush1.bf16.msra.mxu0 0
  %3570 = vmatprep.subr.bf16.mxu0 0
  %3571 = vmatpush1.bf16.msra.mxu0 0
  %3572 = vmatprep.subr.bf16.mxu0 0
  %3573 = vmatpush1.bf16.msra.mxu0 0
  %3574 = vmatprep.mubr.bf16.mxu0 0
  %3575 = vmatmul.mubr.bf16.gmra.mrb[0].mxu0 %v3540
  %v3576 = vpop.f32.mrb[0].mxu0
  %v3577 = vadd.f32 0.0, %v3576
  %v3578 = vpop.f32.mrb[0].mxu0
  %v3579 = vpop.f32.mrb[0].mxu0
  %v3580 = vpop.f32.mrb[0].mxu0
  %3581 = vdwg.mxu0
  %v3582 = vadd.f32 %v3504, %v3577
  %v3583 = vld [vmem:[%s6] sm:$0x1]
  %v3585 = vlaneseq
  %v3586 = vshrl.u32 %v3585, 7
  %v3587 = vsub.s32 0, %v3586
  %v3588 = vrot.slane %v3583, %v3587
  %v3590 = vadd.f32 %v3582, %v3588
  %v3591 = vmax.f32 %v3590, 0.0
  %v3592 = vpack.c.bf16 %v3591, %v3591
  %v3593 = vld [vmem:[%s7] sm:$0xf]
  %v3594 = vld [vmem:[%s7 + $0x4] sm:$0xf]
  %v3595 = vld [vmem:[%s7 + $0x8] sm:$0xf]
  %v3596 = vld [vmem:[%s7 + $0xc] sm:$0xf]
  %v3597 = vld [vmem:[%s7 + $0x10] sm:$0xf]
  %v3598 = vld [vmem:[%s7 + $0x14] sm:$0xf]
  %v3599 = vld [vmem:[%s7 + $0x18] sm:$0xf]
  %v3600 = vld [vmem:[%s7 + $0x1c] sm:$0xf]
  %v3601 = vld [vmem:[%s7 + $0x20] sm:$0xf]
  %v3602 = vld [vmem:[%s7 + $0x24] sm:$0xf]
  %v3603 = vld [vmem:[%s7 + $0x28] sm:$0xf]
  %v3604 = vld [vmem:[%s7 + $0x2c] sm:$0xf]
  %v3605 = vld [vmem:[%s7 + $0x30] sm:$0xf]
  %v3606 = vld [vmem:[%s7 + $0x34] sm:$0xf]
  %v3607 = vld [vmem:[%s7 + $0x38] sm:$0xf]
  %v3608 = vld [vmem:[%s7 + $0x3c] sm:$0xf]
  %v3609 = vld [vmem:[%s8] sm:$0x1]
  %v3611 = vlaneseq
  %v3612 = vshrl.u32 %v3611, 7
  %v3613 = vsub.s32 0, %v3612
  %v3614 = vrot.slane %v3609, %v3613
  %v3632 = vunpack.c.l.b16 %v3593
  %v3633 = vunpack.c.l.b16 %v3594
  %v3634 = vunpack.c.l.b16 %v3595
  %v3635 = vunpack.c.l.b16 %v3596
  %v3636 = vunpack.c.l.b16 %v3597
  %v3637 = vunpack.c.l.b16 %v3598
  %v3638 = vunpack.c.l.b16 %v3599
  %v3639 = vunpack.c.l.b16 %v3600
  %v3640 = vunpack.c.l.b16 %v3601
  %v3641 = vunpack.c.l.b16 %v3602
  %v3642 = vunpack.c.l.b16 %v3603
  %v3643 = vunpack.c.l.b16 %v3604
  %v3644 = vunpack.c.l.b16 %v3605
  %v3645 = vunpack.c.l.b16 %v3606
  %v3646 = vunpack.c.l.b16 %v3607
  %v3647 = vunpack.c.l.b16 %v3608
  %v3648 = vpack.c.b16 %v3633, %v3632
  %v3649 = vpack.c.b16 %v3635, %v3634
  %v3650 = vpack.c.b16 %v3637, %v3636
  %v3651 = vpack.c.b16 %v3639, %v3638
  %v3652 = vpack.c.b16 %v3641, %v3640
  %v3653 = vpack.c.b16 %v3643, %v3642
  %v3654 = vpack.c.b16 %v3645, %v3644
  %v3655 = vpack.c.b16 %v3647, %v3646
  %3664 = vmatprep.subr.bf16.mxu0 0
  %3665 = vmatpush1.bf16.msra.mxu0 %v3648
  %3666 = vmatprep.subr.bf16.mxu0 0
  %3667 = vmatpush1.bf16.msra.mxu0 %v3649
  %3668 = vmatprep.subr.bf16.mxu0 0
  %3669 = vmatpush1.bf16.msra.mxu0 %v3650
  %3670 = vmatprep.subr.bf16.mxu0 0
  %3671 = vmatpush1.bf16.msra.mxu0 %v3651
  %3672 = vmatprep.subr.bf16.mxu0 0
  %3673 = vmatpush1.bf16.msra.mxu0 %v3652
  %3674 = vmatprep.subr.bf16.mxu0 0
  %3675 = vmatpush1.bf16.msra.mxu0 %v3653
  %3676 = vmatprep.subr.bf16.mxu0 0
  %3677 = vmatpush1.bf16.msra.mxu0 %v3654
  %3678 = vmatprep.subr.bf16.mxu0 0
  %3679 = vmatpush1.bf16.msra.mxu0 %v3655
  %3680 = vmatprep.subr.bf16.mxu0 0
  %3681 = vmatpush1.bf16.msra.mxu0 0
  %3682 = vmatprep.subr.bf16.mxu0 0
  %3683 = vmatpush1.bf16.msra.mxu0 0
  %3684 = vmatprep.subr.bf16.mxu0 0
  %3685 = vmatpush1.bf16.msra.mxu0 0
  %3686 = vmatprep.subr.bf16.mxu0 0
  %3687 = vmatpush1.bf16.msra.mxu0 0
  %3688 = vmatprep.subr.bf16.mxu0 0
  %3689 = vmatpush1.bf16.msra.mxu0 0
  %3690 = vmatprep.subr.bf16.mxu0 0
  %3691 = vmatpush1.bf16.msra.mxu0 0
  %3692 = vmatprep.subr.bf16.mxu0 0
  %3693 = vmatpush1.bf16.msra.mxu0 0
  %3694 = vmatprep.subr.bf16.mxu0 0
  %3695 = vmatpush1.bf16.msra.mxu0 0
  %3696 = vmatprep.mubr.bf16.mxu0 0
  %3697 = vmatmul.mubr.bf16.gmra.mrb[0].mxu0 %v3592
  %v3698 = vpop.f32.mrb[0].mxu0
  %v3699 = vadd.f32 %v3614, %v3698
  %v3700 = vpop.f32.mrb[0].mxu0
  %v3701 = vpop.f32.mrb[0].mxu0
  %v3702 = vpop.f32.mrb[0].mxu0
  %3703 = vdwg.mxu0
  %3704 = vst [vmem:[%s9] sm:$0xff] %v3699
  // Predicated region
  $region38: #{trajectory_cnn_forward.1} parent=0 // pred_check
    _
  $region39: #{trajectory_cnn_forward.1} parent=0 // pred_check_branch
    %3706 = sbr.rel (0) target = $region41
  $region40: #{trajectory_cnn_forward.1} parent=0 // pred_region
    _
  $region41: #{trajectory_cnn_forward.1} parent=0 // pred_fallthru
    _
  // Predicated region
  $region42: #{trajectory_cnn_forward.1} parent=0 // pred_check
    _
  $region43: #{trajectory_cnn_forward.1} parent=0 // pred_check_branch
    %3708 = sbr.rel (0) target = $region45
  $region44: #{trajectory_cnn_forward.1} parent=0 // pred_region
    _
  $region45: #{trajectory_cnn_forward.1} parent=0 // pred_fallthru
    _

</llo_original>
